<compile_context>
chip_gen: v6e
topology: v6e:2x2x1
jax: 0.10.0
libtpu: 0.0.40
codegen_flags: <defaults>
</compile_context>

<pallas_src>
import jax
import jax.numpy as jnp
from jax.experimental import pallas as pl
from jax.experimental.pallas import tpu as pltpu

HIDDEN = 768          # BERT hidden size
EMBED_DIM = 128       # args.embed_dim (chosen TPU lane-friendly)
TILE_N = 128          # node-row tile (MXU-height friendly; 128-512 all fine)


def encoder_kernel(h_ref, wp_ref, bp_ref, wo_ref, bo_ref, o_ref):
    # h_ref : (TILE_N, 768) bf16   synthetic CLS hidden-state tile
    # wp/bp : (768, 768) bf16 / (1, 768) f32      pooler weights
    # wo/bo : (768, EMBED) bf16 / (1, EMBED) f32  output projection (outdes/outsmi)
    h = h_ref[...]
    pooled = jnp.tanh(
        jnp.dot(h, wp_ref[...], preferred_element_type=jnp.float32) + bp_ref[...]
    )
    # Dropout(0.2) -> identity (eval mode)
    out = (
        jnp.dot(pooled.astype(jnp.bfloat16), wo_ref[...],
                preferred_element_type=jnp.float32)
        + bo_ref[...]
    )
    o_ref[...] = out.astype(o_ref.dtype)


def encoder_forward(h, wp, bp, wo, bo, tile_n=TILE_N):
    """h: (N, 768) synthetic BERT CLS hidden states. Returns (N, EMBED_DIM) f32."""
    n, hdim = h.shape
    assert hdim == HIDDEN

    n_pad = pl.cdiv(n, tile_n) * tile_n
    grid = (n_pad // tile_n,)

    # bf16 MXU operands, f32 accumulation happens inside the kernel.
    h_b = jnp.pad(h, ((0, n_pad - n), (0, 0))).astype(jnp.bfloat16)
    wp_b = wp.astype(jnp.bfloat16)
    wo_b = wo.astype(jnp.bfloat16)
    bp_f = bp.astype(jnp.float32)
    bo_f = bo.astype(jnp.float32)

    cost = pl.CostEstimate(
        flops=2 * n_pad * HIDDEN * (HIDDEN + EMBED_DIM),
        transcendentals=n_pad * HIDDEN,                      # tanh
        bytes_accessed=(h_b.size * 2 + wp_b.size * 2 + wo_b.size * 2
                        + bp_f.size * 4 + bo_f.size * 4
                        + n_pad * EMBED_DIM * 4),
    )

    out = pl.pallas_call(
        encoder_kernel,
        out_shape=jax.ShapeDtypeStruct((n_pad, EMBED_DIM), jnp.float32),
        grid_spec=pltpu.PrefetchScalarGridSpec(
            num_scalar_prefetch=0,
            grid=grid,
            in_specs=[
                pl.BlockSpec((tile_n, HIDDEN), lambda i: (i, 0)),
                # Weights / biases: constant index_map -> fetched once, VMEM-resident.
                pl.BlockSpec((HIDDEN, HIDDEN), lambda i: (0, 0)),
                pl.BlockSpec((1, HIDDEN), lambda i: (0, 0)),
                pl.BlockSpec((HIDDEN, EMBED_DIM), lambda i: (0, 0)),
                pl.BlockSpec((1, EMBED_DIM), lambda i: (0, 0)),
            ],
            out_specs=pl.BlockSpec((tile_n, EMBED_DIM), lambda i: (i, 0)),
        ),
        compiler_params=pltpu.CompilerParams(
            dimension_semantics=("parallel",),
            vmem_limit_bytes=32 * 1024 * 1024,
        ),
        cost_estimate=cost,
    )(h_b, wp_b, bp_f, wo_b, bo_f)

    return out[:n]


def init_params(key):
    """Deterministic parameter init mirroring the module's layer shapes.

    PyTorch shapes: pooler Linear(768,768), outdes Linear(768, embed_dim).
    We store weights transposed as (in, out) for the x @ W layout.
    """
    k1, k2, k3, k4 = jax.random.split(key, 4)
    scale_p = 1.0 / jnp.sqrt(HIDDEN)
    wp = jax.random.uniform(k1, (HIDDEN, HIDDEN), jnp.float32, -scale_p, scale_p)
    bp = jax.random.uniform(k2, (1, HIDDEN), jnp.float32, -scale_p, scale_p)
    wo = jax.random.uniform(k3, (HIDDEN, EMBED_DIM), jnp.float32, -scale_p, scale_p)
    bo = jax.random.uniform(k4, (1, EMBED_DIM), jnp.float32, -scale_p, scale_p)
    return wp, bp, wo, bo


def reference_forward(h, wp, bp, wo, bo):
    pooled = jnp.tanh(h @ wp + bp)
    return pooled @ wo + bo


if __name__ == "__main__":
    key = jax.random.PRNGKey(0)
    k_h, k_params = jax.random.split(key)

    # Number of drug nodes in the batch: intentionally not a multiple of TILE_N
    # (exercises padding) and large enough for >= 2 parallel grid steps.
    N = 200
    # Synthetic stand-in for BERT's per-node CLS hidden state.
    h = jax.random.normal(k_h, (N, HIDDEN), jnp.float32)

    wp, bp, wo, bo = init_params(k_params)

    out = encoder_forward(h, wp, bp, wo, bo)
    out = jax.block_until_ready(out)

    ref = reference_forward(h, wp, bp, wo, bo)
    assert out.shape == (N, EMBED_DIM)
    # bf16 MXU inputs with f32 accumulation -> relaxed tolerance vs. f32 reference.
    assert jnp.allclose(out, ref, atol=5e-2, rtol=5e-2), "mismatch vs JAX reference"

    print("KERNEL_OK")
</pallas_src>

<mosaic_0001>
module attributes {stable_mosaic.version = 11 : i64} {
  func.func @encoder_kernel(%arg0: i32, %arg1: memref<128x768xbf16, #tpu.memory_space<vmem>>, %arg2: memref<768x768xbf16, #tpu.memory_space<vmem>>, %arg3: memref<1x768xf32, #tpu.memory_space<vmem>>, %arg4: memref<768x128xbf16, #tpu.memory_space<vmem>>, %arg5: memref<1x128xf32, #tpu.memory_space<vmem>>, %arg6: memref<128x128xf32, #tpu.memory_space<vmem>>) attributes {dimension_semantics = [#tpu.dimension_semantics<parallel>], iteration_bounds = array<i64: 2>, scalar_prefetch = 0 : i64, scratch_operands = 0 : i64, tpu.core_type = #tpu.core_type<tc>, window_params = [{transform_indices = @transform_0, window_bounds = array<i64: 128, 768>}, {pipeline_mode = #tpu.pipeline_mode<synchronous>, transform_indices = @transform_1, window_bounds = array<i64: 768, 768>}, {pipeline_mode = #tpu.pipeline_mode<synchronous>, transform_indices = @transform_2, window_bounds = array<i64: 1, 768>}, {pipeline_mode = #tpu.pipeline_mode<synchronous>, transform_indices = @transform_3, window_bounds = array<i64: 768, 128>}, {pipeline_mode = #tpu.pipeline_mode<synchronous>, transform_indices = @transform_4, window_bounds = array<i64: 1, 128>}, {transform_indices = @transform_5, window_bounds = array<i64: 128, 128>}]} {
    %c0 = arith.constant 0 : index
    %c0_0 = arith.constant 0 : index
    %0 = vector.load %arg1[%c0, %c0_0] : memref<128x768xbf16, #tpu.memory_space<vmem>>, vector<128x768xbf16>
    %c0_1 = arith.constant 0 : index
    %c0_2 = arith.constant 0 : index
    %1 = vector.load %arg2[%c0_1, %c0_2] : memref<768x768xbf16, #tpu.memory_space<vmem>>, vector<768x768xbf16>
    %cst = arith.constant dense<0.000000e+00> : vector<128x768xf32>
    %2 = tpu.matmul %0, %1, %cst {dimension_numbers = #tpu.dot_dimension_numbers<[1], [0], [0], [1], [0, 0, 1, 1], [], []>} : vector<128x768xbf16>, vector<768x768xbf16>, vector<128x768xf32> -> vector<128x768xf32>
    %c0_3 = arith.constant 0 : index
    %c0_4 = arith.constant 0 : index
    %3 = vector.load %arg3[%c0_3, %c0_4] : memref<1x768xf32, #tpu.memory_space<vmem>>, vector<1x768xf32>
    %4 = vector.broadcast %3 : vector<1x768xf32> to vector<128x768xf32>
    %5 = arith.addf %2, %4 : vector<128x768xf32>
    %6 = math.tanh %5 : vector<128x768xf32>
    %7 = arith.truncf %6 : vector<128x768xf32> to vector<128x768xbf16>
    %c0_5 = arith.constant 0 : index
    %c0_6 = arith.constant 0 : index
    %8 = vector.load %arg4[%c0_5, %c0_6] : memref<768x128xbf16, #tpu.memory_space<vmem>>, vector<768x128xbf16>
    %cst_7 = arith.constant dense<0.000000e+00> : vector<128x128xf32>
    %9 = tpu.matmul %7, %8, %cst_7 {dimension_numbers = #tpu.dot_dimension_numbers<[1], [0], [0], [1], [0, 0, 1, 1], [], []>} : vector<128x768xbf16>, vector<768x128xbf16>, vector<128x128xf32> -> vector<128x128xf32>
    %c0_8 = arith.constant 0 : index
    %c0_9 = arith.constant 0 : index
    %10 = vector.load %arg5[%c0_8, %c0_9] : memref<1x128xf32, #tpu.memory_space<vmem>>, vector<1x128xf32>
    %11 = vector.broadcast %10 : vector<1x128xf32> to vector<128x128xf32>
    %12 = arith.addf %9, %11 : vector<128x128xf32>
    %c0_10 = arith.constant 0 : index
    %c0_11 = arith.constant 0 : index
    %13 = vector.load %arg6[%c0_10, %c0_11] : memref<128x128xf32, #tpu.memory_space<vmem>>, vector<128x128xf32>
    tpu.vector_store %arg6[%c0_10, %c0_11], %12 {strides = array<i32>} : memref<128x128xf32, #tpu.memory_space<vmem>>, vector<128x128xf32>,
    return
  }
  func.func @transform_0(%arg0: i32) -> (i32, i32) {
    %c0_i32 = arith.constant 0 : i32
    %c0_i32_0 = arith.constant 0 : i32
    return %arg0, %c0_i32 : i32, i32
  }
  func.func @transform_1(%arg0: i32) -> (i32, i32) {
    %c0_i32 = arith.constant 0 : i32
    %c0_i32_0 = arith.constant 0 : i32
    %c0_i32_1 = arith.constant 0 : i32
    return %c0_i32, %c0_i32_0 : i32, i32
  }
  func.func @transform_2(%arg0: i32) -> (i32, i32) {
    %c0_i32 = arith.constant 0 : i32
    %c0_i32_0 = arith.constant 0 : i32
    %c0_i32_1 = arith.constant 0 : i32
    return %c0_i32, %c0_i32_0 : i32, i32
  }
  func.func @transform_3(%arg0: i32) -> (i32, i32) {
    %c0_i32 = arith.constant 0 : i32
    %c0_i32_0 = arith.constant 0 : i32
    %c0_i32_1 = arith.constant 0 : i32
    return %c0_i32, %c0_i32_0 : i32, i32
  }
  func.func @transform_4(%arg0: i32) -> (i32, i32) {
    %c0_i32 = arith.constant 0 : i32
    %c0_i32_0 = arith.constant 0 : i32
    %c0_i32_1 = arith.constant 0 : i32
    return %c0_i32, %c0_i32_0 : i32, i32
  }
  func.func @transform_5(%arg0: i32) -> (i32, i32) {
    %c0_i32 = arith.constant 0 : i32
    %c0_i32_0 = arith.constant 0 : i32
    return %arg0, %c0_i32 : i32, i32
  }
}

</mosaic_0001>

<llo_original>
// kernel: tpu_custom_call.1
$region0: #{tpu_custom_call.1}
  #allocation0 [shape = 'u32[]', space=smem, size = 0x4, offset = 0x4, fixed_abs, tag = 'smem constant byte address 0x4 - core index']
  #allocation1 [shape = 'u32[144,128]{1,0:T(1,128)}', space=vmem, size = 0x12000, scoped, tag = 'internal scratch']
  %s0 = inlined_call_operand.hbm [shape: bf16[256,768], index: 0, kind: input, shape index: {}]
  %s1 = inlined_call_operand.hbm [shape: bf16[768,768], index: 1, kind: input, shape index: {}]
  %s2 = inlined_call_operand.hbm [shape: f32[1,768], index: 2, kind: input, shape index: {}]
  %s3 = inlined_call_operand.hbm [shape: bf16[768,128], index: 3, kind: input, shape index: {}]
  %s4 = inlined_call_operand.hbm [shape: f32[1,128], index: 4, kind: input, shape index: {}]
  %s5 = inlined_call_operand.hbm [shape: f32[256,128], index: 5, kind: output, shape index: {}]
  %s6 = sld [smem:[#allocation0]]
  $region73: #{tpu_custom_call.1} parent=0
    _
  %s8 = ssub.s32 1, %s6
  %s9 = scalar_select 0, %s8, %s6
  $region1: #{tpu_custom_call.1} parent=0
    #allocation2 [shape = 'u8[393216]{0}', space=vmem, size = 0x60000, scoped, tag = 'input window, operand 0']
    #allocation3 [shape = 's32[2]{0}', space=sflag, size = 0x8, scoped, tag = 'scoped memory for tpu_custom_call.1']
    #allocation4 [shape = 's32[2]{0}', space=sflag, size = 0x8, scoped, tag = 'scoped memory for tpu_custom_call.1']
    #allocation5 [shape = 'u8[1179648]{0}', space=vmem, size = 0x120000, scoped, tag = 'input window, operand 1, single buffered']
    #allocation6 [shape = 's32[1]{0}', space=sflag, size = 0x4, scoped, tag = 'scoped memory for tpu_custom_call.1']
    #allocation7 [shape = 'u8[3072]{0}', space=vmem, size = 0xc00, scoped, tag = 'input window, operand 2, single buffered']
    #allocation8 [shape = 'u8[196608]{0}', space=vmem, size = 0x30000, scoped, tag = 'input window, operand 3, single buffered']
    #allocation9 [shape = 's32[1]{0}', space=sflag, size = 0x4, scoped, tag = 'scoped memory for tpu_custom_call.1']
    #allocation10 [shape = 'u8[512]{0}', space=vmem, size = 0x400, scoped, tag = 'input window, operand 4, single buffered']
    #allocation11 [shape = 'u8[131072]{0}', space=vmem, size = 0x20000, scoped, tag = 'output window, operand 0']
    %10 = vsyncpa [#allocation3], 0
    %s11 = scalar_lea.sflag [#allocation3], 1
    %12 = vsyncpa %s11, 0
    %13 = vsyncpa [#allocation6], 0
    %14 = vsyncpa [#allocation9], 0
    %15 = vsyncpa [#allocation4], 0
    %s16 = scalar_lea.sflag [#allocation4], 1
    %17 = vsyncpa %s16, 0
    loop: start=0, step=1, limit=4
    $region2: #{tpu_custom_call.1} parent=1 // loop_pre_header
      _
    $region3: #{tpu_custom_call.1} parent=1 // loop_header
      %s19 = sphi 0, %s23
      %p20 = scmp.ge.s32.totalorder %s19, 4
      %s29 = sphi 0, %s31
      %s32 = sphi 0, %s29
      %s33 = sphi 0, %s32
      %s49 = sphi 0, %s33
      %s53 = sphi 0, %s53
      %s55 = sphi 0, %s53
      %s56 = sphi 0, %s55
      %s70 = sphi 0, %s56
      %s74 = sphi 0, %s74
      %s76 = sphi 0, %s74
      %s77 = sphi 0, %s76
      %s91 = sphi 0, %s77
      %s95 = sphi 0, %s95
      %s97 = sphi 0, %s95
      %s98 = sphi 0, %s97
      %s112 = sphi 0, %s98
      %s116 = sphi 0, %s116
      %s118 = sphi 0, %s116
      %s119 = sphi 0, %s118
      %s133 = sphi 0, %s119
      %s139 = sphi 0, %s141
      %s142 = sphi 0, %s139
      %s143 = sphi 0, %s142
      %s159 = sphi 0, %s143
    $region4: #{tpu_custom_call.1} parent=1 // loop_header_branch
      %22 = sbr.rel (%p20) target = $region8
    $region5: #{tpu_custom_call.1} parent=1 // loop_body
      %s24 = ssub.s32 %s19, 1
      %s25 = ssub.s32 %s19, 2
      %s26 = sadd.s32 %s19, 1
      %s27 = ssub.s32 %s19, %s26
      %p28 = scmp.eq.s32.totalorder %s27, 0
      %s30 = sadd.s32 %s29, 1
      %s31 = scalar_select %p28, %s29, %s30
      %p34 = pneg %p28
      %p35 = scmp.eq.s32.totalorder %s19, 1
      %p36 = por %p34, %p35
      %p37 = scmp.ne.s32.totalorder %s29, %s32
      %p38 = scmp.eq.s32.totalorder %s19, 0
      %p39 = por %p37, %p38
      %p40 = scmp.ne.s32.totalorder %s29, %s32
      %p41 = scmp.eq.s32.totalorder %s24, 1
      %p42 = por %p40, %p41
      %p43 = scmp.ne.s32.totalorder %s32, %s33
      %p44 = scmp.eq.s32.totalorder %s24, 0
      %p45 = por %p43, %p44
      %p46 = scmp.ne.s32.totalorder %s32, %s33
      %p47 = scmp.eq.s32.totalorder %s25, 1
      %p48 = por %p46, %p47
      %p50 = scmp.ne.s32.totalorder %s33, %s49
      %p51 = scmp.eq.s32.totalorder %s25, 0
      %p52 = por %p50, %p51
      %s54 = sadd.s32 %s53, 1
      %p57 = scmp.eq.s32.totalorder %s19, 1
      %p58 = scmp.ne.s32.totalorder %s53, %s55
      %p59 = scmp.eq.s32.totalorder %s19, 0
      %p60 = por %p58, %p59
      %p61 = scmp.ne.s32.totalorder %s53, %s55
      %p62 = scmp.eq.s32.totalorder %s24, 1
      %p63 = por %p61, %p62
      %p64 = scmp.ne.s32.totalorder %s55, %s56
      %p65 = scmp.eq.s32.totalorder %s24, 0
      %p66 = por %p64, %p65
      %p67 = scmp.ne.s32.totalorder %s55, %s56
      %p68 = scmp.eq.s32.totalorder %s25, 1
      %p69 = por %p67, %p68
      %p71 = scmp.ne.s32.totalorder %s56, %s70
      %p72 = scmp.eq.s32.totalorder %s25, 0
      %p73 = por %p71, %p72
      %s75 = sadd.s32 %s74, 1
      %p78 = scmp.eq.s32.totalorder %s19, 1
      %p79 = scmp.ne.s32.totalorder %s74, %s76
      %p80 = scmp.eq.s32.totalorder %s19, 0
      %p81 = por %p79, %p80
      %p82 = scmp.ne.s32.totalorder %s74, %s76
      %p83 = scmp.eq.s32.totalorder %s24, 1
      %p84 = por %p82, %p83
      %p85 = scmp.ne.s32.totalorder %s76, %s77
      %p86 = scmp.eq.s32.totalorder %s24, 0
      %p87 = por %p85, %p86
      %p88 = scmp.ne.s32.totalorder %s76, %s77
      %p89 = scmp.eq.s32.totalorder %s25, 1
      %p90 = por %p88, %p89
      %p92 = scmp.ne.s32.totalorder %s77, %s91
      %p93 = scmp.eq.s32.totalorder %s25, 0
      %p94 = por %p92, %p93
      %s96 = sadd.s32 %s95, 1
      %p99 = scmp.eq.s32.totalorder %s19, 1
      %p100 = scmp.ne.s32.totalorder %s95, %s97
      %p101 = scmp.eq.s32.totalorder %s19, 0
      %p102 = por %p100, %p101
      %p103 = scmp.ne.s32.totalorder %s95, %s97
      %p104 = scmp.eq.s32.totalorder %s24, 1
      %p105 = por %p103, %p104
      %p106 = scmp.ne.s32.totalorder %s97, %s98
      %p107 = scmp.eq.s32.totalorder %s24, 0
      %p108 = por %p106, %p107
      %p109 = scmp.ne.s32.totalorder %s97, %s98
      %p110 = scmp.eq.s32.totalorder %s25, 1
      %p111 = por %p109, %p110
      %p113 = scmp.ne.s32.totalorder %s98, %s112
      %p114 = scmp.eq.s32.totalorder %s25, 0
      %p115 = por %p113, %p114
      %s117 = sadd.s32 %s116, 1
      %p120 = scmp.eq.s32.totalorder %s19, 1
      %p121 = scmp.ne.s32.totalorder %s116, %s118
      %p122 = scmp.eq.s32.totalorder %s19, 0
      %p123 = por %p121, %p122
      %p124 = scmp.ne.s32.totalorder %s116, %s118
      %p125 = scmp.eq.s32.totalorder %s24, 1
      %p126 = por %p124, %p125
      %p127 = scmp.ne.s32.totalorder %s118, %s119
      %p128 = scmp.eq.s32.totalorder %s24, 0
      %p129 = por %p127, %p128
      %p130 = scmp.ne.s32.totalorder %s118, %s119
      %p131 = scmp.eq.s32.totalorder %s25, 1
      %p132 = por %p130, %p131
      %p134 = scmp.ne.s32.totalorder %s119, %s133
      %p135 = scmp.eq.s32.totalorder %s25, 0
      %p136 = por %p134, %p135
      %s137 = ssub.s32 %s19, %s26
      %p138 = scmp.eq.s32.totalorder %s137, 0
      %s140 = sadd.s32 %s139, 1
      %s141 = scalar_select %p138, %s139, %s140
      %p144 = pneg %p138
      %p145 = scmp.eq.s32.totalorder %s19, 1
      %p146 = por %p144, %p145
      %p147 = scmp.ne.s32.totalorder %s139, %s142
      %p148 = scmp.eq.s32.totalorder %s19, 0
      %p149 = por %p147, %p148
      %p150 = scmp.ne.s32.totalorder %s139, %s142
      %p151 = scmp.eq.s32.totalorder %s24, 1
      %p152 = por %p150, %p151
      %p153 = scmp.ne.s32.totalorder %s142, %s143
      %p154 = scmp.eq.s32.totalorder %s24, 0
      %p155 = por %p153, %p154
      %p156 = scmp.ne.s32.totalorder %s142, %s143
      %p157 = scmp.eq.s32.totalorder %s25, 1
      %p158 = por %p156, %p157
      %p160 = scmp.ne.s32.totalorder %s143, %s159
      %p161 = scmp.eq.s32.totalorder %s25, 0
      %p162 = por %p160, %p161
      %p163 = scmp.le.s32.totalorder 1, %s19
      %p164 = scmp.lt.s32.totalorder %s19, 3
      %p165 = pnand %p163, %p164
      %p166 = pneg %p165
      // Predicated region
      $region9: #{tpu_custom_call.1} parent=5 // pred_check
        _
      $region10: #{tpu_custom_call.1} parent=5 // pred_check_branch
        %168 = sbr.rel (%p165) target = $region12
      $region11: #{tpu_custom_call.1} parent=5 // pred_region
        %s169 = ssub.s32 %s19, 1
        // Predicated region
        $region13: #{tpu_custom_call.1} parent=11 // pred_check
          %p170 = pneg %p66
        $region14: #{tpu_custom_call.1} parent=11 // pred_check_branch
          %172 = sbr.rel (%p170) target = $region16
        $region15: #{tpu_custom_call.1} parent=11 // pred_region
          %s174 = ssub.s32 36864, 36864
          %175 = vsyncadd [#allocation6], %s174
          %s176 = sshll.u32 [#allocation5], 4
          %s177 = int_to_ptr.vmem [resolvable:$true] %s176
          %182 = dma.hbm_to_vmem [thread:$0]  %s1, 36864, %s177, [#allocation6], 384, 384, 24
        $region16: #{tpu_custom_call.1} parent=11 // pred_fallthru
          _
        // Predicated region
        $region17: #{tpu_custom_call.1} parent=11 // pred_check
          %p183 = pneg %p87
        $region18: #{tpu_custom_call.1} parent=11 // pred_check_branch
          %185 = sbr.rel (%p183) target = $region20
        $region19: #{tpu_custom_call.1} parent=11 // pred_region
          %s187 = ssub.s32 96, 96
          %188 = vsyncadd [#allocation6], %s187
          %s190 = sshll.u32 [#allocation7], 4
          %s191 = int_to_ptr.vmem [resolvable:$true] %s190
          %193 = dma.hbm_to_vmem [thread:$0]  %s2, 96, %s191, [#allocation6]
        $region20: #{tpu_custom_call.1} parent=11 // pred_fallthru
          _
        // Predicated region
        $region21: #{tpu_custom_call.1} parent=11 // pred_check
          %p194 = pneg %p108
        $region22: #{tpu_custom_call.1} parent=11 // pred_check_branch
          %196 = sbr.rel (%p194) target = $region24
        $region23: #{tpu_custom_call.1} parent=11 // pred_region
          %s198 = ssub.s32 6144, 6144
          %199 = vsyncadd [#allocation9], %s198
          %s200 = sshll.u32 [#allocation8], 4
          %s201 = int_to_ptr.vmem [resolvable:$true] %s200
          %206 = dma.hbm_to_vmem [thread:$0]  %s3, 6144, %s201, [#allocation9], 64, 64, 4
        $region24: #{tpu_custom_call.1} parent=11 // pred_fallthru
          _
        // Predicated region
        $region25: #{tpu_custom_call.1} parent=11 // pred_check
          %p207 = pneg %p129
        $region26: #{tpu_custom_call.1} parent=11 // pred_check_branch
          %209 = sbr.rel (%p207) target = $region28
        $region27: #{tpu_custom_call.1} parent=11 // pred_region
          %s211 = ssub.s32 16, 16
          %212 = vsyncadd [#allocation9], %s211
          %s214 = sshll.u32 [#allocation10], 4
          %s215 = int_to_ptr.vmem [resolvable:$true] %s214
          %217 = dma.hbm_to_vmem [thread:$0]  %s4, 16, %s215, [#allocation9]
        $region28: #{tpu_custom_call.1} parent=11 // pred_fallthru
          _
      $region12: #{tpu_custom_call.1} parent=5 // pred_fallthru
        _
      %p218 = scmp.lt.s32.totalorder %s19, 2
      // Predicated region
      $region29: #{tpu_custom_call.1} parent=5 // pred_check
        %p219 = pneg %p218
      $region30: #{tpu_custom_call.1} parent=5 // pred_check_branch
        %221 = sbr.rel (%p219) target = $region32
      $region31: #{tpu_custom_call.1} parent=5 // pred_region
        // Predicated region
        $region33: #{tpu_custom_call.1} parent=31 // pred_check
          %p222 = pneg %p39
        $region34: #{tpu_custom_call.1} parent=31 // pred_check_branch
          %224 = sbr.rel (%p222) target = $region36
        $region35: #{tpu_custom_call.1} parent=31 // pred_region
          %s225 = sand.u32 %s29, 1
          %s226 = scalar_lea.sflag [#allocation3], %s225
          %s227 = sand.u32 %s29, 1
          %s228 = smul.addr %s227, 384
          %s229 = scalar_lea.vmem [#allocation2], %s228
          %s230 = smul.u32 16, %s19
          %s232 = ssub.s32 6144, 6144
          %233 = vsyncadd %s226, %s232
          %s234 = smul.addr %s230, 6
          %s235 = smul.addr %s234, 64
          %s236 = scalar_lea.hbm %s0, %s235
          %s237 = sshll.u32 %s229, 4
          %s238 = int_to_ptr.vmem [resolvable:$true] %s237
          %243 = dma.hbm_to_vmem [thread:$0]  %s236, 6144, %s238, %s226, 384, 384, 24
        $region36: #{tpu_custom_call.1} parent=31 // pred_fallthru
          _
      $region32: #{tpu_custom_call.1} parent=5 // pred_fallthru
        _
      %p244 = scmp.le.s32.totalorder 1, %s19
      %p245 = scmp.lt.s32.totalorder %s19, 3
      %p246 = pnand %p244, %p245
      %p247 = pneg %p246
      // Predicated region
      $region37: #{tpu_custom_call.1} parent=5 // pred_check
        _
      $region38: #{tpu_custom_call.1} parent=5 // pred_check_branch
        %249 = sbr.rel (%p246) target = $region40
      $region39: #{tpu_custom_call.1} parent=5 // pred_region
        %s250 = ssub.s32 %s19, 1
        %s251 = sand.u32 %s32, 1
        %s252 = scalar_lea.sflag [#allocation3], %s251
        %s253 = sand.u32 %s32, 1
        %s254 = smul.addr %s253, 384
        %s255 = scalar_lea.vmem [#allocation2], %s254
        // Predicated region
        $region41: #{tpu_custom_call.1} parent=39 // pred_check
          %p256 = pneg %p45
        $region42: #{tpu_custom_call.1} parent=39 // pred_check_branch
          %258 = sbr.rel (%p256) target = $region44
        $region43: #{tpu_custom_call.1} parent=39 // pred_region
          %259 = dma.done %s252, 6144
        $region44: #{tpu_custom_call.1} parent=39 // pred_fallthru
          _
        // Predicated region
        $region45: #{tpu_custom_call.1} parent=39 // pred_check
          %p260 = pneg %p66
        $region46: #{tpu_custom_call.1} parent=39 // pred_check_branch
          %262 = sbr.rel (%p260) target = $region48
        $region47: #{tpu_custom_call.1} parent=39 // pred_region
          %263 = dma.done [#allocation6], 36864
        $region48: #{tpu_custom_call.1} parent=39 // pred_fallthru
          _
        // Predicated region
        $region49: #{tpu_custom_call.1} parent=39 // pred_check
          %p264 = pneg %p87
        $region50: #{tpu_custom_call.1} parent=39 // pred_check_branch
          %266 = sbr.rel (%p264) target = $region52
        $region51: #{tpu_custom_call.1} parent=39 // pred_region
          %267 = dma.done [#allocation6], 96
        $region52: #{tpu_custom_call.1} parent=39 // pred_fallthru
          _
        // Predicated region
        $region53: #{tpu_custom_call.1} parent=39 // pred_check
          %p268 = pneg %p108
        $region54: #{tpu_custom_call.1} parent=39 // pred_check_branch
          %270 = sbr.rel (%p268) target = $region56
        $region55: #{tpu_custom_call.1} parent=39 // pred_region
          %271 = dma.done [#allocation9], 6144
        $region56: #{tpu_custom_call.1} parent=39 // pred_fallthru
          _
        // Predicated region
        $region57: #{tpu_custom_call.1} parent=39 // pred_check
          %p272 = pneg %p129
        $region58: #{tpu_custom_call.1} parent=39 // pred_check_branch
          %274 = sbr.rel (%p272) target = $region60
        $region59: #{tpu_custom_call.1} parent=39 // pred_region
          %275 = dma.done [#allocation9], 16
        $region60: #{tpu_custom_call.1} parent=39 // pred_fallthru
          _
        %s276 = sand.u32 %s32, 1
        %s277 = scalar_lea.sflag [#allocation3], %s276
        %s278 = sand.u32 %s32, 1
        %s279 = smul.addr %s278, 384
        %s280 = scalar_lea.vmem [#allocation2], %s279
        %p281 = pneg %p45
        %p282 = pneg %p42
        %p283 = pneg %p66
        %p284 = pneg %p63
        %p285 = pneg %p87
        %p286 = pneg %p84
        %p287 = pneg %p108
        %p288 = pneg %p105
        %p289 = pneg %p129
        %p290 = pneg %p126
        %p291 = pneg %p155
        %p292 = pneg %p152
        %s293 = sand.u32 %s142, 1
        %s294 = scalar_lea.sflag [#allocation4], %s293
        %s295 = sand.u32 %s142, 1
        %s296 = smul.addr %s295, 128
        %s297 = scalar_lea.vmem [#allocation11], %s296
        %s298 = smul.u32 16, %s24
        %s299 = smul.u32 16, %s24
        %v301 = vld [vmem:[%s255] sm:$0xff]
        %v302 = vld [vmem:[%s255 + $0x8] sm:$0xff]
        %v303 = vld [vmem:[%s255 + $0x10] sm:$0xff]
        %v304 = vld [vmem:[%s255 + $0x18] sm:$0xff]
        %v305 = vld [vmem:[%s255 + $0x20] sm:$0xff]
        %v306 = vld [vmem:[%s255 + $0x28] sm:$0xff]
        %v307 = vld [vmem:[%s255 + $0x30] sm:$0xff]
        %v308 = vld [vmem:[%s255 + $0x38] sm:$0xff]
        %v309 = vld [vmem:[%s255 + $0x40] sm:$0xff]
        %v310 = vld [vmem:[%s255 + $0x48] sm:$0xff]
        %v311 = vld [vmem:[%s255 + $0x50] sm:$0xff]
        %v312 = vld [vmem:[%s255 + $0x58] sm:$0xff]
        %v313 = vld [vmem:[%s255 + $0x60] sm:$0xff]
        %v314 = vld [vmem:[%s255 + $0x68] sm:$0xff]
        %v315 = vld [vmem:[%s255 + $0x70] sm:$0xff]
        %v316 = vld [vmem:[%s255 + $0x78] sm:$0xff]
        %v317 = vld [vmem:[%s255 + $0x80] sm:$0xff]
        %v318 = vld [vmem:[%s255 + $0x88] sm:$0xff]
        %v319 = vld [vmem:[%s255 + $0x90] sm:$0xff]
        %v320 = vld [vmem:[%s255 + $0x98] sm:$0xff]
        %v321 = vld [vmem:[%s255 + $0xa0] sm:$0xff]
        %v322 = vld [vmem:[%s255 + $0xa8] sm:$0xff]
        %v323 = vld [vmem:[%s255 + $0xb0] sm:$0xff]
        %v324 = vld [vmem:[%s255 + $0xb8] sm:$0xff]
        %v325 = vld [vmem:[%s255 + $0xc0] sm:$0xff]
        %v326 = vld [vmem:[%s255 + $0xc8] sm:$0xff]
        %v327 = vld [vmem:[%s255 + $0xd0] sm:$0xff]
        %v328 = vld [vmem:[%s255 + $0xd8] sm:$0xff]
        %v329 = vld [vmem:[%s255 + $0xe0] sm:$0xff]
        %v330 = vld [vmem:[%s255 + $0xe8] sm:$0xff]
        %v331 = vld [vmem:[%s255 + $0xf0] sm:$0xff]
        %v332 = vld [vmem:[%s255 + $0xf8] sm:$0xff]
        %v333 = vld [vmem:[%s255 + $0x100] sm:$0xff]
        %v334 = vld [vmem:[%s255 + $0x108] sm:$0xff]
        %v335 = vld [vmem:[%s255 + $0x110] sm:$0xff]
        %v336 = vld [vmem:[%s255 + $0x118] sm:$0xff]
        %v337 = vld [vmem:[%s255 + $0x120] sm:$0xff]
        %v338 = vld [vmem:[%s255 + $0x128] sm:$0xff]
        %v339 = vld [vmem:[%s255 + $0x130] sm:$0xff]
        %v340 = vld [vmem:[%s255 + $0x138] sm:$0xff]
        %v341 = vld [vmem:[%s255 + $0x140] sm:$0xff]
        %v342 = vld [vmem:[%s255 + $0x148] sm:$0xff]
        %v343 = vld [vmem:[%s255 + $0x150] sm:$0xff]
        %v344 = vld [vmem:[%s255 + $0x158] sm:$0xff]
        %v345 = vld [vmem:[%s255 + $0x160] sm:$0xff]
        %v346 = vld [vmem:[%s255 + $0x168] sm:$0xff]
        %v347 = vld [vmem:[%s255 + $0x170] sm:$0xff]
        %v348 = vld [vmem:[%s255 + $0x178] sm:$0xff]
        %v349 = vld [vmem:[#allocation5] sm:$0xff]
        %v350 = vld [vmem:[#allocation5 + $0x8] sm:$0xff]
        %v351 = vld [vmem:[#allocation5 + $0x10] sm:$0xff]
        %v352 = vld [vmem:[#allocation5 + $0x18] sm:$0xff]
        %v353 = vld [vmem:[#allocation5 + $0x20] sm:$0xff]
        %v354 = vld [vmem:[#allocation5 + $0x28] sm:$0xff]
        %v355 = vld [vmem:[#allocation5 + $0x30] sm:$0xff]
        %v356 = vld [vmem:[#allocation5 + $0x38] sm:$0xff]
        %v357 = vld [vmem:[#allocation5 + $0x40] sm:$0xff]
        %v358 = vld [vmem:[#allocation5 + $0x48] sm:$0xff]
        %v359 = vld [vmem:[#allocation5 + $0x50] sm:$0xff]
        %v360 = vld [vmem:[#allocation5 + $0x58] sm:$0xff]
        %v361 = vld [vmem:[#allocation5 + $0x60] sm:$0xff]
        %v362 = vld [vmem:[#allocation5 + $0x68] sm:$0xff]
        %v363 = vld [vmem:[#allocation5 + $0x70] sm:$0xff]
        %v364 = vld [vmem:[#allocation5 + $0x78] sm:$0xff]
        %v365 = vld [vmem:[#allocation5 + $0x80] sm:$0xff]
        %v366 = vld [vmem:[#allocation5 + $0x88] sm:$0xff]
        %v367 = vld [vmem:[#allocation5 + $0x90] sm:$0xff]
        %v368 = vld [vmem:[#allocation5 + $0x98] sm:$0xff]
        %v369 = vld [vmem:[#allocation5 + $0xa0] sm:$0xff]
        %v370 = vld [vmem:[#allocation5 + $0xa8] sm:$0xff]
        %v371 = vld [vmem:[#allocation5 + $0xb0] sm:$0xff]
        %v372 = vld [vmem:[#allocation5 + $0xb8] sm:$0xff]
        %v373 = vld [vmem:[#allocation5 + $0xc0] sm:$0xff]
        %v374 = vld [vmem:[#allocation5 + $0xc8] sm:$0xff]
        %v375 = vld [vmem:[#allocation5 + $0xd0] sm:$0xff]
        %v376 = vld [vmem:[#allocation5 + $0xd8] sm:$0xff]
        %v377 = vld [vmem:[#allocation5 + $0xe0] sm:$0xff]
        %v378 = vld [vmem:[#allocation5 + $0xe8] sm:$0xff]
        %v379 = vld [vmem:[#allocation5 + $0xf0] sm:$0xff]
        %v380 = vld [vmem:[#allocation5 + $0xf8] sm:$0xff]
        %v381 = vld [vmem:[#allocation5 + $0x100] sm:$0xff]
        %v382 = vld [vmem:[#allocation5 + $0x108] sm:$0xff]
        %v383 = vld [vmem:[#allocation5 + $0x110] sm:$0xff]
        %v384 = vld [vmem:[#allocation5 + $0x118] sm:$0xff]
        %v385 = vld [vmem:[#allocation5 + $0x120] sm:$0xff]
        %v386 = vld [vmem:[#allocation5 + $0x128] sm:$0xff]
        %v387 = vld [vmem:[#allocation5 + $0x130] sm:$0xff]
        %v388 = vld [vmem:[#allocation5 + $0x138] sm:$0xff]
        %v389 = vld [vmem:[#allocation5 + $0x140] sm:$0xff]
        %v390 = vld [vmem:[#allocation5 + $0x148] sm:$0xff]
        %v391 = vld [vmem:[#allocation5 + $0x150] sm:$0xff]
        %v392 = vld [vmem:[#allocation5 + $0x158] sm:$0xff]
        %v393 = vld [vmem:[#allocation5 + $0x160] sm:$0xff]
        %v394 = vld [vmem:[#allocation5 + $0x168] sm:$0xff]
        %v395 = vld [vmem:[#allocation5 + $0x170] sm:$0xff]
        %v396 = vld [vmem:[#allocation5 + $0x178] sm:$0xff]
        %v397 = vld [vmem:[#allocation5 + $0x180] sm:$0xff]
        %v398 = vld [vmem:[#allocation5 + $0x188] sm:$0xff]
        %v399 = vld [vmem:[#allocation5 + $0x190] sm:$0xff]
        %v400 = vld [vmem:[#allocation5 + $0x198] sm:$0xff]
        %v401 = vld [vmem:[#allocation5 + $0x1a0] sm:$0xff]
        %v402 = vld [vmem:[#allocation5 + $0x1a8] sm:$0xff]
        %v403 = vld [vmem:[#allocation5 + $0x1b0] sm:$0xff]
        %v404 = vld [vmem:[#allocation5 + $0x1b8] sm:$0xff]
        %v405 = vld [vmem:[#allocation5 + $0x1c0] sm:$0xff]
        %v406 = vld [vmem:[#allocation5 + $0x1c8] sm:$0xff]
        %v407 = vld [vmem:[#allocation5 + $0x1d0] sm:$0xff]
        %v408 = vld [vmem:[#allocation5 + $0x1d8] sm:$0xff]
        %v409 = vld [vmem:[#allocation5 + $0x1e0] sm:$0xff]
        %v410 = vld [vmem:[#allocation5 + $0x1e8] sm:$0xff]
        %v411 = vld [vmem:[#allocation5 + $0x1f0] sm:$0xff]
        %v412 = vld [vmem:[#allocation5 + $0x1f8] sm:$0xff]
        %v413 = vld [vmem:[#allocation5 + $0x200] sm:$0xff]
        %v414 = vld [vmem:[#allocation5 + $0x208] sm:$0xff]
        %v415 = vld [vmem:[#allocation5 + $0x210] sm:$0xff]
        %v416 = vld [vmem:[#allocation5 + $0x218] sm:$0xff]
        %v417 = vld [vmem:[#allocation5 + $0x220] sm:$0xff]
        %v418 = vld [vmem:[#allocation5 + $0x228] sm:$0xff]
        %v419 = vld [vmem:[#allocation5 + $0x230] sm:$0xff]
        %v420 = vld [vmem:[#allocation5 + $0x238] sm:$0xff]
        %v421 = vld [vmem:[#allocation5 + $0x240] sm:$0xff]
        %v422 = vld [vmem:[#allocation5 + $0x248] sm:$0xff]
        %v423 = vld [vmem:[#allocation5 + $0x250] sm:$0xff]
        %v424 = vld [vmem:[#allocation5 + $0x258] sm:$0xff]
        %v425 = vld [vmem:[#allocation5 + $0x260] sm:$0xff]
        %v426 = vld [vmem:[#allocation5 + $0x268] sm:$0xff]
        %v427 = vld [vmem:[#allocation5 + $0x270] sm:$0xff]
        %v428 = vld [vmem:[#allocation5 + $0x278] sm:$0xff]
        %v429 = vld [vmem:[#allocation5 + $0x280] sm:$0xff]
        %v430 = vld [vmem:[#allocation5 + $0x288] sm:$0xff]
        %v431 = vld [vmem:[#allocation5 + $0x290] sm:$0xff]
        %v432 = vld [vmem:[#allocation5 + $0x298] sm:$0xff]
        %v433 = vld [vmem:[#allocation5 + $0x2a0] sm:$0xff]
        %v434 = vld [vmem:[#allocation5 + $0x2a8] sm:$0xff]
        %v435 = vld [vmem:[#allocation5 + $0x2b0] sm:$0xff]
        %v436 = vld [vmem:[#allocation5 + $0x2b8] sm:$0xff]
        %v437 = vld [vmem:[#allocation5 + $0x2c0] sm:$0xff]
        %v438 = vld [vmem:[#allocation5 + $0x2c8] sm:$0xff]
        %v439 = vld [vmem:[#allocation5 + $0x2d0] sm:$0xff]
        %v440 = vld [vmem:[#allocation5 + $0x2d8] sm:$0xff]
        %v441 = vld [vmem:[#allocation5 + $0x2e0] sm:$0xff]
        %v442 = vld [vmem:[#allocation5 + $0x2e8] sm:$0xff]
        %v443 = vld [vmem:[#allocation5 + $0x2f0] sm:$0xff]
        %v444 = vld [vmem:[#allocation5 + $0x2f8] sm:$0xff]
        %v445 = vld [vmem:[#allocation5 + $0x300] sm:$0xff]
        %v446 = vld [vmem:[#allocation5 + $0x308] sm:$0xff]
        %v447 = vld [vmem:[#allocation5 + $0x310] sm:$0xff]
        %v448 = vld [vmem:[#allocation5 + $0x318] sm:$0xff]
        %v449 = vld [vmem:[#allocation5 + $0x320] sm:$0xff]
        %v450 = vld [vmem:[#allocation5 + $0x328] sm:$0xff]
        %v451 = vld [vmem:[#allocation5 + $0x330] sm:$0xff]
        %v452 = vld [vmem:[#allocation5 + $0x338] sm:$0xff]
        %v453 = vld [vmem:[#allocation5 + $0x340] sm:$0xff]
        %v454 = vld [vmem:[#allocation5 + $0x348] sm:$0xff]
        %v455 = vld [vmem:[#allocation5 + $0x350] sm:$0xff]
        %v456 = vld [vmem:[#allocation5 + $0x358] sm:$0xff]
        %v457 = vld [vmem:[#allocation5 + $0x360] sm:$0xff]
        %v458 = vld [vmem:[#allocation5 + $0x368] sm:$0xff]
        %v459 = vld [vmem:[#allocation5 + $0x370] sm:$0xff]
        %v460 = vld [vmem:[#allocation5 + $0x378] sm:$0xff]
        %v461 = vld [vmem:[#allocation5 + $0x380] sm:$0xff]
        %v462 = vld [vmem:[#allocation5 + $0x388] sm:$0xff]
        %v463 = vld [vmem:[#allocation5 + $0x390] sm:$0xff]
        %v464 = vld [vmem:[#allocation5 + $0x398] sm:$0xff]
        %v465 = vld [vmem:[#allocation5 + $0x3a0] sm:$0xff]
        %v466 = vld [vmem:[#allocation5 + $0x3a8] sm:$0xff]
        %v467 = vld [vmem:[#allocation5 + $0x3b0] sm:$0xff]
        %v468 = vld [vmem:[#allocation5 + $0x3b8] sm:$0xff]
        %v469 = vld [vmem:[#allocation5 + $0x3c0] sm:$0xff]
        %v470 = vld [vmem:[#allocation5 + $0x3c8] sm:$0xff]
        %v471 = vld [vmem:[#allocation5 + $0x3d0] sm:$0xff]
        %v472 = vld [vmem:[#allocation5 + $0x3d8] sm:$0xff]
        %v473 = vld [vmem:[#allocation5 + $0x3e0] sm:$0xff]
        %v474 = vld [vmem:[#allocation5 + $0x3e8] sm:$0xff]
        %v475 = vld [vmem:[#allocation5 + $0x3f0] sm:$0xff]
        %v476 = vld [vmem:[#allocation5 + $0x3f8] sm:$0xff]
        %v477 = vld [vmem:[#allocation5 + $0x400] sm:$0xff]
        %v478 = vld [vmem:[#allocation5 + $0x408] sm:$0xff]
        %v479 = vld [vmem:[#allocation5 + $0x410] sm:$0xff]
        %v480 = vld [vmem:[#allocation5 + $0x418] sm:$0xff]
        %v481 = vld [vmem:[#allocation5 + $0x420] sm:$0xff]
        %v482 = vld [vmem:[#allocation5 + $0x428] sm:$0xff]
        %v483 = vld [vmem:[#allocation5 + $0x430] sm:$0xff]
        %v484 = vld [vmem:[#allocation5 + $0x438] sm:$0xff]
        %v485 = vld [vmem:[#allocation5 + $0x440] sm:$0xff]
        %v486 = vld [vmem:[#allocation5 + $0x448] sm:$0xff]
        %v487 = vld [vmem:[#allocation5 + $0x450] sm:$0xff]
        %v488 = vld [vmem:[#allocation5 + $0x458] sm:$0xff]
        %v489 = vld [vmem:[#allocation5 + $0x460] sm:$0xff]
        %v490 = vld [vmem:[#allocation5 + $0x468] sm:$0xff]
        %v491 = vld [vmem:[#allocation5 + $0x470] sm:$0xff]
        %v492 = vld [vmem:[#allocation5 + $0x478] sm:$0xff]
        %v493 = vld [vmem:[#allocation5 + $0x480] sm:$0xff]
        %v494 = vld [vmem:[#allocation5 + $0x488] sm:$0xff]
        %v495 = vld [vmem:[#allocation5 + $0x490] sm:$0xff]
        %v496 = vld [vmem:[#allocation5 + $0x498] sm:$0xff]
        %v497 = vld [vmem:[#allocation5 + $0x4a0] sm:$0xff]
        %v498 = vld [vmem:[#allocation5 + $0x4a8] sm:$0xff]
        %v499 = vld [vmem:[#allocation5 + $0x4b0] sm:$0xff]
        %v500 = vld [vmem:[#allocation5 + $0x4b8] sm:$0xff]
        %v501 = vld [vmem:[#allocation5 + $0x4c0] sm:$0xff]
        %v502 = vld [vmem:[#allocation5 + $0x4c8] sm:$0xff]
        %v503 = vld [vmem:[#allocation5 + $0x4d0] sm:$0xff]
        %v504 = vld [vmem:[#allocation5 + $0x4d8] sm:$0xff]
        %v505 = vld [vmem:[#allocation5 + $0x4e0] sm:$0xff]
        %v506 = vld [vmem:[#allocation5 + $0x4e8] sm:$0xff]
        %v507 = vld [vmem:[#allocation5 + $0x4f0] sm:$0xff]
        %v508 = vld [vmem:[#allocation5 + $0x4f8] sm:$0xff]
        %v509 = vld [vmem:[#allocation5 + $0x500] sm:$0xff]
        %v510 = vld [vmem:[#allocation5 + $0x508] sm:$0xff]
        %v511 = vld [vmem:[#allocation5 + $0x510] sm:$0xff]
        %v512 = vld [vmem:[#allocation5 + $0x518] sm:$0xff]
        %v513 = vld [vmem:[#allocation5 + $0x520] sm:$0xff]
        %v514 = vld [vmem:[#allocation5 + $0x528] sm:$0xff]
        %v515 = vld [vmem:[#allocation5 + $0x530] sm:$0xff]
        %v516 = vld [vmem:[#allocation5 + $0x538] sm:$0xff]
        %v517 = vld [vmem:[#allocation5 + $0x540] sm:$0xff]
        %v518 = vld [vmem:[#allocation5 + $0x548] sm:$0xff]
        %v519 = vld [vmem:[#allocation5 + $0x550] sm:$0xff]
        %v520 = vld [vmem:[#allocation5 + $0x558] sm:$0xff]
        %v521 = vld [vmem:[#allocation5 + $0x560] sm:$0xff]
        %v522 = vld [vmem:[#allocation5 + $0x568] sm:$0xff]
        %v523 = vld [vmem:[#allocation5 + $0x570] sm:$0xff]
        %v524 = vld [vmem:[#allocation5 + $0x578] sm:$0xff]
        %v525 = vld [vmem:[#allocation5 + $0x580] sm:$0xff]
        %v526 = vld [vmem:[#allocation5 + $0x588] sm:$0xff]
        %v527 = vld [vmem:[#allocation5 + $0x590] sm:$0xff]
        %v528 = vld [vmem:[#allocation5 + $0x598] sm:$0xff]
        %v529 = vld [vmem:[#allocation5 + $0x5a0] sm:$0xff]
        %v530 = vld [vmem:[#allocation5 + $0x5a8] sm:$0xff]
        %v531 = vld [vmem:[#allocation5 + $0x5b0] sm:$0xff]
        %v532 = vld [vmem:[#allocation5 + $0x5b8] sm:$0xff]
        %v533 = vld [vmem:[#allocation5 + $0x5c0] sm:$0xff]
        %v534 = vld [vmem:[#allocation5 + $0x5c8] sm:$0xff]
        %v535 = vld [vmem:[#allocation5 + $0x5d0] sm:$0xff]
        %v536 = vld [vmem:[#allocation5 + $0x5d8] sm:$0xff]
        %v537 = vld [vmem:[#allocation5 + $0x5e0] sm:$0xff]
        %v538 = vld [vmem:[#allocation5 + $0x5e8] sm:$0xff]
        %v539 = vld [vmem:[#allocation5 + $0x5f0] sm:$0xff]
        %v540 = vld [vmem:[#allocation5 + $0x5f8] sm:$0xff]
        %v541 = vld [vmem:[#allocation5 + $0x600] sm:$0xff]
        %v542 = vld [vmem:[#allocation5 + $0x608] sm:$0xff]
        %v543 = vld [vmem:[#allocation5 + $0x610] sm:$0xff]
        %v544 = vld [vmem:[#allocation5 + $0x618] sm:$0xff]
        %v545 = vld [vmem:[#allocation5 + $0x620] sm:$0xff]
        %v546 = vld [vmem:[#allocation5 + $0x628] sm:$0xff]
        %v547 = vld [vmem:[#allocation5 + $0x630] sm:$0xff]
        %v548 = vld [vmem:[#allocation5 + $0x638] sm:$0xff]
        %v549 = vld [vmem:[#allocation5 + $0x640] sm:$0xff]
        %v550 = vld [vmem:[#allocation5 + $0x648] sm:$0xff]
        %v551 = vld [vmem:[#allocation5 + $0x650] sm:$0xff]
        %v552 = vld [vmem:[#allocation5 + $0x658] sm:$0xff]
        %v553 = vld [vmem:[#allocation5 + $0x660] sm:$0xff]
        %v554 = vld [vmem:[#allocation5 + $0x668] sm:$0xff]
        %v555 = vld [vmem:[#allocation5 + $0x670] sm:$0xff]
        %v556 = vld [vmem:[#allocation5 + $0x678] sm:$0xff]
        %v557 = vld [vmem:[#allocation5 + $0x680] sm:$0xff]
        %v558 = vld [vmem:[#allocation5 + $0x688] sm:$0xff]
        %v559 = vld [vmem:[#allocation5 + $0x690] sm:$0xff]
        %v560 = vld [vmem:[#allocation5 + $0x698] sm:$0xff]
        %v561 = vld [vmem:[#allocation5 + $0x6a0] sm:$0xff]
        %v562 = vld [vmem:[#allocation5 + $0x6a8] sm:$0xff]
        %v563 = vld [vmem:[#allocation5 + $0x6b0] sm:$0xff]
        %v564 = vld [vmem:[#allocation5 + $0x6b8] sm:$0xff]
        %v565 = vld [vmem:[#allocation5 + $0x6c0] sm:$0xff]
        %v566 = vld [vmem:[#allocation5 + $0x6c8] sm:$0xff]
        %v567 = vld [vmem:[#allocation5 + $0x6d0] sm:$0xff]
        %v568 = vld [vmem:[#allocation5 + $0x6d8] sm:$0xff]
        %v569 = vld [vmem:[#allocation5 + $0x6e0] sm:$0xff]
        %v570 = vld [vmem:[#allocation5 + $0x6e8] sm:$0xff]
        %v571 = vld [vmem:[#allocation5 + $0x6f0] sm:$0xff]
        %v572 = vld [vmem:[#allocation5 + $0x6f8] sm:$0xff]
        %v573 = vld [vmem:[#allocation5 + $0x700] sm:$0xff]
        %v574 = vld [vmem:[#allocation5 + $0x708] sm:$0xff]
        %v575 = vld [vmem:[#allocation5 + $0x710] sm:$0xff]
        %v576 = vld [vmem:[#allocation5 + $0x718] sm:$0xff]
        %v577 = vld [vmem:[#allocation5 + $0x720] sm:$0xff]
        %v578 = vld [vmem:[#allocation5 + $0x728] sm:$0xff]
        %v579 = vld [vmem:[#allocation5 + $0x730] sm:$0xff]
        %v580 = vld [vmem:[#allocation5 + $0x738] sm:$0xff]
        %v581 = vld [vmem:[#allocation5 + $0x740] sm:$0xff]
        %v582 = vld [vmem:[#allocation5 + $0x748] sm:$0xff]
        %v583 = vld [vmem:[#allocation5 + $0x750] sm:$0xff]
        %v584 = vld [vmem:[#allocation5 + $0x758] sm:$0xff]
        %v585 = vld [vmem:[#allocation5 + $0x760] sm:$0xff]
        %v586 = vld [vmem:[#allocation5 + $0x768] sm:$0xff]
        %v587 = vld [vmem:[#allocation5 + $0x770] sm:$0xff]
        %v588 = vld [vmem:[#allocation5 + $0x778] sm:$0xff]
        %v589 = vld [vmem:[#allocation5 + $0x780] sm:$0xff]
        %v590 = vld [vmem:[#allocation5 + $0x788] sm:$0xff]
        %v591 = vld [vmem:[#allocation5 + $0x790] sm:$0xff]
        %v592 = vld [vmem:[#allocation5 + $0x798] sm:$0xff]
        %v593 = vld [vmem:[#allocation5 + $0x7a0] sm:$0xff]
        %v594 = vld [vmem:[#allocation5 + $0x7a8] sm:$0xff]
        %v595 = vld [vmem:[#allocation5 + $0x7b0] sm:$0xff]
        %v596 = vld [vmem:[#allocation5 + $0x7b8] sm:$0xff]
        %v597 = vld [vmem:[#allocation5 + $0x7c0] sm:$0xff]
        %v598 = vld [vmem:[#allocation5 + $0x7c8] sm:$0xff]
        %v599 = vld [vmem:[#allocation5 + $0x7d0] sm:$0xff]
        %v600 = vld [vmem:[#allocation5 + $0x7d8] sm:$0xff]
        %v601 = vld [vmem:[#allocation5 + $0x7e0] sm:$0xff]
        %v602 = vld [vmem:[#allocation5 + $0x7e8] sm:$0xff]
        %v603 = vld [vmem:[#allocation5 + $0x7f0] sm:$0xff]
        %v604 = vld [vmem:[#allocation5 + $0x7f8] sm:$0xff]
        %v605 = vld [vmem:[#allocation5 + $0x800] sm:$0xff]
        %v606 = vld [vmem:[#allocation5 + $0x808] sm:$0xff]
        %v607 = vld [vmem:[#allocation5 + $0x810] sm:$0xff]
        %v608 = vld [vmem:[#allocation5 + $0x818] sm:$0xff]
        %v609 = vld [vmem:[#allocation5 + $0x820] sm:$0xff]
        %v610 = vld [vmem:[#allocation5 + $0x828] sm:$0xff]
        %v611 = vld [vmem:[#allocation5 + $0x830] sm:$0xff]
        %v612 = vld [vmem:[#allocation5 + $0x838] sm:$0xff]
        %v613 = vld [vmem:[#allocation5 + $0x840] sm:$0xff]
        %v614 = vld [vmem:[#allocation5 + $0x848] sm:$0xff]
        %v615 = vld [vmem:[#allocation5 + $0x850] sm:$0xff]
        %v616 = vld [vmem:[#allocation5 + $0x858] sm:$0xff]
        %v617 = vld [vmem:[#allocation5 + $0x860] sm:$0xff]
        %v618 = vld [vmem:[#allocation5 + $0x868] sm:$0xff]
        %v619 = vld [vmem:[#allocation5 + $0x870] sm:$0xff]
        %v620 = vld [vmem:[#allocation5 + $0x878] sm:$0xff]
        %v621 = vld [vmem:[#allocation5 + $0x880] sm:$0xff]
        %v622 = vld [vmem:[#allocation5 + $0x888] sm:$0xff]
        %v623 = vld [vmem:[#allocation5 + $0x890] sm:$0xff]
        %v624 = vld [vmem:[#allocation5 + $0x898] sm:$0xff]
        %v625 = vld [vmem:[#allocation5 + $0x8a0] sm:$0xff]
        %v626 = vld [vmem:[#allocation5 + $0x8a8] sm:$0xff]
        %v627 = vld [vmem:[#allocation5 + $0x8b0] sm:$0xff]
        %v628 = vld [vmem:[#allocation5 + $0x8b8] sm:$0xff]
        %v629 = vld [vmem:[#allocation5 + $0x8c0] sm:$0xff]
        %v630 = vld [vmem:[#allocation5 + $0x8c8] sm:$0xff]
        %v631 = vld [vmem:[#allocation5 + $0x8d0] sm:$0xff]
        %v632 = vld [vmem:[#allocation5 + $0x8d8] sm:$0xff]
        %v633 = vld [vmem:[#allocation5 + $0x8e0] sm:$0xff]
        %v634 = vld [vmem:[#allocation5 + $0x8e8] sm:$0xff]
        %v635 = vld [vmem:[#allocation5 + $0x8f0] sm:$0xff]
        %v636 = vld [vmem:[#allocation5 + $0x8f8] sm:$0xff]
        %v637 = vld [vmem:[#allocation7] sm:$0x3f]
        %v639 = vlaneseq
        %v640 = vshrl.u32 %v639, 7
        %v641 = vsub.s32 0, %v640
        %v642 = vrot.slane %v637, %v641
        %v643 = vlaneseq
        %v644 = vshrl.u32 %v643, 7
        %v645 = vsub.s32 1, %v644
        %v646 = vrot.slane %v637, %v645
        %v647 = vlaneseq
        %v648 = vshrl.u32 %v647, 7
        %v649 = vsub.s32 2, %v648
        %v650 = vrot.slane %v637, %v649
        %v651 = vlaneseq
        %v652 = vshrl.u32 %v651, 7
        %v653 = vsub.s32 3, %v652
        %v654 = vrot.slane %v637, %v653
        %v655 = vlaneseq
        %v656 = vshrl.u32 %v655, 7
        %v657 = vsub.s32 4, %v656
        %v658 = vrot.slane %v637, %v657
        %v659 = vlaneseq
        %v660 = vshrl.u32 %v659, 7
        %v661 = vsub.s32 5, %v660
        %v662 = vrot.slane %v637, %v661
        %v717 = vunpack.c.l.b16 %v301
        %v718 = vunpack.c.h.b16 %v301
        %v719 = vunpack.c.l.b16 %v302
        %v720 = vunpack.c.h.b16 %v302
        %v721 = vunpack.c.l.b16 %v303
        %v722 = vunpack.c.h.b16 %v303
        %v723 = vunpack.c.l.b16 %v304
        %v724 = vunpack.c.h.b16 %v304
        %v725 = vunpack.c.l.b16 %v305
        %v726 = vunpack.c.h.b16 %v305
        %v727 = vunpack.c.l.b16 %v306
        %v728 = vunpack.c.h.b16 %v306
        %v729 = vunpack.c.l.b16 %v307
        %v730 = vunpack.c.h.b16 %v307
        %v731 = vunpack.c.l.b16 %v308
        %v732 = vunpack.c.h.b16 %v308
        %v733 = vunpack.c.l.b16 %v309
        %v734 = vunpack.c.h.b16 %v309
        %v735 = vunpack.c.l.b16 %v310
        %v736 = vunpack.c.h.b16 %v310
        %v737 = vunpack.c.l.b16 %v311
        %v738 = vunpack.c.h.b16 %v311
        %v739 = vunpack.c.l.b16 %v312
        %v740 = vunpack.c.h.b16 %v312
        %v741 = vunpack.c.l.b16 %v313
        %v742 = vunpack.c.h.b16 %v313
        %v743 = vunpack.c.l.b16 %v314
        %v744 = vunpack.c.h.b16 %v314
        %v745 = vunpack.c.l.b16 %v315
        %v746 = vunpack.c.h.b16 %v315
        %v747 = vunpack.c.l.b16 %v316
        %v748 = vunpack.c.h.b16 %v316
        %v749 = vunpack.c.l.b16 %v317
        %v750 = vunpack.c.h.b16 %v317
        %v751 = vunpack.c.l.b16 %v318
        %v752 = vunpack.c.h.b16 %v318
        %v753 = vunpack.c.l.b16 %v319
        %v754 = vunpack.c.h.b16 %v319
        %v755 = vunpack.c.l.b16 %v320
        %v756 = vunpack.c.h.b16 %v320
        %v757 = vunpack.c.l.b16 %v321
        %v758 = vunpack.c.h.b16 %v321
        %v759 = vunpack.c.l.b16 %v322
        %v760 = vunpack.c.h.b16 %v322
        %v761 = vunpack.c.l.b16 %v323
        %v762 = vunpack.c.h.b16 %v323
        %v763 = vunpack.c.l.b16 %v324
        %v764 = vunpack.c.h.b16 %v324
        %v765 = vunpack.c.l.b16 %v325
        %v766 = vunpack.c.h.b16 %v325
        %v767 = vunpack.c.l.b16 %v326
        %v768 = vunpack.c.h.b16 %v326
        %v769 = vunpack.c.l.b16 %v327
        %v770 = vunpack.c.h.b16 %v327
        %v771 = vunpack.c.l.b16 %v328
        %v772 = vunpack.c.h.b16 %v328
        %v773 = vunpack.c.l.b16 %v329
        %v774 = vunpack.c.h.b16 %v329
        %v775 = vunpack.c.l.b16 %v330
        %v776 = vunpack.c.h.b16 %v330
        %v777 = vunpack.c.l.b16 %v331
        %v778 = vunpack.c.h.b16 %v331
        %v779 = vunpack.c.l.b16 %v332
        %v780 = vunpack.c.h.b16 %v332
        %v781 = vunpack.c.l.b16 %v333
        %v782 = vunpack.c.h.b16 %v333
        %v783 = vunpack.c.l.b16 %v334
        %v784 = vunpack.c.h.b16 %v334
        %v785 = vunpack.c.l.b16 %v335
        %v786 = vunpack.c.h.b16 %v335
        %v787 = vunpack.c.l.b16 %v336
        %v788 = vunpack.c.h.b16 %v336
        %v789 = vunpack.c.l.b16 %v337
        %v790 = vunpack.c.h.b16 %v337
        %v791 = vunpack.c.l.b16 %v338
        %v792 = vunpack.c.h.b16 %v338
        %v793 = vunpack.c.l.b16 %v339
        %v794 = vunpack.c.h.b16 %v339
        %v795 = vunpack.c.l.b16 %v340
        %v796 = vunpack.c.h.b16 %v340
        %v797 = vunpack.c.l.b16 %v341
        %v798 = vunpack.c.h.b16 %v341
        %v799 = vunpack.c.l.b16 %v342
        %v800 = vunpack.c.h.b16 %v342
        %v801 = vunpack.c.l.b16 %v343
        %v802 = vunpack.c.h.b16 %v343
        %v803 = vunpack.c.l.b16 %v344
        %v804 = vunpack.c.h.b16 %v344
        %v805 = vunpack.c.l.b16 %v345
        %v806 = vunpack.c.h.b16 %v345
        %v807 = vunpack.c.l.b16 %v346
        %v808 = vunpack.c.h.b16 %v346
        %v809 = vunpack.c.l.b16 %v347
        %v810 = vunpack.c.h.b16 %v347
        %v811 = vunpack.c.l.b16 %v348
        %v812 = vunpack.c.h.b16 %v348
        %v813 = vpack.c.b16 %v723, %v717
        %v814 = vpack.c.b16 %v724, %v718
        %v815 = vpack.c.b16 %v725, %v719
        %v816 = vpack.c.b16 %v726, %v720
        %v817 = vpack.c.b16 %v727, %v721
        %v818 = vpack.c.b16 %v728, %v722
        %v819 = vpack.c.b16 %v735, %v729
        %v820 = vpack.c.b16 %v736, %v730
        %v821 = vpack.c.b16 %v737, %v731
        %v822 = vpack.c.b16 %v738, %v732
        %v823 = vpack.c.b16 %v739, %v733
        %v824 = vpack.c.b16 %v740, %v734
        %v825 = vpack.c.b16 %v747, %v741
        %v826 = vpack.c.b16 %v748, %v742
        %v827 = vpack.c.b16 %v749, %v743
        %v828 = vpack.c.b16 %v750, %v744
        %v829 = vpack.c.b16 %v751, %v745
        %v830 = vpack.c.b16 %v752, %v746
        %v831 = vpack.c.b16 %v759, %v753
        %v832 = vpack.c.b16 %v760, %v754
        %v833 = vpack.c.b16 %v761, %v755
        %v834 = vpack.c.b16 %v762, %v756
        %v835 = vpack.c.b16 %v763, %v757
        %v836 = vpack.c.b16 %v764, %v758
        %v837 = vpack.c.b16 %v771, %v765
        %v838 = vpack.c.b16 %v772, %v766
        %v839 = vpack.c.b16 %v773, %v767
        %v840 = vpack.c.b16 %v774, %v768
        %v841 = vpack.c.b16 %v775, %v769
        %v842 = vpack.c.b16 %v776, %v770
        %v843 = vpack.c.b16 %v783, %v777
        %v844 = vpack.c.b16 %v784, %v778
        %v845 = vpack.c.b16 %v785, %v779
        %v846 = vpack.c.b16 %v786, %v780
        %v847 = vpack.c.b16 %v787, %v781
        %v848 = vpack.c.b16 %v788, %v782
        %v849 = vpack.c.b16 %v795, %v789
        %v850 = vpack.c.b16 %v796, %v790
        %v851 = vpack.c.b16 %v797, %v791
        %v852 = vpack.c.b16 %v798, %v792
        %v853 = vpack.c.b16 %v799, %v793
        %v854 = vpack.c.b16 %v800, %v794
        %v855 = vpack.c.b16 %v807, %v801
        %v856 = vpack.c.b16 %v808, %v802
        %v857 = vpack.c.b16 %v809, %v803
        %v858 = vpack.c.b16 %v810, %v804
        %v859 = vpack.c.b16 %v811, %v805
        %v860 = vpack.c.b16 %v812, %v806
        %v1197 = vunpack.c.l.b16 %v349
        %v1198 = vunpack.c.h.b16 %v349
        %v1199 = vunpack.c.l.b16 %v350
        %v1200 = vunpack.c.h.b16 %v350
        %v1201 = vunpack.c.l.b16 %v351
        %v1202 = vunpack.c.h.b16 %v351
        %v1203 = vunpack.c.l.b16 %v352
        %v1204 = vunpack.c.h.b16 %v352
        %v1205 = vunpack.c.l.b16 %v353
        %v1206 = vunpack.c.h.b16 %v353
        %v1207 = vunpack.c.l.b16 %v354
        %v1208 = vunpack.c.h.b16 %v354
        %v1209 = vunpack.c.l.b16 %v355
        %v1210 = vunpack.c.h.b16 %v355
        %v1211 = vunpack.c.l.b16 %v356
        %v1212 = vunpack.c.h.b16 %v356
        %v1213 = vunpack.c.l.b16 %v357
        %v1214 = vunpack.c.h.b16 %v357
        %v1215 = vunpack.c.l.b16 %v358
        %v1216 = vunpack.c.h.b16 %v358
        %v1217 = vunpack.c.l.b16 %v359
        %v1218 = vunpack.c.h.b16 %v359
        %v1219 = vunpack.c.l.b16 %v360
        %v1220 = vunpack.c.h.b16 %v360
        %v1221 = vunpack.c.l.b16 %v361
        %v1222 = vunpack.c.h.b16 %v361
        %v1223 = vunpack.c.l.b16 %v362
        %v1224 = vunpack.c.h.b16 %v362
        %v1225 = vunpack.c.l.b16 %v363
        %v1226 = vunpack.c.h.b16 %v363
        %v1227 = vunpack.c.l.b16 %v364
        %v1228 = vunpack.c.h.b16 %v364
        %v1229 = vunpack.c.l.b16 %v365
        %v1230 = vunpack.c.h.b16 %v365
        %v1231 = vunpack.c.l.b16 %v366
        %v1232 = vunpack.c.h.b16 %v366
        %v1233 = vunpack.c.l.b16 %v367
        %v1234 = vunpack.c.h.b16 %v367
        %v1235 = vunpack.c.l.b16 %v368
        %v1236 = vunpack.c.h.b16 %v368
        %v1237 = vunpack.c.l.b16 %v369
        %v1238 = vunpack.c.h.b16 %v369
        %v1239 = vunpack.c.l.b16 %v370
        %v1240 = vunpack.c.h.b16 %v370
        %v1241 = vunpack.c.l.b16 %v371
        %v1242 = vunpack.c.h.b16 %v371
        %v1243 = vunpack.c.l.b16 %v372
        %v1244 = vunpack.c.h.b16 %v372
        %v1245 = vunpack.c.l.b16 %v373
        %v1246 = vunpack.c.h.b16 %v373
        %v1247 = vunpack.c.l.b16 %v374
        %v1248 = vunpack.c.h.b16 %v374
        %v1249 = vunpack.c.l.b16 %v375
        %v1250 = vunpack.c.h.b16 %v375
        %v1251 = vunpack.c.l.b16 %v376
        %v1252 = vunpack.c.h.b16 %v376
        %v1253 = vunpack.c.l.b16 %v377
        %v1254 = vunpack.c.h.b16 %v377
        %v1255 = vunpack.c.l.b16 %v378
        %v1256 = vunpack.c.h.b16 %v378
        %v1257 = vunpack.c.l.b16 %v379
        %v1258 = vunpack.c.h.b16 %v379
        %v1259 = vunpack.c.l.b16 %v380
        %v1260 = vunpack.c.h.b16 %v380
        %v1261 = vunpack.c.l.b16 %v381
        %v1262 = vunpack.c.h.b16 %v381
        %v1263 = vunpack.c.l.b16 %v382
        %v1264 = vunpack.c.h.b16 %v382
        %v1265 = vunpack.c.l.b16 %v383
        %v1266 = vunpack.c.h.b16 %v383
        %v1267 = vunpack.c.l.b16 %v384
        %v1268 = vunpack.c.h.b16 %v384
        %v1269 = vunpack.c.l.b16 %v385
        %v1270 = vunpack.c.h.b16 %v385
        %v1271 = vunpack.c.l.b16 %v386
        %v1272 = vunpack.c.h.b16 %v386
        %v1273 = vunpack.c.l.b16 %v387
        %v1274 = vunpack.c.h.b16 %v387
        %v1275 = vunpack.c.l.b16 %v388
        %v1276 = vunpack.c.h.b16 %v388
        %v1277 = vunpack.c.l.b16 %v389
        %v1278 = vunpack.c.h.b16 %v389
        %v1279 = vunpack.c.l.b16 %v390
        %v1280 = vunpack.c.h.b16 %v390
        %v1281 = vunpack.c.l.b16 %v391
        %v1282 = vunpack.c.h.b16 %v391
        %v1283 = vunpack.c.l.b16 %v392
        %v1284 = vunpack.c.h.b16 %v392
        %v1285 = vunpack.c.l.b16 %v393
        %v1286 = vunpack.c.h.b16 %v393
        %v1287 = vunpack.c.l.b16 %v394
        %v1288 = vunpack.c.h.b16 %v394
        %v1289 = vunpack.c.l.b16 %v395
        %v1290 = vunpack.c.h.b16 %v395
        %v1291 = vunpack.c.l.b16 %v396
        %v1292 = vunpack.c.h.b16 %v396
        %v1293 = vunpack.c.l.b16 %v397
        %v1294 = vunpack.c.h.b16 %v397
        %v1295 = vunpack.c.l.b16 %v398
        %v1296 = vunpack.c.h.b16 %v398
        %v1297 = vunpack.c.l.b16 %v399
        %v1298 = vunpack.c.h.b16 %v399
        %v1299 = vunpack.c.l.b16 %v400
        %v1300 = vunpack.c.h.b16 %v400
        %v1301 = vunpack.c.l.b16 %v401
        %v1302 = vunpack.c.h.b16 %v401
        %v1303 = vunpack.c.l.b16 %v402
        %v1304 = vunpack.c.h.b16 %v402
        %v1305 = vunpack.c.l.b16 %v403
        %v1306 = vunpack.c.h.b16 %v403
        %v1307 = vunpack.c.l.b16 %v404
        %v1308 = vunpack.c.h.b16 %v404
        %v1309 = vunpack.c.l.b16 %v405
        %v1310 = vunpack.c.h.b16 %v405
        %v1311 = vunpack.c.l.b16 %v406
        %v1312 = vunpack.c.h.b16 %v406
        %v1313 = vunpack.c.l.b16 %v407
        %v1314 = vunpack.c.h.b16 %v407
        %v1315 = vunpack.c.l.b16 %v408
        %v1316 = vunpack.c.h.b16 %v408
        %v1317 = vunpack.c.l.b16 %v409
        %v1318 = vunpack.c.h.b16 %v409
        %v1319 = vunpack.c.l.b16 %v410
        %v1320 = vunpack.c.h.b16 %v410
        %v1321 = vunpack.c.l.b16 %v411
        %v1322 = vunpack.c.h.b16 %v411
        %v1323 = vunpack.c.l.b16 %v412
        %v1324 = vunpack.c.h.b16 %v412
        %v1325 = vunpack.c.l.b16 %v413
        %v1326 = vunpack.c.h.b16 %v413
        %v1327 = vunpack.c.l.b16 %v414
        %v1328 = vunpack.c.h.b16 %v414
        %v1329 = vunpack.c.l.b16 %v415
        %v1330 = vunpack.c.h.b16 %v415
        %v1331 = vunpack.c.l.b16 %v416
        %v1332 = vunpack.c.h.b16 %v416
        %v1333 = vunpack.c.l.b16 %v417
        %v1334 = vunpack.c.h.b16 %v417
        %v1335 = vunpack.c.l.b16 %v418
        %v1336 = vunpack.c.h.b16 %v418
        %v1337 = vunpack.c.l.b16 %v419
        %v1338 = vunpack.c.h.b16 %v419
        %v1339 = vunpack.c.l.b16 %v420
        %v1340 = vunpack.c.h.b16 %v420
        %v1341 = vunpack.c.l.b16 %v421
        %v1342 = vunpack.c.h.b16 %v421
        %v1343 = vunpack.c.l.b16 %v422
        %v1344 = vunpack.c.h.b16 %v422
        %v1345 = vunpack.c.l.b16 %v423
        %v1346 = vunpack.c.h.b16 %v423
        %v1347 = vunpack.c.l.b16 %v424
        %v1348 = vunpack.c.h.b16 %v424
        %v1349 = vunpack.c.l.b16 %v425
        %v1350 = vunpack.c.h.b16 %v425
        %v1351 = vunpack.c.l.b16 %v426
        %v1352 = vunpack.c.h.b16 %v426
        %v1353 = vunpack.c.l.b16 %v427
        %v1354 = vunpack.c.h.b16 %v427
        %v1355 = vunpack.c.l.b16 %v428
        %v1356 = vunpack.c.h.b16 %v428
        %v1357 = vunpack.c.l.b16 %v429
        %v1358 = vunpack.c.h.b16 %v429
        %v1359 = vunpack.c.l.b16 %v430
        %v1360 = vunpack.c.h.b16 %v430
        %v1361 = vunpack.c.l.b16 %v431
        %v1362 = vunpack.c.h.b16 %v431
        %v1363 = vunpack.c.l.b16 %v432
        %v1364 = vunpack.c.h.b16 %v432
        %v1365 = vunpack.c.l.b16 %v433
        %v1366 = vunpack.c.h.b16 %v433
        %v1367 = vunpack.c.l.b16 %v434
        %v1368 = vunpack.c.h.b16 %v434
        %v1369 = vunpack.c.l.b16 %v435
        %v1370 = vunpack.c.h.b16 %v435
        %v1371 = vunpack.c.l.b16 %v436
        %v1372 = vunpack.c.h.b16 %v436
        %v1373 = vunpack.c.l.b16 %v437
        %v1374 = vunpack.c.h.b16 %v437
        %v1375 = vunpack.c.l.b16 %v438
        %v1376 = vunpack.c.h.b16 %v438
        %v1377 = vunpack.c.l.b16 %v439
        %v1378 = vunpack.c.h.b16 %v439
        %v1379 = vunpack.c.l.b16 %v440
        %v1380 = vunpack.c.h.b16 %v440
        %v1381 = vunpack.c.l.b16 %v441
        %v1382 = vunpack.c.h.b16 %v441
        %v1383 = vunpack.c.l.b16 %v442
        %v1384 = vunpack.c.h.b16 %v442
        %v1385 = vunpack.c.l.b16 %v443
        %v1386 = vunpack.c.h.b16 %v443
        %v1387 = vunpack.c.l.b16 %v444
        %v1388 = vunpack.c.h.b16 %v444
        %v1389 = vunpack.c.l.b16 %v445
        %v1390 = vunpack.c.h.b16 %v445
        %v1391 = vunpack.c.l.b16 %v446
        %v1392 = vunpack.c.h.b16 %v446
        %v1393 = vunpack.c.l.b16 %v447
        %v1394 = vunpack.c.h.b16 %v447
        %v1395 = vunpack.c.l.b16 %v448
        %v1396 = vunpack.c.h.b16 %v448
        %v1397 = vunpack.c.l.b16 %v449
        %v1398 = vunpack.c.h.b16 %v449
        %v1399 = vunpack.c.l.b16 %v450
        %v1400 = vunpack.c.h.b16 %v450
        %v1401 = vunpack.c.l.b16 %v451
        %v1402 = vunpack.c.h.b16 %v451
        %v1403 = vunpack.c.l.b16 %v452
        %v1404 = vunpack.c.h.b16 %v452
        %v1405 = vunpack.c.l.b16 %v453
        %v1406 = vunpack.c.h.b16 %v453
        %v1407 = vunpack.c.l.b16 %v454
        %v1408 = vunpack.c.h.b16 %v454
        %v1409 = vunpack.c.l.b16 %v455
        %v1410 = vunpack.c.h.b16 %v455
        %v1411 = vunpack.c.l.b16 %v456
        %v1412 = vunpack.c.h.b16 %v456
        %v1413 = vunpack.c.l.b16 %v457
        %v1414 = vunpack.c.h.b16 %v457
        %v1415 = vunpack.c.l.b16 %v458
        %v1416 = vunpack.c.h.b16 %v458
        %v1417 = vunpack.c.l.b16 %v459
        %v1418 = vunpack.c.h.b16 %v459
        %v1419 = vunpack.c.l.b16 %v460
        %v1420 = vunpack.c.h.b16 %v460
        %v1421 = vunpack.c.l.b16 %v461
        %v1422 = vunpack.c.h.b16 %v461
        %v1423 = vunpack.c.l.b16 %v462
        %v1424 = vunpack.c.h.b16 %v462
        %v1425 = vunpack.c.l.b16 %v463
        %v1426 = vunpack.c.h.b16 %v463
        %v1427 = vunpack.c.l.b16 %v464
        %v1428 = vunpack.c.h.b16 %v464
        %v1429 = vunpack.c.l.b16 %v465
        %v1430 = vunpack.c.h.b16 %v465
        %v1431 = vunpack.c.l.b16 %v466
        %v1432 = vunpack.c.h.b16 %v466
        %v1433 = vunpack.c.l.b16 %v467
        %v1434 = vunpack.c.h.b16 %v467
        %v1435 = vunpack.c.l.b16 %v468
        %v1436 = vunpack.c.h.b16 %v468
        %v1437 = vunpack.c.l.b16 %v469
        %v1438 = vunpack.c.h.b16 %v469
        %v1439 = vunpack.c.l.b16 %v470
        %v1440 = vunpack.c.h.b16 %v470
        %v1441 = vunpack.c.l.b16 %v471
        %v1442 = vunpack.c.h.b16 %v471
        %v1443 = vunpack.c.l.b16 %v472
        %v1444 = vunpack.c.h.b16 %v472
        %v1445 = vunpack.c.l.b16 %v473
        %v1446 = vunpack.c.h.b16 %v473
        %v1447 = vunpack.c.l.b16 %v474
        %v1448 = vunpack.c.h.b16 %v474
        %v1449 = vunpack.c.l.b16 %v475
        %v1450 = vunpack.c.h.b16 %v475
        %v1451 = vunpack.c.l.b16 %v476
        %v1452 = vunpack.c.h.b16 %v476
        %v1453 = vunpack.c.l.b16 %v477
        %v1454 = vunpack.c.h.b16 %v477
        %v1455 = vunpack.c.l.b16 %v478
        %v1456 = vunpack.c.h.b16 %v478
        %v1457 = vunpack.c.l.b16 %v479
        %v1458 = vunpack.c.h.b16 %v479
        %v1459 = vunpack.c.l.b16 %v480
        %v1460 = vunpack.c.h.b16 %v480
        %v1461 = vunpack.c.l.b16 %v481
        %v1462 = vunpack.c.h.b16 %v481
        %v1463 = vunpack.c.l.b16 %v482
        %v1464 = vunpack.c.h.b16 %v482
        %v1465 = vunpack.c.l.b16 %v483
        %v1466 = vunpack.c.h.b16 %v483
        %v1467 = vunpack.c.l.b16 %v484
        %v1468 = vunpack.c.h.b16 %v484
        %v1469 = vunpack.c.l.b16 %v485
        %v1470 = vunpack.c.h.b16 %v485
        %v1471 = vunpack.c.l.b16 %v486
        %v1472 = vunpack.c.h.b16 %v486
        %v1473 = vunpack.c.l.b16 %v487
        %v1474 = vunpack.c.h.b16 %v487
        %v1475 = vunpack.c.l.b16 %v488
        %v1476 = vunpack.c.h.b16 %v488
        %v1477 = vunpack.c.l.b16 %v489
        %v1478 = vunpack.c.h.b16 %v489
        %v1479 = vunpack.c.l.b16 %v490
        %v1480 = vunpack.c.h.b16 %v490
        %v1481 = vunpack.c.l.b16 %v491
        %v1482 = vunpack.c.h.b16 %v491
        %v1483 = vunpack.c.l.b16 %v492
        %v1484 = vunpack.c.h.b16 %v492
        %v1485 = vunpack.c.l.b16 %v493
        %v1486 = vunpack.c.h.b16 %v493
        %v1487 = vunpack.c.l.b16 %v494
        %v1488 = vunpack.c.h.b16 %v494
        %v1489 = vunpack.c.l.b16 %v495
        %v1490 = vunpack.c.h.b16 %v495
        %v1491 = vunpack.c.l.b16 %v496
        %v1492 = vunpack.c.h.b16 %v496
        %v1493 = vunpack.c.l.b16 %v497
        %v1494 = vunpack.c.h.b16 %v497
        %v1495 = vunpack.c.l.b16 %v498
        %v1496 = vunpack.c.h.b16 %v498
        %v1497 = vunpack.c.l.b16 %v499
        %v1498 = vunpack.c.h.b16 %v499
        %v1499 = vunpack.c.l.b16 %v500
        %v1500 = vunpack.c.h.b16 %v500
        %v1501 = vunpack.c.l.b16 %v501
        %v1502 = vunpack.c.h.b16 %v501
        %v1503 = vunpack.c.l.b16 %v502
        %v1504 = vunpack.c.h.b16 %v502
        %v1505 = vunpack.c.l.b16 %v503
        %v1506 = vunpack.c.h.b16 %v503
        %v1507 = vunpack.c.l.b16 %v504
        %v1508 = vunpack.c.h.b16 %v504
        %v1509 = vunpack.c.l.b16 %v505
        %v1510 = vunpack.c.h.b16 %v505
        %v1511 = vunpack.c.l.b16 %v506
        %v1512 = vunpack.c.h.b16 %v506
        %v1513 = vunpack.c.l.b16 %v507
        %v1514 = vunpack.c.h.b16 %v507
        %v1515 = vunpack.c.l.b16 %v508
        %v1516 = vunpack.c.h.b16 %v508
        %v1517 = vunpack.c.l.b16 %v509
        %v1518 = vunpack.c.h.b16 %v509
        %v1519 = vunpack.c.l.b16 %v510
        %v1520 = vunpack.c.h.b16 %v510
        %v1521 = vunpack.c.l.b16 %v511
        %v1522 = vunpack.c.h.b16 %v511
        %v1523 = vunpack.c.l.b16 %v512
        %v1524 = vunpack.c.h.b16 %v512
        %v1525 = vunpack.c.l.b16 %v513
        %v1526 = vunpack.c.h.b16 %v513
        %v1527 = vunpack.c.l.b16 %v514
        %v1528 = vunpack.c.h.b16 %v514
        %v1529 = vunpack.c.l.b16 %v515
        %v1530 = vunpack.c.h.b16 %v515
        %v1531 = vunpack.c.l.b16 %v516
        %v1532 = vunpack.c.h.b16 %v516
        %v1533 = vunpack.c.l.b16 %v517
        %v1534 = vunpack.c.h.b16 %v517
        %v1535 = vunpack.c.l.b16 %v518
        %v1536 = vunpack.c.h.b16 %v518
        %v1537 = vunpack.c.l.b16 %v519
        %v1538 = vunpack.c.h.b16 %v519
        %v1539 = vunpack.c.l.b16 %v520
        %v1540 = vunpack.c.h.b16 %v520
        %v1541 = vunpack.c.l.b16 %v521
        %v1542 = vunpack.c.h.b16 %v521
        %v1543 = vunpack.c.l.b16 %v522
        %v1544 = vunpack.c.h.b16 %v522
        %v1545 = vunpack.c.l.b16 %v523
        %v1546 = vunpack.c.h.b16 %v523
        %v1547 = vunpack.c.l.b16 %v524
        %v1548 = vunpack.c.h.b16 %v524
        %v1549 = vunpack.c.l.b16 %v525
        %v1550 = vunpack.c.h.b16 %v525
        %v1551 = vunpack.c.l.b16 %v526
        %v1552 = vunpack.c.h.b16 %v526
        %v1553 = vunpack.c.l.b16 %v527
        %v1554 = vunpack.c.h.b16 %v527
        %v1555 = vunpack.c.l.b16 %v528
        %v1556 = vunpack.c.h.b16 %v528
        %v1557 = vunpack.c.l.b16 %v529
        %v1558 = vunpack.c.h.b16 %v529
        %v1559 = vunpack.c.l.b16 %v530
        %v1560 = vunpack.c.h.b16 %v530
        %v1561 = vunpack.c.l.b16 %v531
        %v1562 = vunpack.c.h.b16 %v531
        %v1563 = vunpack.c.l.b16 %v532
        %v1564 = vunpack.c.h.b16 %v532
        %v1565 = vunpack.c.l.b16 %v533
        %v1566 = vunpack.c.h.b16 %v533
        %v1567 = vunpack.c.l.b16 %v534
        %v1568 = vunpack.c.h.b16 %v534
        %v1569 = vunpack.c.l.b16 %v535
        %v1570 = vunpack.c.h.b16 %v535
        %v1571 = vunpack.c.l.b16 %v536
        %v1572 = vunpack.c.h.b16 %v536
        %v1573 = vunpack.c.l.b16 %v537
        %v1574 = vunpack.c.h.b16 %v537
        %v1575 = vunpack.c.l.b16 %v538
        %v1576 = vunpack.c.h.b16 %v538
        %v1577 = vunpack.c.l.b16 %v539
        %v1578 = vunpack.c.h.b16 %v539
        %v1579 = vunpack.c.l.b16 %v540
        %v1580 = vunpack.c.h.b16 %v540
        %v1581 = vunpack.c.l.b16 %v541
        %v1582 = vunpack.c.h.b16 %v541
        %v1583 = vunpack.c.l.b16 %v542
        %v1584 = vunpack.c.h.b16 %v542
        %v1585 = vunpack.c.l.b16 %v543
        %v1586 = vunpack.c.h.b16 %v543
        %v1587 = vunpack.c.l.b16 %v544
        %v1588 = vunpack.c.h.b16 %v544
        %v1589 = vunpack.c.l.b16 %v545
        %v1590 = vunpack.c.h.b16 %v545
        %v1591 = vunpack.c.l.b16 %v546
        %v1592 = vunpack.c.h.b16 %v546
        %v1593 = vunpack.c.l.b16 %v547
        %v1594 = vunpack.c.h.b16 %v547
        %v1595 = vunpack.c.l.b16 %v548
        %v1596 = vunpack.c.h.b16 %v548
        %v1597 = vunpack.c.l.b16 %v549
        %v1598 = vunpack.c.h.b16 %v549
        %v1599 = vunpack.c.l.b16 %v550
        %v1600 = vunpack.c.h.b16 %v550
        %v1601 = vunpack.c.l.b16 %v551
        %v1602 = vunpack.c.h.b16 %v551
        %v1603 = vunpack.c.l.b16 %v552
        %v1604 = vunpack.c.h.b16 %v552
        %v1605 = vunpack.c.l.b16 %v553
        %v1606 = vunpack.c.h.b16 %v553
        %v1607 = vunpack.c.l.b16 %v554
        %v1608 = vunpack.c.h.b16 %v554
        %v1609 = vunpack.c.l.b16 %v555
        %v1610 = vunpack.c.h.b16 %v555
        %v1611 = vunpack.c.l.b16 %v556
        %v1612 = vunpack.c.h.b16 %v556
        %v1613 = vunpack.c.l.b16 %v557
        %v1614 = vunpack.c.h.b16 %v557
        %v1615 = vunpack.c.l.b16 %v558
        %v1616 = vunpack.c.h.b16 %v558
        %v1617 = vunpack.c.l.b16 %v559
        %v1618 = vunpack.c.h.b16 %v559
        %v1619 = vunpack.c.l.b16 %v560
        %v1620 = vunpack.c.h.b16 %v560
        %v1621 = vunpack.c.l.b16 %v561
        %v1622 = vunpack.c.h.b16 %v561
        %v1623 = vunpack.c.l.b16 %v562
        %v1624 = vunpack.c.h.b16 %v562
        %v1625 = vunpack.c.l.b16 %v563
        %v1626 = vunpack.c.h.b16 %v563
        %v1627 = vunpack.c.l.b16 %v564
        %v1628 = vunpack.c.h.b16 %v564
        %v1629 = vunpack.c.l.b16 %v565
        %v1630 = vunpack.c.h.b16 %v565
        %v1631 = vunpack.c.l.b16 %v566
        %v1632 = vunpack.c.h.b16 %v566
        %v1633 = vunpack.c.l.b16 %v567
        %v1634 = vunpack.c.h.b16 %v567
        %v1635 = vunpack.c.l.b16 %v568
        %v1636 = vunpack.c.h.b16 %v568
        %v1637 = vunpack.c.l.b16 %v569
        %v1638 = vunpack.c.h.b16 %v569
        %v1639 = vunpack.c.l.b16 %v570
        %v1640 = vunpack.c.h.b16 %v570
        %v1641 = vunpack.c.l.b16 %v571
        %v1642 = vunpack.c.h.b16 %v571
        %v1643 = vunpack.c.l.b16 %v572
        %v1644 = vunpack.c.h.b16 %v572
        %v1645 = vunpack.c.l.b16 %v573
        %v1646 = vunpack.c.h.b16 %v573
        %v1647 = vunpack.c.l.b16 %v574
        %v1648 = vunpack.c.h.b16 %v574
        %v1649 = vunpack.c.l.b16 %v575
        %v1650 = vunpack.c.h.b16 %v575
        %v1651 = vunpack.c.l.b16 %v576
        %v1652 = vunpack.c.h.b16 %v576
        %v1653 = vunpack.c.l.b16 %v577
        %v1654 = vunpack.c.h.b16 %v577
        %v1655 = vunpack.c.l.b16 %v578
        %v1656 = vunpack.c.h.b16 %v578
        %v1657 = vunpack.c.l.b16 %v579
        %v1658 = vunpack.c.h.b16 %v579
        %v1659 = vunpack.c.l.b16 %v580
        %v1660 = vunpack.c.h.b16 %v580
        %v1661 = vunpack.c.l.b16 %v581
        %v1662 = vunpack.c.h.b16 %v581
        %v1663 = vunpack.c.l.b16 %v582
        %v1664 = vunpack.c.h.b16 %v582
        %v1665 = vunpack.c.l.b16 %v583
        %v1666 = vunpack.c.h.b16 %v583
        %v1667 = vunpack.c.l.b16 %v584
        %v1668 = vunpack.c.h.b16 %v584
        %v1669 = vunpack.c.l.b16 %v585
        %v1670 = vunpack.c.h.b16 %v585
        %v1671 = vunpack.c.l.b16 %v586
        %v1672 = vunpack.c.h.b16 %v586
        %v1673 = vunpack.c.l.b16 %v587
        %v1674 = vunpack.c.h.b16 %v587
        %v1675 = vunpack.c.l.b16 %v588
        %v1676 = vunpack.c.h.b16 %v588
        %v1677 = vunpack.c.l.b16 %v589
        %v1678 = vunpack.c.h.b16 %v589
        %v1679 = vunpack.c.l.b16 %v590
        %v1680 = vunpack.c.h.b16 %v590
        %v1681 = vunpack.c.l.b16 %v591
        %v1682 = vunpack.c.h.b16 %v591
        %v1683 = vunpack.c.l.b16 %v592
        %v1684 = vunpack.c.h.b16 %v592
        %v1685 = vunpack.c.l.b16 %v593
        %v1686 = vunpack.c.h.b16 %v593
        %v1687 = vunpack.c.l.b16 %v594
        %v1688 = vunpack.c.h.b16 %v594
        %v1689 = vunpack.c.l.b16 %v595
        %v1690 = vunpack.c.h.b16 %v595
        %v1691 = vunpack.c.l.b16 %v596
        %v1692 = vunpack.c.h.b16 %v596
        %v1693 = vunpack.c.l.b16 %v597
        %v1694 = vunpack.c.h.b16 %v597
        %v1695 = vunpack.c.l.b16 %v598
        %v1696 = vunpack.c.h.b16 %v598
        %v1697 = vunpack.c.l.b16 %v599
        %v1698 = vunpack.c.h.b16 %v599
        %v1699 = vunpack.c.l.b16 %v600
        %v1700 = vunpack.c.h.b16 %v600
        %v1701 = vunpack.c.l.b16 %v601
        %v1702 = vunpack.c.h.b16 %v601
        %v1703 = vunpack.c.l.b16 %v602
        %v1704 = vunpack.c.h.b16 %v602
        %v1705 = vunpack.c.l.b16 %v603
        %v1706 = vunpack.c.h.b16 %v603
        %v1707 = vunpack.c.l.b16 %v604
        %v1708 = vunpack.c.h.b16 %v604
        %v1709 = vunpack.c.l.b16 %v605
        %v1710 = vunpack.c.h.b16 %v605
        %v1711 = vunpack.c.l.b16 %v606
        %v1712 = vunpack.c.h.b16 %v606
        %v1713 = vunpack.c.l.b16 %v607
        %v1714 = vunpack.c.h.b16 %v607
        %v1715 = vunpack.c.l.b16 %v608
        %v1716 = vunpack.c.h.b16 %v608
        %v1717 = vunpack.c.l.b16 %v609
        %v1718 = vunpack.c.h.b16 %v609
        %v1719 = vunpack.c.l.b16 %v610
        %v1720 = vunpack.c.h.b16 %v610
        %v1721 = vunpack.c.l.b16 %v611
        %v1722 = vunpack.c.h.b16 %v611
        %v1723 = vunpack.c.l.b16 %v612
        %v1724 = vunpack.c.h.b16 %v612
        %v1725 = vunpack.c.l.b16 %v613
        %v1726 = vunpack.c.h.b16 %v613
        %v1727 = vunpack.c.l.b16 %v614
        %v1728 = vunpack.c.h.b16 %v614
        %v1729 = vunpack.c.l.b16 %v615
        %v1730 = vunpack.c.h.b16 %v615
        %v1731 = vunpack.c.l.b16 %v616
        %v1732 = vunpack.c.h.b16 %v616
        %v1733 = vunpack.c.l.b16 %v617
        %v1734 = vunpack.c.h.b16 %v617
        %v1735 = vunpack.c.l.b16 %v618
        %v1736 = vunpack.c.h.b16 %v618
        %v1737 = vunpack.c.l.b16 %v619
        %v1738 = vunpack.c.h.b16 %v619
        %v1739 = vunpack.c.l.b16 %v620
        %v1740 = vunpack.c.h.b16 %v620
        %v1741 = vunpack.c.l.b16 %v621
        %v1742 = vunpack.c.h.b16 %v621
        %v1743 = vunpack.c.l.b16 %v622
        %v1744 = vunpack.c.h.b16 %v622
        %v1745 = vunpack.c.l.b16 %v623
        %v1746 = vunpack.c.h.b16 %v623
        %v1747 = vunpack.c.l.b16 %v624
        %v1748 = vunpack.c.h.b16 %v624
        %v1749 = vunpack.c.l.b16 %v625
        %v1750 = vunpack.c.h.b16 %v625
        %v1751 = vunpack.c.l.b16 %v626
        %v1752 = vunpack.c.h.b16 %v626
        %v1753 = vunpack.c.l.b16 %v627
        %v1754 = vunpack.c.h.b16 %v627
        %v1755 = vunpack.c.l.b16 %v628
        %v1756 = vunpack.c.h.b16 %v628
        %v1757 = vunpack.c.l.b16 %v629
        %v1758 = vunpack.c.h.b16 %v629
        %v1759 = vunpack.c.l.b16 %v630
        %v1760 = vunpack.c.h.b16 %v630
        %v1761 = vunpack.c.l.b16 %v631
        %v1762 = vunpack.c.h.b16 %v631
        %v1763 = vunpack.c.l.b16 %v632
        %v1764 = vunpack.c.h.b16 %v632
        %v1765 = vunpack.c.l.b16 %v633
        %v1766 = vunpack.c.h.b16 %v633
        %v1767 = vunpack.c.l.b16 %v634
        %v1768 = vunpack.c.h.b16 %v634
        %v1769 = vunpack.c.l.b16 %v635
        %v1770 = vunpack.c.h.b16 %v635
        %v1771 = vunpack.c.l.b16 %v636
        %v1772 = vunpack.c.h.b16 %v636
        %v1773 = vpack.c.b16 %v1203, %v1197
        %v1774 = vpack.c.b16 %v1204, %v1198
        %v1775 = vpack.c.b16 %v1205, %v1199
        %v1776 = vpack.c.b16 %v1206, %v1200
        %v1777 = vpack.c.b16 %v1207, %v1201
        %v1778 = vpack.c.b16 %v1208, %v1202
        %v1779 = vpack.c.b16 %v1215, %v1209
        %v1780 = vpack.c.b16 %v1216, %v1210
        %v1781 = vpack.c.b16 %v1217, %v1211
        %v1782 = vpack.c.b16 %v1218, %v1212
        %v1783 = vpack.c.b16 %v1219, %v1213
        %v1784 = vpack.c.b16 %v1220, %v1214
        %v1785 = vpack.c.b16 %v1227, %v1221
        %v1786 = vpack.c.b16 %v1228, %v1222
        %v1787 = vpack.c.b16 %v1229, %v1223
        %v1788 = vpack.c.b16 %v1230, %v1224
        %v1789 = vpack.c.b16 %v1231, %v1225
        %v1790 = vpack.c.b16 %v1232, %v1226
        %v1791 = vpack.c.b16 %v1239, %v1233
        %v1792 = vpack.c.b16 %v1240, %v1234
        %v1793 = vpack.c.b16 %v1241, %v1235
        %v1794 = vpack.c.b16 %v1242, %v1236
        %v1795 = vpack.c.b16 %v1243, %v1237
        %v1796 = vpack.c.b16 %v1244, %v1238
        %v1797 = vpack.c.b16 %v1251, %v1245
        %v1798 = vpack.c.b16 %v1252, %v1246
        %v1799 = vpack.c.b16 %v1253, %v1247
        %v1800 = vpack.c.b16 %v1254, %v1248
        %v1801 = vpack.c.b16 %v1255, %v1249
        %v1802 = vpack.c.b16 %v1256, %v1250
        %v1803 = vpack.c.b16 %v1263, %v1257
        %v1804 = vpack.c.b16 %v1264, %v1258
        %v1805 = vpack.c.b16 %v1265, %v1259
        %v1806 = vpack.c.b16 %v1266, %v1260
        %v1807 = vpack.c.b16 %v1267, %v1261
        %v1808 = vpack.c.b16 %v1268, %v1262
        %v1809 = vpack.c.b16 %v1275, %v1269
        %v1810 = vpack.c.b16 %v1276, %v1270
        %v1811 = vpack.c.b16 %v1277, %v1271
        %v1812 = vpack.c.b16 %v1278, %v1272
        %v1813 = vpack.c.b16 %v1279, %v1273
        %v1814 = vpack.c.b16 %v1280, %v1274
        %v1815 = vpack.c.b16 %v1287, %v1281
        %v1816 = vpack.c.b16 %v1288, %v1282
        %v1817 = vpack.c.b16 %v1289, %v1283
        %v1818 = vpack.c.b16 %v1290, %v1284
        %v1819 = vpack.c.b16 %v1291, %v1285
        %v1820 = vpack.c.b16 %v1292, %v1286
        %v1821 = vpack.c.b16 %v1299, %v1293
        %v1822 = vpack.c.b16 %v1300, %v1294
        %v1823 = vpack.c.b16 %v1301, %v1295
        %v1824 = vpack.c.b16 %v1302, %v1296
        %v1825 = vpack.c.b16 %v1303, %v1297
        %v1826 = vpack.c.b16 %v1304, %v1298
        %v1827 = vpack.c.b16 %v1311, %v1305
        %v1828 = vpack.c.b16 %v1312, %v1306
        %v1829 = vpack.c.b16 %v1313, %v1307
        %v1830 = vpack.c.b16 %v1314, %v1308
        %v1831 = vpack.c.b16 %v1315, %v1309
        %v1832 = vpack.c.b16 %v1316, %v1310
        %v1833 = vpack.c.b16 %v1323, %v1317
        %v1834 = vpack.c.b16 %v1324, %v1318
        %v1835 = vpack.c.b16 %v1325, %v1319
        %v1836 = vpack.c.b16 %v1326, %v1320
        %v1837 = vpack.c.b16 %v1327, %v1321
        %v1838 = vpack.c.b16 %v1328, %v1322
        %v1839 = vpack.c.b16 %v1335, %v1329
        %v1840 = vpack.c.b16 %v1336, %v1330
        %v1841 = vpack.c.b16 %v1337, %v1331
        %v1842 = vpack.c.b16 %v1338, %v1332
        %v1843 = vpack.c.b16 %v1339, %v1333
        %v1844 = vpack.c.b16 %v1340, %v1334
        %v1845 = vpack.c.b16 %v1347, %v1341
        %v1846 = vpack.c.b16 %v1348, %v1342
        %v1847 = vpack.c.b16 %v1349, %v1343
        %v1848 = vpack.c.b16 %v1350, %v1344
        %v1849 = vpack.c.b16 %v1351, %v1345
        %v1850 = vpack.c.b16 %v1352, %v1346
        %v1851 = vpack.c.b16 %v1359, %v1353
        %v1852 = vpack.c.b16 %v1360, %v1354
        %v1853 = vpack.c.b16 %v1361, %v1355
        %v1854 = vpack.c.b16 %v1362, %v1356
        %v1855 = vpack.c.b16 %v1363, %v1357
        %v1856 = vpack.c.b16 %v1364, %v1358
        %v1857 = vpack.c.b16 %v1371, %v1365
        %v1858 = vpack.c.b16 %v1372, %v1366
        %v1859 = vpack.c.b16 %v1373, %v1367
        %v1860 = vpack.c.b16 %v1374, %v1368
        %v1861 = vpack.c.b16 %v1375, %v1369
        %v1862 = vpack.c.b16 %v1376, %v1370
        %v1863 = vpack.c.b16 %v1383, %v1377
        %v1864 = vpack.c.b16 %v1384, %v1378
        %v1865 = vpack.c.b16 %v1385, %v1379
        %v1866 = vpack.c.b16 %v1386, %v1380
        %v1867 = vpack.c.b16 %v1387, %v1381
        %v1868 = vpack.c.b16 %v1388, %v1382
        %v1869 = vpack.c.b16 %v1395, %v1389
        %v1870 = vpack.c.b16 %v1396, %v1390
        %v1871 = vpack.c.b16 %v1397, %v1391
        %v1872 = vpack.c.b16 %v1398, %v1392
        %v1873 = vpack.c.b16 %v1399, %v1393
        %v1874 = vpack.c.b16 %v1400, %v1394
        %v1875 = vpack.c.b16 %v1407, %v1401
        %v1876 = vpack.c.b16 %v1408, %v1402
        %v1877 = vpack.c.b16 %v1409, %v1403
        %v1878 = vpack.c.b16 %v1410, %v1404
        %v1879 = vpack.c.b16 %v1411, %v1405
        %v1880 = vpack.c.b16 %v1412, %v1406
        %v1881 = vpack.c.b16 %v1419, %v1413
        %v1882 = vpack.c.b16 %v1420, %v1414
        %v1883 = vpack.c.b16 %v1421, %v1415
        %v1884 = vpack.c.b16 %v1422, %v1416
        %v1885 = vpack.c.b16 %v1423, %v1417
        %v1886 = vpack.c.b16 %v1424, %v1418
        %v1887 = vpack.c.b16 %v1431, %v1425
        %v1888 = vpack.c.b16 %v1432, %v1426
        %v1889 = vpack.c.b16 %v1433, %v1427
        %v1890 = vpack.c.b16 %v1434, %v1428
        %v1891 = vpack.c.b16 %v1435, %v1429
        %v1892 = vpack.c.b16 %v1436, %v1430
        %v1893 = vpack.c.b16 %v1443, %v1437
        %v1894 = vpack.c.b16 %v1444, %v1438
        %v1895 = vpack.c.b16 %v1445, %v1439
        %v1896 = vpack.c.b16 %v1446, %v1440
        %v1897 = vpack.c.b16 %v1447, %v1441
        %v1898 = vpack.c.b16 %v1448, %v1442
        %v1899 = vpack.c.b16 %v1455, %v1449
        %v1900 = vpack.c.b16 %v1456, %v1450
        %v1901 = vpack.c.b16 %v1457, %v1451
        %v1902 = vpack.c.b16 %v1458, %v1452
        %v1903 = vpack.c.b16 %v1459, %v1453
        %v1904 = vpack.c.b16 %v1460, %v1454
        %v1905 = vpack.c.b16 %v1467, %v1461
        %v1906 = vpack.c.b16 %v1468, %v1462
        %v1907 = vpack.c.b16 %v1469, %v1463
        %v1908 = vpack.c.b16 %v1470, %v1464
        %v1909 = vpack.c.b16 %v1471, %v1465
        %v1910 = vpack.c.b16 %v1472, %v1466
        %v1911 = vpack.c.b16 %v1479, %v1473
        %v1912 = vpack.c.b16 %v1480, %v1474
        %v1913 = vpack.c.b16 %v1481, %v1475
        %v1914 = vpack.c.b16 %v1482, %v1476
        %v1915 = vpack.c.b16 %v1483, %v1477
        %v1916 = vpack.c.b16 %v1484, %v1478
        %v1917 = vpack.c.b16 %v1491, %v1485
        %v1918 = vpack.c.b16 %v1492, %v1486
        %v1919 = vpack.c.b16 %v1493, %v1487
        %v1920 = vpack.c.b16 %v1494, %v1488
        %v1921 = vpack.c.b16 %v1495, %v1489
        %v1922 = vpack.c.b16 %v1496, %v1490
        %v1923 = vpack.c.b16 %v1503, %v1497
        %v1924 = vpack.c.b16 %v1504, %v1498
        %v1925 = vpack.c.b16 %v1505, %v1499
        %v1926 = vpack.c.b16 %v1506, %v1500
        %v1927 = vpack.c.b16 %v1507, %v1501
        %v1928 = vpack.c.b16 %v1508, %v1502
        %v1929 = vpack.c.b16 %v1515, %v1509
        %v1930 = vpack.c.b16 %v1516, %v1510
        %v1931 = vpack.c.b16 %v1517, %v1511
        %v1932 = vpack.c.b16 %v1518, %v1512
        %v1933 = vpack.c.b16 %v1519, %v1513
        %v1934 = vpack.c.b16 %v1520, %v1514
        %v1935 = vpack.c.b16 %v1527, %v1521
        %v1936 = vpack.c.b16 %v1528, %v1522
        %v1937 = vpack.c.b16 %v1529, %v1523
        %v1938 = vpack.c.b16 %v1530, %v1524
        %v1939 = vpack.c.b16 %v1531, %v1525
        %v1940 = vpack.c.b16 %v1532, %v1526
        %v1941 = vpack.c.b16 %v1539, %v1533
        %v1942 = vpack.c.b16 %v1540, %v1534
        %v1943 = vpack.c.b16 %v1541, %v1535
        %v1944 = vpack.c.b16 %v1542, %v1536
        %v1945 = vpack.c.b16 %v1543, %v1537
        %v1946 = vpack.c.b16 %v1544, %v1538
        %v1947 = vpack.c.b16 %v1551, %v1545
        %v1948 = vpack.c.b16 %v1552, %v1546
        %v1949 = vpack.c.b16 %v1553, %v1547
        %v1950 = vpack.c.b16 %v1554, %v1548
        %v1951 = vpack.c.b16 %v1555, %v1549
        %v1952 = vpack.c.b16 %v1556, %v1550
        %v1953 = vpack.c.b16 %v1563, %v1557
        %v1954 = vpack.c.b16 %v1564, %v1558
        %v1955 = vpack.c.b16 %v1565, %v1559
        %v1956 = vpack.c.b16 %v1566, %v1560
        %v1957 = vpack.c.b16 %v1567, %v1561
        %v1958 = vpack.c.b16 %v1568, %v1562
        %v1959 = vpack.c.b16 %v1575, %v1569
        %v1960 = vpack.c.b16 %v1576, %v1570
        %v1961 = vpack.c.b16 %v1577, %v1571
        %v1962 = vpack.c.b16 %v1578, %v1572
        %v1963 = vpack.c.b16 %v1579, %v1573
        %v1964 = vpack.c.b16 %v1580, %v1574
        %v1965 = vpack.c.b16 %v1587, %v1581
        %v1966 = vpack.c.b16 %v1588, %v1582
        %v1967 = vpack.c.b16 %v1589, %v1583
        %v1968 = vpack.c.b16 %v1590, %v1584
        %v1969 = vpack.c.b16 %v1591, %v1585
        %v1970 = vpack.c.b16 %v1592, %v1586
        %v1971 = vpack.c.b16 %v1599, %v1593
        %v1972 = vpack.c.b16 %v1600, %v1594
        %v1973 = vpack.c.b16 %v1601, %v1595
        %v1974 = vpack.c.b16 %v1602, %v1596
        %v1975 = vpack.c.b16 %v1603, %v1597
        %v1976 = vpack.c.b16 %v1604, %v1598
        %v1977 = vpack.c.b16 %v1611, %v1605
        %v1978 = vpack.c.b16 %v1612, %v1606
        %v1979 = vpack.c.b16 %v1613, %v1607
        %v1980 = vpack.c.b16 %v1614, %v1608
        %v1981 = vpack.c.b16 %v1615, %v1609
        %v1982 = vpack.c.b16 %v1616, %v1610
        %v1983 = vpack.c.b16 %v1623, %v1617
        %v1984 = vpack.c.b16 %v1624, %v1618
        %v1985 = vpack.c.b16 %v1625, %v1619
        %v1986 = vpack.c.b16 %v1626, %v1620
        %v1987 = vpack.c.b16 %v1627, %v1621
        %v1988 = vpack.c.b16 %v1628, %v1622
        %v1989 = vpack.c.b16 %v1635, %v1629
        %v1990 = vpack.c.b16 %v1636, %v1630
        %v1991 = vpack.c.b16 %v1637, %v1631
        %v1992 = vpack.c.b16 %v1638, %v1632
        %v1993 = vpack.c.b16 %v1639, %v1633
        %v1994 = vpack.c.b16 %v1640, %v1634
        %v1995 = vpack.c.b16 %v1647, %v1641
        %v1996 = vpack.c.b16 %v1648, %v1642
        %v1997 = vpack.c.b16 %v1649, %v1643
        %v1998 = vpack.c.b16 %v1650, %v1644
        %v1999 = vpack.c.b16 %v1651, %v1645
        %v2000 = vpack.c.b16 %v1652, %v1646
        %v2001 = vpack.c.b16 %v1659, %v1653
        %v2002 = vpack.c.b16 %v1660, %v1654
        %v2003 = vpack.c.b16 %v1661, %v1655
        %v2004 = vpack.c.b16 %v1662, %v1656
        %v2005 = vpack.c.b16 %v1663, %v1657
        %v2006 = vpack.c.b16 %v1664, %v1658
        %v2007 = vpack.c.b16 %v1671, %v1665
        %v2008 = vpack.c.b16 %v1672, %v1666
        %v2009 = vpack.c.b16 %v1673, %v1667
        %v2010 = vpack.c.b16 %v1674, %v1668
        %v2011 = vpack.c.b16 %v1675, %v1669
        %v2012 = vpack.c.b16 %v1676, %v1670
        %v2013 = vpack.c.b16 %v1683, %v1677
        %v2014 = vpack.c.b16 %v1684, %v1678
        %v2015 = vpack.c.b16 %v1685, %v1679
        %v2016 = vpack.c.b16 %v1686, %v1680
        %v2017 = vpack.c.b16 %v1687, %v1681
        %v2018 = vpack.c.b16 %v1688, %v1682
        %v2019 = vpack.c.b16 %v1695, %v1689
        %v2020 = vpack.c.b16 %v1696, %v1690
        %v2021 = vpack.c.b16 %v1697, %v1691
        %v2022 = vpack.c.b16 %v1698, %v1692
        %v2023 = vpack.c.b16 %v1699, %v1693
        %v2024 = vpack.c.b16 %v1700, %v1694
        %v2025 = vpack.c.b16 %v1707, %v1701
        %v2026 = vpack.c.b16 %v1708, %v1702
        %v2027 = vpack.c.b16 %v1709, %v1703
        %v2028 = vpack.c.b16 %v1710, %v1704
        %v2029 = vpack.c.b16 %v1711, %v1705
        %v2030 = vpack.c.b16 %v1712, %v1706
        %v2031 = vpack.c.b16 %v1719, %v1713
        %v2032 = vpack.c.b16 %v1720, %v1714
        %v2033 = vpack.c.b16 %v1721, %v1715
        %v2034 = vpack.c.b16 %v1722, %v1716
        %v2035 = vpack.c.b16 %v1723, %v1717
        %v2036 = vpack.c.b16 %v1724, %v1718
        %v2037 = vpack.c.b16 %v1731, %v1725
        %v2038 = vpack.c.b16 %v1732, %v1726
        %v2039 = vpack.c.b16 %v1733, %v1727
        %v2040 = vpack.c.b16 %v1734, %v1728
        %v2041 = vpack.c.b16 %v1735, %v1729
        %v2042 = vpack.c.b16 %v1736, %v1730
        %v2043 = vpack.c.b16 %v1743, %v1737
        %v2044 = vpack.c.b16 %v1744, %v1738
        %v2045 = vpack.c.b16 %v1745, %v1739
        %v2046 = vpack.c.b16 %v1746, %v1740
        %v2047 = vpack.c.b16 %v1747, %v1741
        %v2048 = vpack.c.b16 %v1748, %v1742
        %v2049 = vpack.c.b16 %v1755, %v1749
        %v2050 = vpack.c.b16 %v1756, %v1750
        %v2051 = vpack.c.b16 %v1757, %v1751
        %v2052 = vpack.c.b16 %v1758, %v1752
        %v2053 = vpack.c.b16 %v1759, %v1753
        %v2054 = vpack.c.b16 %v1760, %v1754
        %v2055 = vpack.c.b16 %v1767, %v1761
        %v2056 = vpack.c.b16 %v1768, %v1762
        %v2057 = vpack.c.b16 %v1769, %v1763
        %v2058 = vpack.c.b16 %v1770, %v1764
        %v2059 = vpack.c.b16 %v1771, %v1765
        %v2060 = vpack.c.b16 %v1772, %v1766
        %2349 = vmatprep.subr.bf16.mxu0 %v1816
        %2350 = vmatpush1.bf16.msra.mxu0 %v1815
        %2351 = vmatprep.subr.bf16.mxu0 %v1810
        %2352 = vmatpush1.bf16.msra.mxu0 %v1809
        %2353 = vmatprep.subr.bf16.mxu0 %v1804
        %2354 = vmatpush1.bf16.msra.mxu0 %v1803
        %2355 = vmatprep.subr.bf16.mxu0 %v1798
        %2356 = vmatpush1.bf16.msra.mxu0 %v1797
        %2357 = vmatprep.subr.bf16.mxu0 %v1792
        %2358 = vmatpush1.bf16.msra.mxu0 %v1791
        %2359 = vmatprep.subr.bf16.mxu0 %v1786
        %2360 = vmatpush1.bf16.msra.mxu0 %v1785
        %2361 = vmatprep.subr.bf16.mxu0 %v1780
        %2362 = vmatpush1.bf16.msra.mxu0 %v1779
        %2363 = vmatprep.subr.bf16.mxu0 %v1774
        %2364 = vmatpush1.bf16.msra.mxu0 %v1773
        %2365 = vmatprep.subr.bf16.mxu0 %v1864
        %2366 = vmatpush2.bf16.msra.mxu0 %v1863
        %2367 = vmatprep.subr.bf16.mxu0 %v1858
        %2368 = vmatpush2.bf16.msra.mxu0 %v1857
        %2369 = vmatprep.subr.bf16.mxu0 %v1852
        %2370 = vmatpush2.bf16.msra.mxu0 %v1851
        %2371 = vmatprep.subr.bf16.mxu0 %v1846
        %2372 = vmatpush2.bf16.msra.mxu0 %v1845
        %2373 = vmatprep.subr.bf16.mxu0 %v1840
        %2374 = vmatpush2.bf16.msra.mxu0 %v1839
        %2375 = vmatprep.subr.bf16.mxu0 %v1834
        %2376 = vmatpush2.bf16.msra.mxu0 %v1833
        %2377 = vmatprep.subr.bf16.mxu0 %v1828
        %2378 = vmatpush2.bf16.msra.mxu0 %v1827
        %2379 = vmatprep.subr.bf16.mxu0 %v1822
        %2380 = vmatpush2.bf16.msra.mxu0 %v1821
        %2381 = vmatprep.mubr.bf16.mxu0 %v814
        %2382 = vmatmul.mubr.bf16.gmra.mxu0 %v813
        %v2383 = vpop.f32.mrf.mxu0
        %v2384 = vadd.f32 %v642, %v2383
        %v2385 = vpop.f32.mrf.mxu0
        %v2386 = vadd.f32 %v646, %v2385
        %v2387 = vpop.f32.mrf.mxu0
        %v2388 = vadd.f32 %v642, %v2387
        %v2389 = vpop.f32.mrf.mxu0
        %v2390 = vadd.f32 %v646, %v2389
        %2391 = vmatprep.mubr.bf16.mxu0 %v820
        %2392 = vmatmul.mubr.bf16.gmra.mxu0 %v819
        %v2393 = vpop.f32.mrf.mxu0
        %v2394 = vadd.f32 %v642, %v2393
        %v2395 = vpop.f32.mrf.mxu0
        %v2396 = vadd.f32 %v646, %v2395
        %v2397 = vpop.f32.mrf.mxu0
        %v2398 = vadd.f32 %v642, %v2397
        %v2399 = vpop.f32.mrf.mxu0
        %v2400 = vadd.f32 %v646, %v2399
        %2401 = vmatprep.mubr.bf16.mxu0 %v826
        %2402 = vmatmul.mubr.bf16.gmra.mxu0 %v825
        %v2403 = vpop.f32.mrf.mxu0
        %v2404 = vadd.f32 %v642, %v2403
        %v2405 = vpop.f32.mrf.mxu0
        %v2406 = vadd.f32 %v646, %v2405
        %v2407 = vpop.f32.mrf.mxu0
        %v2408 = vadd.f32 %v642, %v2407
        %v2409 = vpop.f32.mrf.mxu0
        %v2410 = vadd.f32 %v646, %v2409
        %2411 = vmatprep.mubr.bf16.mxu0 %v832
        %2412 = vmatmul.mubr.bf16.gmra.mxu0 %v831
        %v2413 = vpop.f32.mrf.mxu0
        %v2414 = vadd.f32 %v642, %v2413
        %v2415 = vpop.f32.mrf.mxu0
        %v2416 = vadd.f32 %v646, %v2415
        %v2417 = vpop.f32.mrf.mxu0
        %v2418 = vadd.f32 %v642, %v2417
        %v2419 = vpop.f32.mrf.mxu0
        %v2420 = vadd.f32 %v646, %v2419
        %2421 = vmatprep.mubr.bf16.mxu0 %v838
        %2422 = vmatmul.mubr.bf16.gmra.mxu0 %v837
        %v2423 = vpop.f32.mrf.mxu0
        %v2424 = vadd.f32 %v642, %v2423
        %v2425 = vpop.f32.mrf.mxu0
        %v2426 = vadd.f32 %v646, %v2425
        %v2427 = vpop.f32.mrf.mxu0
        %v2428 = vadd.f32 %v642, %v2427
        %v2429 = vpop.f32.mrf.mxu0
        %v2430 = vadd.f32 %v646, %v2429
        %2431 = vmatprep.mubr.bf16.mxu0 %v844
        %2432 = vmatmul.mubr.bf16.gmra.mxu0 %v843
        %v2433 = vpop.f32.mrf.mxu0
        %v2434 = vadd.f32 %v642, %v2433
        %v2435 = vpop.f32.mrf.mxu0
        %v2436 = vadd.f32 %v646, %v2435
        %v2437 = vpop.f32.mrf.mxu0
        %v2438 = vadd.f32 %v642, %v2437
        %v2439 = vpop.f32.mrf.mxu0
        %v2440 = vadd.f32 %v646, %v2439
        %2441 = vmatprep.mubr.bf16.mxu0 %v850
        %2442 = vmatmul.mubr.bf16.gmra.mxu0 %v849
        %v2443 = vpop.f32.mrf.mxu0
        %v2444 = vadd.f32 %v642, %v2443
        %v2445 = vpop.f32.mrf.mxu0
        %v2446 = vadd.f32 %v646, %v2445
        %v2447 = vpop.f32.mrf.mxu0
        %v2448 = vadd.f32 %v642, %v2447
        %v2449 = vpop.f32.mrf.mxu0
        %v2450 = vadd.f32 %v646, %v2449
        %2451 = vmatprep.mubr.bf16.mxu0 %v856
        %2452 = vmatmul.mubr.bf16.gmra.mxu0 %v855
        %v2453 = vpop.f32.mrf.mxu0
        %v2454 = vadd.f32 %v642, %v2453
        %v2455 = vpop.f32.mrf.mxu0
        %v2456 = vadd.f32 %v646, %v2455
        %v2457 = vpop.f32.mrf.mxu0
        %v2458 = vadd.f32 %v642, %v2457
        %v2459 = vpop.f32.mrf.mxu0
        %v2460 = vadd.f32 %v646, %v2459
        %2461 = vdwg.mxu0
        %2462 = vmatprep.subr.bf16.mxu0 %v1912
        %2463 = vmatpush1.bf16.msra.mxu0 %v1911
        %2464 = vmatprep.subr.bf16.mxu0 %v1906
        %2465 = vmatpush1.bf16.msra.mxu0 %v1905
        %2466 = vmatprep.subr.bf16.mxu0 %v1900
        %2467 = vmatpush1.bf16.msra.mxu0 %v1899
        %2468 = vmatprep.subr.bf16.mxu0 %v1894
        %2469 = vmatpush1.bf16.msra.mxu0 %v1893
        %2470 = vmatprep.subr.bf16.mxu0 %v1888
        %2471 = vmatpush1.bf16.msra.mxu0 %v1887
        %2472 = vmatprep.subr.bf16.mxu0 %v1882
        %2473 = vmatpush1.bf16.msra.mxu0 %v1881
        %2474 = vmatprep.subr.bf16.mxu0 %v1876
        %2475 = vmatpush1.bf16.msra.mxu0 %v1875
        %2476 = vmatprep.subr.bf16.mxu0 %v1870
        %2477 = vmatpush1.bf16.msra.mxu0 %v1869
        %2478 = vmatprep.subr.bf16.mxu0 %v1960
        %2479 = vmatpush2.bf16.msra.mxu0 %v1959
        %2480 = vmatprep.subr.bf16.mxu0 %v1954
        %2481 = vmatpush2.bf16.msra.mxu0 %v1953
        %2482 = vmatprep.subr.bf16.mxu0 %v1948
        %2483 = vmatpush2.bf16.msra.mxu0 %v1947
        %2484 = vmatprep.subr.bf16.mxu0 %v1942
        %2485 = vmatpush2.bf16.msra.mxu0 %v1941
        %2486 = vmatprep.subr.bf16.mxu0 %v1936
        %2487 = vmatpush2.bf16.msra.mxu0 %v1935
        %2488 = vmatprep.subr.bf16.mxu0 %v1930
        %2489 = vmatpush2.bf16.msra.mxu0 %v1929
        %2490 = vmatprep.subr.bf16.mxu0 %v1924
        %2491 = vmatpush2.bf16.msra.mxu0 %v1923
        %2492 = vmatprep.subr.bf16.mxu0 %v1918
        %2493 = vmatpush2.bf16.msra.mxu0 %v1917
        %2494 = vmatprep.mubr.bf16.mxu0 %v816
        %2495 = vmatmul.mubr.bf16.gmra.mxu0 %v815
        %v2496 = vpop.f32.mrf.mxu0
        %v2497 = vadd.f32 %v2384, %v2496
        %v2498 = vpop.f32.mrf.mxu0
        %v2499 = vadd.f32 %v2386, %v2498
        %v2500 = vpop.f32.mrf.mxu0
        %v2501 = vadd.f32 %v2388, %v2500
        %v2502 = vpop.f32.mrf.mxu0
        %v2503 = vadd.f32 %v2390, %v2502
        %2504 = vmatprep.mubr.bf16.mxu0 %v822
        %2505 = vmatmul.mubr.bf16.gmra.mxu0 %v821
        %v2506 = vpop.f32.mrf.mxu0
        %v2507 = vadd.f32 %v2394, %v2506
        %v2508 = vpop.f32.mrf.mxu0
        %v2509 = vadd.f32 %v2396, %v2508
        %v2510 = vpop.f32.mrf.mxu0
        %v2511 = vadd.f32 %v2398, %v2510
        %v2512 = vpop.f32.mrf.mxu0
        %v2513 = vadd.f32 %v2400, %v2512
        %2514 = vmatprep.mubr.bf16.mxu0 %v828
        %2515 = vmatmul.mubr.bf16.gmra.mxu0 %v827
        %v2516 = vpop.f32.mrf.mxu0
        %v2517 = vadd.f32 %v2404, %v2516
        %v2518 = vpop.f32.mrf.mxu0
        %v2519 = vadd.f32 %v2406, %v2518
        %v2520 = vpop.f32.mrf.mxu0
        %v2521 = vadd.f32 %v2408, %v2520
        %v2522 = vpop.f32.mrf.mxu0
        %v2523 = vadd.f32 %v2410, %v2522
        %2524 = vmatprep.mubr.bf16.mxu0 %v834
        %2525 = vmatmul.mubr.bf16.gmra.mxu0 %v833
        %v2526 = vpop.f32.mrf.mxu0
        %v2527 = vadd.f32 %v2414, %v2526
        %v2528 = vpop.f32.mrf.mxu0
        %v2529 = vadd.f32 %v2416, %v2528
        %v2530 = vpop.f32.mrf.mxu0
        %v2531 = vadd.f32 %v2418, %v2530
        %v2532 = vpop.f32.mrf.mxu0
        %v2533 = vadd.f32 %v2420, %v2532
        %2534 = vmatprep.mubr.bf16.mxu0 %v840
        %2535 = vmatmul.mubr.bf16.gmra.mxu0 %v839
        %v2536 = vpop.f32.mrf.mxu0
        %v2537 = vadd.f32 %v2424, %v2536
        %v2538 = vpop.f32.mrf.mxu0
        %v2539 = vadd.f32 %v2426, %v2538
        %v2540 = vpop.f32.mrf.mxu0
        %v2541 = vadd.f32 %v2428, %v2540
        %v2542 = vpop.f32.mrf.mxu0
        %v2543 = vadd.f32 %v2430, %v2542
        %2544 = vmatprep.mubr.bf16.mxu0 %v846
        %2545 = vmatmul.mubr.bf16.gmra.mxu0 %v845
        %v2546 = vpop.f32.mrf.mxu0
        %v2547 = vadd.f32 %v2434, %v2546
        %v2548 = vpop.f32.mrf.mxu0
        %v2549 = vadd.f32 %v2436, %v2548
        %v2550 = vpop.f32.mrf.mxu0
        %v2551 = vadd.f32 %v2438, %v2550
        %v2552 = vpop.f32.mrf.mxu0
        %v2553 = vadd.f32 %v2440, %v2552
        %2554 = vmatprep.mubr.bf16.mxu0 %v852
        %2555 = vmatmul.mubr.bf16.gmra.mxu0 %v851
        %v2556 = vpop.f32.mrf.mxu0
        %v2557 = vadd.f32 %v2444, %v2556
        %v2558 = vpop.f32.mrf.mxu0
        %v2559 = vadd.f32 %v2446, %v2558
        %v2560 = vpop.f32.mrf.mxu0
        %v2561 = vadd.f32 %v2448, %v2560
        %v2562 = vpop.f32.mrf.mxu0
        %v2563 = vadd.f32 %v2450, %v2562
        %2564 = vmatprep.mubr.bf16.mxu0 %v858
        %2565 = vmatmul.mubr.bf16.gmra.mxu0 %v857
        %v2566 = vpop.f32.mrf.mxu0
        %v2567 = vadd.f32 %v2454, %v2566
        %v2568 = vpop.f32.mrf.mxu0
        %v2569 = vadd.f32 %v2456, %v2568
        %v2570 = vpop.f32.mrf.mxu0
        %v2571 = vadd.f32 %v2458, %v2570
        %v2572 = vpop.f32.mrf.mxu0
        %v2573 = vadd.f32 %v2460, %v2572
        %2574 = vdwg.mxu0
        %2575 = vmatprep.subr.bf16.mxu0 %v2008
        %2576 = vmatpush1.bf16.msra.mxu0 %v2007
        %2577 = vmatprep.subr.bf16.mxu0 %v2002
        %2578 = vmatpush1.bf16.msra.mxu0 %v2001
        %2579 = vmatprep.subr.bf16.mxu0 %v1996
        %2580 = vmatpush1.bf16.msra.mxu0 %v1995
        %2581 = vmatprep.subr.bf16.mxu0 %v1990
        %2582 = vmatpush1.bf16.msra.mxu0 %v1989
        %2583 = vmatprep.subr.bf16.mxu0 %v1984
        %2584 = vmatpush1.bf16.msra.mxu0 %v1983
        %2585 = vmatprep.subr.bf16.mxu0 %v1978
        %2586 = vmatpush1.bf16.msra.mxu0 %v1977
        %2587 = vmatprep.subr.bf16.mxu0 %v1972
        %2588 = vmatpush1.bf16.msra.mxu0 %v1971
        %2589 = vmatprep.subr.bf16.mxu0 %v1966
        %2590 = vmatpush1.bf16.msra.mxu0 %v1965
        %2591 = vmatprep.subr.bf16.mxu0 %v2056
        %2592 = vmatpush2.bf16.msra.mxu0 %v2055
        %2593 = vmatprep.subr.bf16.mxu0 %v2050
        %2594 = vmatpush2.bf16.msra.mxu0 %v2049
        %2595 = vmatprep.subr.bf16.mxu0 %v2044
        %2596 = vmatpush2.bf16.msra.mxu0 %v2043
        %2597 = vmatprep.subr.bf16.mxu0 %v2038
        %2598 = vmatpush2.bf16.msra.mxu0 %v2037
        %2599 = vmatprep.subr.bf16.mxu0 %v2032
        %2600 = vmatpush2.bf16.msra.mxu0 %v2031
        %2601 = vmatprep.subr.bf16.mxu0 %v2026
        %2602 = vmatpush2.bf16.msra.mxu0 %v2025
        %2603 = vmatprep.subr.bf16.mxu0 %v2020
        %2604 = vmatpush2.bf16.msra.mxu0 %v2019
        %2605 = vmatprep.subr.bf16.mxu0 %v2014
        %2606 = vmatpush2.bf16.msra.mxu0 %v2013
        %2607 = vmatprep.mubr.bf16.mxu0 %v818
        %2608 = vmatmul.mubr.bf16.gmra.mxu0 %v817
        %v2609 = vpop.f32.mrf.mxu0
        %v2610 = vadd.f32 %v2497, %v2609
        %v2611 = vpop.f32.mrf.mxu0
        %v2612 = vadd.f32 %v2499, %v2611
        %v2613 = vpop.f32.mrf.mxu0
        %v2614 = vadd.f32 %v2501, %v2613
        %v2615 = vpop.f32.mrf.mxu0
        %v2616 = vadd.f32 %v2503, %v2615
        %2617 = vmatprep.mubr.bf16.mxu0 %v824
        %2618 = vmatmul.mubr.bf16.gmra.mxu0 %v823
        %v2619 = vpop.f32.mrf.mxu0
        %v2620 = vadd.f32 %v2507, %v2619
        %v2621 = vpop.f32.mrf.mxu0
        %v2622 = vadd.f32 %v2509, %v2621
        %v2623 = vpop.f32.mrf.mxu0
        %v2624 = vadd.f32 %v2511, %v2623
        %v2625 = vpop.f32.mrf.mxu0
        %v2626 = vadd.f32 %v2513, %v2625
        %2627 = vmatprep.mubr.bf16.mxu0 %v830
        %2628 = vmatmul.mubr.bf16.gmra.mxu0 %v829
        %v2629 = vpop.f32.mrf.mxu0
        %v2630 = vadd.f32 %v2517, %v2629
        %v2631 = vpop.f32.mrf.mxu0
        %v2632 = vadd.f32 %v2519, %v2631
        %v2633 = vpop.f32.mrf.mxu0
        %v2634 = vadd.f32 %v2521, %v2633
        %v2635 = vpop.f32.mrf.mxu0
        %v2636 = vadd.f32 %v2523, %v2635
        %2637 = vmatprep.mubr.bf16.mxu0 %v836
        %2638 = vmatmul.mubr.bf16.gmra.mxu0 %v835
        %v2639 = vpop.f32.mrf.mxu0
        %v2640 = vadd.f32 %v2527, %v2639
        %v2641 = vpop.f32.mrf.mxu0
        %v2642 = vadd.f32 %v2529, %v2641
        %v2643 = vpop.f32.mrf.mxu0
        %v2644 = vadd.f32 %v2531, %v2643
        %v2645 = vpop.f32.mrf.mxu0
        %v2646 = vadd.f32 %v2533, %v2645
        %2647 = vmatprep.mubr.bf16.mxu0 %v842
        %2648 = vmatmul.mubr.bf16.gmra.mxu0 %v841
        %v2649 = vpop.f32.mrf.mxu0
        %v2650 = vadd.f32 %v2537, %v2649
        %v2651 = vpop.f32.mrf.mxu0
        %v2652 = vadd.f32 %v2539, %v2651
        %v2653 = vpop.f32.mrf.mxu0
        %v2654 = vadd.f32 %v2541, %v2653
        %v2655 = vpop.f32.mrf.mxu0
        %v2656 = vadd.f32 %v2543, %v2655
        %2657 = vmatprep.mubr.bf16.mxu0 %v848
        %2658 = vmatmul.mubr.bf16.gmra.mxu0 %v847
        %v2659 = vpop.f32.mrf.mxu0
        %v2660 = vadd.f32 %v2547, %v2659
        %v2661 = vpop.f32.mrf.mxu0
        %v2662 = vadd.f32 %v2549, %v2661
        %v2663 = vpop.f32.mrf.mxu0
        %v2664 = vadd.f32 %v2551, %v2663
        %v2665 = vpop.f32.mrf.mxu0
        %v2666 = vadd.f32 %v2553, %v2665
        %2667 = vmatprep.mubr.bf16.mxu0 %v854
        %2668 = vmatmul.mubr.bf16.gmra.mxu0 %v853
        %v2669 = vpop.f32.mrf.mxu0
        %v2670 = vadd.f32 %v2557, %v2669
        %v2671 = vpop.f32.mrf.mxu0
        %v2672 = vadd.f32 %v2559, %v2671
        %v2673 = vpop.f32.mrf.mxu0
        %v2674 = vadd.f32 %v2561, %v2673
        %v2675 = vpop.f32.mrf.mxu0
        %v2676 = vadd.f32 %v2563, %v2675
        %2677 = vmatprep.mubr.bf16.mxu0 %v860
        %2678 = vmatmul.mubr.bf16.gmra.mxu0 %v859
        %v2679 = vpop.f32.mrf.mxu0
        %v2680 = vadd.f32 %v2567, %v2679
        %v2681 = vpop.f32.mrf.mxu0
        %v2682 = vadd.f32 %v2569, %v2681
        %v2683 = vpop.f32.mrf.mxu0
        %v2684 = vadd.f32 %v2571, %v2683
        %v2685 = vpop.f32.mrf.mxu0
        %v2686 = vadd.f32 %v2573, %v2685
        %2687 = vdwg.mxu0
        %2688 = vmatprep.subr.bf16.mxu0 %v1818
        %2689 = vmatpush1.bf16.msra.mxu0 %v1817
        %2690 = vmatprep.subr.bf16.mxu0 %v1812
        %2691 = vmatpush1.bf16.msra.mxu0 %v1811
        %2692 = vmatprep.subr.bf16.mxu0 %v1806
        %2693 = vmatpush1.bf16.msra.mxu0 %v1805
        %2694 = vmatprep.subr.bf16.mxu0 %v1800
        %2695 = vmatpush1.bf16.msra.mxu0 %v1799
        %2696 = vmatprep.subr.bf16.mxu0 %v1794
        %2697 = vmatpush1.bf16.msra.mxu0 %v1793
        %2698 = vmatprep.subr.bf16.mxu0 %v1788
        %2699 = vmatpush1.bf16.msra.mxu0 %v1787
        %2700 = vmatprep.subr.bf16.mxu0 %v1782
        %2701 = vmatpush1.bf16.msra.mxu0 %v1781
        %2702 = vmatprep.subr.bf16.mxu0 %v1776
        %2703 = vmatpush1.bf16.msra.mxu0 %v1775
        %2704 = vmatprep.subr.bf16.mxu0 %v1866
        %2705 = vmatpush2.bf16.msra.mxu0 %v1865
        %2706 = vmatprep.subr.bf16.mxu0 %v1860
        %2707 = vmatpush2.bf16.msra.mxu0 %v1859
        %2708 = vmatprep.subr.bf16.mxu0 %v1854
        %2709 = vmatpush2.bf16.msra.mxu0 %v1853
        %2710 = vmatprep.subr.bf16.mxu0 %v1848
        %2711 = vmatpush2.bf16.msra.mxu0 %v1847
        %2712 = vmatprep.subr.bf16.mxu0 %v1842
        %2713 = vmatpush2.bf16.msra.mxu0 %v1841
        %2714 = vmatprep.subr.bf16.mxu0 %v1836
        %2715 = vmatpush2.bf16.msra.mxu0 %v1835
        %2716 = vmatprep.subr.bf16.mxu0 %v1830
        %2717 = vmatpush2.bf16.msra.mxu0 %v1829
        %2718 = vmatprep.subr.bf16.mxu0 %v1824
        %2719 = vmatpush2.bf16.msra.mxu0 %v1823
        %2720 = vmatprep.mubr.bf16.mxu0 %v814
        %2721 = vmatmul.mubr.bf16.gmra.mxu0 %v813
        %v2722 = vpop.f32.mrf.mxu0
        %v2723 = vadd.f32 %v650, %v2722
        %v2724 = vpop.f32.mrf.mxu0
        %v2725 = vadd.f32 %v654, %v2724
        %v2726 = vpop.f32.mrf.mxu0
        %v2727 = vadd.f32 %v650, %v2726
        %v2728 = vpop.f32.mrf.mxu0
        %v2729 = vadd.f32 %v654, %v2728
        %2730 = vmatprep.mubr.bf16.mxu0 %v820
        %2731 = vmatmul.mubr.bf16.gmra.mxu0 %v819
        %v2732 = vpop.f32.mrf.mxu0
        %v2733 = vadd.f32 %v650, %v2732
        %v2734 = vpop.f32.mrf.mxu0
        %v2735 = vadd.f32 %v654, %v2734
        %v2736 = vpop.f32.mrf.mxu0
        %v2737 = vadd.f32 %v650, %v2736
        %v2738 = vpop.f32.mrf.mxu0
        %v2739 = vadd.f32 %v654, %v2738
        %2740 = vmatprep.mubr.bf16.mxu0 %v826
        %2741 = vmatmul.mubr.bf16.gmra.mxu0 %v825
        %v2742 = vpop.f32.mrf.mxu0
        %v2743 = vadd.f32 %v650, %v2742
        %v2744 = vpop.f32.mrf.mxu0
        %v2745 = vadd.f32 %v654, %v2744
        %v2746 = vpop.f32.mrf.mxu0
        %v2747 = vadd.f32 %v650, %v2746
        %v2748 = vpop.f32.mrf.mxu0
        %v2749 = vadd.f32 %v654, %v2748
        %2750 = vmatprep.mubr.bf16.mxu0 %v832
        %2751 = vmatmul.mubr.bf16.gmra.mxu0 %v831
        %v2752 = vpop.f32.mrf.mxu0
        %v2753 = vadd.f32 %v650, %v2752
        %v2754 = vpop.f32.mrf.mxu0
        %v2755 = vadd.f32 %v654, %v2754
        %v2756 = vpop.f32.mrf.mxu0
        %v2757 = vadd.f32 %v650, %v2756
        %v2758 = vpop.f32.mrf.mxu0
        %v2759 = vadd.f32 %v654, %v2758
        %2760 = vmatprep.mubr.bf16.mxu0 %v838
        %2761 = vmatmul.mubr.bf16.gmra.mxu0 %v837
        %v2762 = vpop.f32.mrf.mxu0
        %v2763 = vadd.f32 %v650, %v2762
        %v2764 = vpop.f32.mrf.mxu0
        %v2765 = vadd.f32 %v654, %v2764
        %v2766 = vpop.f32.mrf.mxu0
        %v2767 = vadd.f32 %v650, %v2766
        %v2768 = vpop.f32.mrf.mxu0
        %v2769 = vadd.f32 %v654, %v2768
        %2770 = vmatprep.mubr.bf16.mxu0 %v844
        %2771 = vmatmul.mubr.bf16.gmra.mxu0 %v843
        %v2772 = vpop.f32.mrf.mxu0
        %v2773 = vadd.f32 %v650, %v2772
        %v2774 = vpop.f32.mrf.mxu0
        %v2775 = vadd.f32 %v654, %v2774
        %v2776 = vpop.f32.mrf.mxu0
        %v2777 = vadd.f32 %v650, %v2776
        %v2778 = vpop.f32.mrf.mxu0
        %v2779 = vadd.f32 %v654, %v2778
        %2780 = vmatprep.mubr.bf16.mxu0 %v850
        %2781 = vmatmul.mubr.bf16.gmra.mxu0 %v849
        %v2782 = vpop.f32.mrf.mxu0
        %v2783 = vadd.f32 %v650, %v2782
        %v2784 = vpop.f32.mrf.mxu0
        %v2785 = vadd.f32 %v654, %v2784
        %v2786 = vpop.f32.mrf.mxu0
        %v2787 = vadd.f32 %v650, %v2786
        %v2788 = vpop.f32.mrf.mxu0
        %v2789 = vadd.f32 %v654, %v2788
        %2790 = vmatprep.mubr.bf16.mxu0 %v856
        %2791 = vmatmul.mubr.bf16.gmra.mxu0 %v855
        %v2792 = vpop.f32.mrf.mxu0
        %v2793 = vadd.f32 %v650, %v2792
        %v2794 = vpop.f32.mrf.mxu0
        %v2795 = vadd.f32 %v654, %v2794
        %v2796 = vpop.f32.mrf.mxu0
        %v2797 = vadd.f32 %v650, %v2796
        %v2798 = vpop.f32.mrf.mxu0
        %v2799 = vadd.f32 %v654, %v2798
        %2800 = vdwg.mxu0
        %2801 = vmatprep.subr.bf16.mxu0 %v1914
        %2802 = vmatpush1.bf16.msra.mxu0 %v1913
        %2803 = vmatprep.subr.bf16.mxu0 %v1908
        %2804 = vmatpush1.bf16.msra.mxu0 %v1907
        %2805 = vmatprep.subr.bf16.mxu0 %v1902
        %2806 = vmatpush1.bf16.msra.mxu0 %v1901
        %2807 = vmatprep.subr.bf16.mxu0 %v1896
        %2808 = vmatpush1.bf16.msra.mxu0 %v1895
        %2809 = vmatprep.subr.bf16.mxu0 %v1890
        %2810 = vmatpush1.bf16.msra.mxu0 %v1889
        %2811 = vmatprep.subr.bf16.mxu0 %v1884
        %2812 = vmatpush1.bf16.msra.mxu0 %v1883
        %2813 = vmatprep.subr.bf16.mxu0 %v1878
        %2814 = vmatpush1.bf16.msra.mxu0 %v1877
        %2815 = vmatprep.subr.bf16.mxu0 %v1872
        %2816 = vmatpush1.bf16.msra.mxu0 %v1871
        %2817 = vmatprep.subr.bf16.mxu0 %v1962
        %2818 = vmatpush2.bf16.msra.mxu0 %v1961
        %2819 = vmatprep.subr.bf16.mxu0 %v1956
        %2820 = vmatpush2.bf16.msra.mxu0 %v1955
        %2821 = vmatprep.subr.bf16.mxu0 %v1950
        %2822 = vmatpush2.bf16.msra.mxu0 %v1949
        %2823 = vmatprep.subr.bf16.mxu0 %v1944
        %2824 = vmatpush2.bf16.msra.mxu0 %v1943
        %2825 = vmatprep.subr.bf16.mxu0 %v1938
        %2826 = vmatpush2.bf16.msra.mxu0 %v1937
        %2827 = vmatprep.subr.bf16.mxu0 %v1932
        %2828 = vmatpush2.bf16.msra.mxu0 %v1931
        %2829 = vmatprep.subr.bf16.mxu0 %v1926
        %2830 = vmatpush2.bf16.msra.mxu0 %v1925
        %2831 = vmatprep.subr.bf16.mxu0 %v1920
        %2832 = vmatpush2.bf16.msra.mxu0 %v1919
        %2833 = vmatprep.mubr.bf16.mxu0 %v816
        %2834 = vmatmul.mubr.bf16.gmra.mxu0 %v815
        %v2835 = vpop.f32.mrf.mxu0
        %v2836 = vadd.f32 %v2723, %v2835
        %v2837 = vpop.f32.mrf.mxu0
        %v2838 = vadd.f32 %v2725, %v2837
        %v2839 = vpop.f32.mrf.mxu0
        %v2840 = vadd.f32 %v2727, %v2839
        %v2841 = vpop.f32.mrf.mxu0
        %v2842 = vadd.f32 %v2729, %v2841
        %2843 = vmatprep.mubr.bf16.mxu0 %v822
        %2844 = vmatmul.mubr.bf16.gmra.mxu0 %v821
        %v2845 = vpop.f32.mrf.mxu0
        %v2846 = vadd.f32 %v2733, %v2845
        %v2847 = vpop.f32.mrf.mxu0
        %v2848 = vadd.f32 %v2735, %v2847
        %v2849 = vpop.f32.mrf.mxu0
        %v2850 = vadd.f32 %v2737, %v2849
        %v2851 = vpop.f32.mrf.mxu0
        %v2852 = vadd.f32 %v2739, %v2851
        %2853 = vmatprep.mubr.bf16.mxu0 %v828
        %2854 = vmatmul.mubr.bf16.gmra.mxu0 %v827
        %v2855 = vpop.f32.mrf.mxu0
        %v2856 = vadd.f32 %v2743, %v2855
        %v2857 = vpop.f32.mrf.mxu0
        %v2858 = vadd.f32 %v2745, %v2857
        %v2859 = vpop.f32.mrf.mxu0
        %v2860 = vadd.f32 %v2747, %v2859
        %v2861 = vpop.f32.mrf.mxu0
        %v2862 = vadd.f32 %v2749, %v2861
        %2863 = vmatprep.mubr.bf16.mxu0 %v834
        %2864 = vmatmul.mubr.bf16.gmra.mxu0 %v833
        %v2865 = vpop.f32.mrf.mxu0
        %v2866 = vadd.f32 %v2753, %v2865
        %v2867 = vpop.f32.mrf.mxu0
        %v2868 = vadd.f32 %v2755, %v2867
        %v2869 = vpop.f32.mrf.mxu0
        %v2870 = vadd.f32 %v2757, %v2869
        %v2871 = vpop.f32.mrf.mxu0
        %v2872 = vadd.f32 %v2759, %v2871
        %2873 = vmatprep.mubr.bf16.mxu0 %v840
        %2874 = vmatmul.mubr.bf16.gmra.mxu0 %v839
        %v2875 = vpop.f32.mrf.mxu0
        %v2876 = vadd.f32 %v2763, %v2875
        %v2877 = vpop.f32.mrf.mxu0
        %v2878 = vadd.f32 %v2765, %v2877
        %v2879 = vpop.f32.mrf.mxu0
        %v2880 = vadd.f32 %v2767, %v2879
        %v2881 = vpop.f32.mrf.mxu0
        %v2882 = vadd.f32 %v2769, %v2881
        %2883 = vmatprep.mubr.bf16.mxu0 %v846
        %2884 = vmatmul.mubr.bf16.gmra.mxu0 %v845
        %v2885 = vpop.f32.mrf.mxu0
        %v2886 = vadd.f32 %v2773, %v2885
        %v2887 = vpop.f32.mrf.mxu0
        %v2888 = vadd.f32 %v2775, %v2887
        %v2889 = vpop.f32.mrf.mxu0
        %v2890 = vadd.f32 %v2777, %v2889
        %v2891 = vpop.f32.mrf.mxu0
        %v2892 = vadd.f32 %v2779, %v2891
        %2893 = vmatprep.mubr.bf16.mxu0 %v852
        %2894 = vmatmul.mubr.bf16.gmra.mxu0 %v851
        %v2895 = vpop.f32.mrf.mxu0
        %v2896 = vadd.f32 %v2783, %v2895
        %v2897 = vpop.f32.mrf.mxu0
        %v2898 = vadd.f32 %v2785, %v2897
        %v2899 = vpop.f32.mrf.mxu0
        %v2900 = vadd.f32 %v2787, %v2899
        %v2901 = vpop.f32.mrf.mxu0
        %v2902 = vadd.f32 %v2789, %v2901
        %2903 = vmatprep.mubr.bf16.mxu0 %v858
        %2904 = vmatmul.mubr.bf16.gmra.mxu0 %v857
        %v2905 = vpop.f32.mrf.mxu0
        %v2906 = vadd.f32 %v2793, %v2905
        %v2907 = vpop.f32.mrf.mxu0
        %v2908 = vadd.f32 %v2795, %v2907
        %v2909 = vpop.f32.mrf.mxu0
        %v2910 = vadd.f32 %v2797, %v2909
        %v2911 = vpop.f32.mrf.mxu0
        %v2912 = vadd.f32 %v2799, %v2911
        %2913 = vdwg.mxu0
        %2914 = vmatprep.subr.bf16.mxu0 %v2010
        %2915 = vmatpush1.bf16.msra.mxu0 %v2009
        %2916 = vmatprep.subr.bf16.mxu0 %v2004
        %2917 = vmatpush1.bf16.msra.mxu0 %v2003
        %2918 = vmatprep.subr.bf16.mxu0 %v1998
        %2919 = vmatpush1.bf16.msra.mxu0 %v1997
        %2920 = vmatprep.subr.bf16.mxu0 %v1992
        %2921 = vmatpush1.bf16.msra.mxu0 %v1991
        %2922 = vmatprep.subr.bf16.mxu0 %v1986
        %2923 = vmatpush1.bf16.msra.mxu0 %v1985
        %2924 = vmatprep.subr.bf16.mxu0 %v1980
        %2925 = vmatpush1.bf16.msra.mxu0 %v1979
        %2926 = vmatprep.subr.bf16.mxu0 %v1974
        %2927 = vmatpush1.bf16.msra.mxu0 %v1973
        %2928 = vmatprep.subr.bf16.mxu0 %v1968
        %2929 = vmatpush1.bf16.msra.mxu0 %v1967
        %2930 = vmatprep.subr.bf16.mxu0 %v2058
        %2931 = vmatpush2.bf16.msra.mxu0 %v2057
        %2932 = vmatprep.subr.bf16.mxu0 %v2052
        %2933 = vmatpush2.bf16.msra.mxu0 %v2051
        %2934 = vmatprep.subr.bf16.mxu0 %v2046
        %2935 = vmatpush2.bf16.msra.mxu0 %v2045
        %2936 = vmatprep.subr.bf16.mxu0 %v2040
        %2937 = vmatpush2.bf16.msra.mxu0 %v2039
        %2938 = vmatprep.subr.bf16.mxu0 %v2034
        %2939 = vmatpush2.bf16.msra.mxu0 %v2033
        %2940 = vmatprep.subr.bf16.mxu0 %v2028
        %2941 = vmatpush2.bf16.msra.mxu0 %v2027
        %2942 = vmatprep.subr.bf16.mxu0 %v2022
        %2943 = vmatpush2.bf16.msra.mxu0 %v2021
        %2944 = vmatprep.subr.bf16.mxu0 %v2016
        %2945 = vmatpush2.bf16.msra.mxu0 %v2015
        %2946 = vmatprep.mubr.bf16.mxu0 %v818
        %2947 = vmatmul.mubr.bf16.gmra.mxu0 %v817
        %v2948 = vpop.f32.mrf.mxu0
        %v2949 = vadd.f32 %v2836, %v2948
        %v2950 = vpop.f32.mrf.mxu0
        %v2951 = vadd.f32 %v2838, %v2950
        %v2952 = vpop.f32.mrf.mxu0
        %v2953 = vadd.f32 %v2840, %v2952
        %v2954 = vpop.f32.mrf.mxu0
        %v2955 = vadd.f32 %v2842, %v2954
        %2956 = vmatprep.mubr.bf16.mxu0 %v824
        %2957 = vmatmul.mubr.bf16.gmra.mxu0 %v823
        %v2958 = vpop.f32.mrf.mxu0
        %v2959 = vadd.f32 %v2846, %v2958
        %v2960 = vpop.f32.mrf.mxu0
        %v2961 = vadd.f32 %v2848, %v2960
        %v2962 = vpop.f32.mrf.mxu0
        %v2963 = vadd.f32 %v2850, %v2962
        %v2964 = vpop.f32.mrf.mxu0
        %v2965 = vadd.f32 %v2852, %v2964
        %2966 = vmatprep.mubr.bf16.mxu0 %v830
        %2967 = vmatmul.mubr.bf16.gmra.mxu0 %v829
        %v2968 = vpop.f32.mrf.mxu0
        %v2969 = vadd.f32 %v2856, %v2968
        %v2970 = vpop.f32.mrf.mxu0
        %v2971 = vadd.f32 %v2858, %v2970
        %v2972 = vpop.f32.mrf.mxu0
        %v2973 = vadd.f32 %v2860, %v2972
        %v2974 = vpop.f32.mrf.mxu0
        %v2975 = vadd.f32 %v2862, %v2974
        %2976 = vmatprep.mubr.bf16.mxu0 %v836
        %2977 = vmatmul.mubr.bf16.gmra.mxu0 %v835
        %v2978 = vpop.f32.mrf.mxu0
        %v2979 = vadd.f32 %v2866, %v2978
        %v2980 = vpop.f32.mrf.mxu0
        %v2981 = vadd.f32 %v2868, %v2980
        %v2982 = vpop.f32.mrf.mxu0
        %v2983 = vadd.f32 %v2870, %v2982
        %v2984 = vpop.f32.mrf.mxu0
        %v2985 = vadd.f32 %v2872, %v2984
        %2986 = vmatprep.mubr.bf16.mxu0 %v842
        %2987 = vmatmul.mubr.bf16.gmra.mxu0 %v841
        %v2988 = vpop.f32.mrf.mxu0
        %v2989 = vadd.f32 %v2876, %v2988
        %v2990 = vpop.f32.mrf.mxu0
        %v2991 = vadd.f32 %v2878, %v2990
        %v2992 = vpop.f32.mrf.mxu0
        %v2993 = vadd.f32 %v2880, %v2992
        %v2994 = vpop.f32.mrf.mxu0
        %v2995 = vadd.f32 %v2882, %v2994
        %2996 = vmatprep.mubr.bf16.mxu0 %v848
        %2997 = vmatmul.mubr.bf16.gmra.mxu0 %v847
        %v2998 = vpop.f32.mrf.mxu0
        %v2999 = vadd.f32 %v2886, %v2998
        %v3000 = vpop.f32.mrf.mxu0
        %v3001 = vadd.f32 %v2888, %v3000
        %v3002 = vpop.f32.mrf.mxu0
        %v3003 = vadd.f32 %v2890, %v3002
        %v3004 = vpop.f32.mrf.mxu0
        %v3005 = vadd.f32 %v2892, %v3004
        %3006 = vmatprep.mubr.bf16.mxu0 %v854
        %3007 = vmatmul.mubr.bf16.gmra.mxu0 %v853
        %v3008 = vpop.f32.mrf.mxu0
        %v3009 = vadd.f32 %v2896, %v3008
        %v3010 = vpop.f32.mrf.mxu0
        %v3011 = vadd.f32 %v2898, %v3010
        %v3012 = vpop.f32.mrf.mxu0
        %v3013 = vadd.f32 %v2900, %v3012
        %v3014 = vpop.f32.mrf.mxu0
        %v3015 = vadd.f32 %v2902, %v3014
        %3016 = vmatprep.mubr.bf16.mxu0 %v860
        %3017 = vmatmul.mubr.bf16.gmra.mxu0 %v859
        %v3018 = vpop.f32.mrf.mxu0
        %v3019 = vadd.f32 %v2906, %v3018
        %v3020 = vpop.f32.mrf.mxu0
        %v3021 = vadd.f32 %v2908, %v3020
        %v3022 = vpop.f32.mrf.mxu0
        %v3023 = vadd.f32 %v2910, %v3022
        %v3024 = vpop.f32.mrf.mxu0
        %v3025 = vadd.f32 %v2912, %v3024
        %3026 = vdwg.mxu0
        %3027 = vmatprep.subr.bf16.mxu0 %v1820
        %3028 = vmatpush1.bf16.msra.mxu0 %v1819
        %3029 = vmatprep.subr.bf16.mxu0 %v1814
        %3030 = vmatpush1.bf16.msra.mxu0 %v1813
        %3031 = vmatprep.subr.bf16.mxu0 %v1808
        %3032 = vmatpush1.bf16.msra.mxu0 %v1807
        %3033 = vmatprep.subr.bf16.mxu0 %v1802
        %3034 = vmatpush1.bf16.msra.mxu0 %v1801
        %3035 = vmatprep.subr.bf16.mxu0 %v1796
        %3036 = vmatpush1.bf16.msra.mxu0 %v1795
        %3037 = vmatprep.subr.bf16.mxu0 %v1790
        %3038 = vmatpush1.bf16.msra.mxu0 %v1789
        %3039 = vmatprep.subr.bf16.mxu0 %v1784
        %3040 = vmatpush1.bf16.msra.mxu0 %v1783
        %3041 = vmatprep.subr.bf16.mxu0 %v1778
        %3042 = vmatpush1.bf16.msra.mxu0 %v1777
        %3043 = vmatprep.subr.bf16.mxu0 %v1868
        %3044 = vmatpush2.bf16.msra.mxu0 %v1867
        %3045 = vmatprep.subr.bf16.mxu0 %v1862
        %3046 = vmatpush2.bf16.msra.mxu0 %v1861
        %3047 = vmatprep.subr.bf16.mxu0 %v1856
        %3048 = vmatpush2.bf16.msra.mxu0 %v1855
        %3049 = vmatprep.subr.bf16.mxu0 %v1850
        %3050 = vmatpush2.bf16.msra.mxu0 %v1849
        %3051 = vmatprep.subr.bf16.mxu0 %v1844
        %3052 = vmatpush2.bf16.msra.mxu0 %v1843
        %3053 = vmatprep.subr.bf16.mxu0 %v1838
        %3054 = vmatpush2.bf16.msra.mxu0 %v1837
        %3055 = vmatprep.subr.bf16.mxu0 %v1832
        %3056 = vmatpush2.bf16.msra.mxu0 %v1831
        %3057 = vmatprep.subr.bf16.mxu0 %v1826
        %3058 = vmatpush2.bf16.msra.mxu0 %v1825
        %3059 = vmatprep.mubr.bf16.mxu0 %v814
        %3060 = vmatmul.mubr.bf16.gmra.mxu0 %v813
        %v3061 = vpop.f32.mrf.mxu0
        %v3062 = vadd.f32 %v658, %v3061
        %v3063 = vpop.f32.mrf.mxu0
        %v3064 = vadd.f32 %v662, %v3063
        %v3065 = vpop.f32.mrf.mxu0
        %v3066 = vadd.f32 %v658, %v3065
        %v3067 = vpop.f32.mrf.mxu0
        %v3068 = vadd.f32 %v662, %v3067
        %3069 = vmatprep.mubr.bf16.mxu0 %v820
        %3070 = vmatmul.mubr.bf16.gmra.mxu0 %v819
        %v3071 = vpop.f32.mrf.mxu0
        %v3072 = vadd.f32 %v658, %v3071
        %v3073 = vpop.f32.mrf.mxu0
        %v3074 = vadd.f32 %v662, %v3073
        %v3075 = vpop.f32.mrf.mxu0
        %v3076 = vadd.f32 %v658, %v3075
        %v3077 = vpop.f32.mrf.mxu0
        %v3078 = vadd.f32 %v662, %v3077
        %3079 = vmatprep.mubr.bf16.mxu0 %v826
        %3080 = vmatmul.mubr.bf16.gmra.mxu0 %v825
        %v3081 = vpop.f32.mrf.mxu0
        %v3082 = vadd.f32 %v658, %v3081
        %v3083 = vpop.f32.mrf.mxu0
        %v3084 = vadd.f32 %v662, %v3083
        %v3085 = vpop.f32.mrf.mxu0
        %v3086 = vadd.f32 %v658, %v3085
        %v3087 = vpop.f32.mrf.mxu0
        %v3088 = vadd.f32 %v662, %v3087
        %3089 = vmatprep.mubr.bf16.mxu0 %v832
        %3090 = vmatmul.mubr.bf16.gmra.mxu0 %v831
        %v3091 = vpop.f32.mrf.mxu0
        %v3092 = vadd.f32 %v658, %v3091
        %v3093 = vpop.f32.mrf.mxu0
        %v3094 = vadd.f32 %v662, %v3093
        %v3095 = vpop.f32.mrf.mxu0
        %v3096 = vadd.f32 %v658, %v3095
        %v3097 = vpop.f32.mrf.mxu0
        %v3098 = vadd.f32 %v662, %v3097
        %3099 = vmatprep.mubr.bf16.mxu0 %v838
        %3100 = vmatmul.mubr.bf16.gmra.mxu0 %v837
        %v3101 = vpop.f32.mrf.mxu0
        %v3102 = vadd.f32 %v658, %v3101
        %v3103 = vpop.f32.mrf.mxu0
        %v3104 = vadd.f32 %v662, %v3103
        %v3105 = vpop.f32.mrf.mxu0
        %v3106 = vadd.f32 %v658, %v3105
        %v3107 = vpop.f32.mrf.mxu0
        %v3108 = vadd.f32 %v662, %v3107
        %3109 = vmatprep.mubr.bf16.mxu0 %v844
        %3110 = vmatmul.mubr.bf16.gmra.mxu0 %v843
        %v3111 = vpop.f32.mrf.mxu0
        %v3112 = vadd.f32 %v658, %v3111
        %v3113 = vpop.f32.mrf.mxu0
        %v3114 = vadd.f32 %v662, %v3113
        %v3115 = vpop.f32.mrf.mxu0
        %v3116 = vadd.f32 %v658, %v3115
        %v3117 = vpop.f32.mrf.mxu0
        %v3118 = vadd.f32 %v662, %v3117
        %3119 = vmatprep.mubr.bf16.mxu0 %v850
        %3120 = vmatmul.mubr.bf16.gmra.mxu0 %v849
        %v3121 = vpop.f32.mrf.mxu0
        %v3122 = vadd.f32 %v658, %v3121
        %v3123 = vpop.f32.mrf.mxu0
        %v3124 = vadd.f32 %v662, %v3123
        %v3125 = vpop.f32.mrf.mxu0
        %v3126 = vadd.f32 %v658, %v3125
        %v3127 = vpop.f32.mrf.mxu0
        %v3128 = vadd.f32 %v662, %v3127
        %3129 = vmatprep.mubr.bf16.mxu0 %v856
        %3130 = vmatmul.mubr.bf16.gmra.mxu0 %v855
        %v3131 = vpop.f32.mrf.mxu0
        %v3132 = vadd.f32 %v658, %v3131
        %v3133 = vpop.f32.mrf.mxu0
        %v3134 = vadd.f32 %v662, %v3133
        %v3135 = vpop.f32.mrf.mxu0
        %v3136 = vadd.f32 %v658, %v3135
        %v3137 = vpop.f32.mrf.mxu0
        %v3138 = vadd.f32 %v662, %v3137
        %3139 = vdwg.mxu0
        %3140 = vmatprep.subr.bf16.mxu0 %v1916
        %3141 = vmatpush1.bf16.msra.mxu0 %v1915
        %3142 = vmatprep.subr.bf16.mxu0 %v1910
        %3143 = vmatpush1.bf16.msra.mxu0 %v1909
        %3144 = vmatprep.subr.bf16.mxu0 %v1904
        %3145 = vmatpush1.bf16.msra.mxu0 %v1903
        %3146 = vmatprep.subr.bf16.mxu0 %v1898
        %3147 = vmatpush1.bf16.msra.mxu0 %v1897
        %3148 = vmatprep.subr.bf16.mxu0 %v1892
        %3149 = vmatpush1.bf16.msra.mxu0 %v1891
        %3150 = vmatprep.subr.bf16.mxu0 %v1886
        %3151 = vmatpush1.bf16.msra.mxu0 %v1885
        %3152 = vmatprep.subr.bf16.mxu0 %v1880
        %3153 = vmatpush1.bf16.msra.mxu0 %v1879
        %3154 = vmatprep.subr.bf16.mxu0 %v1874
        %3155 = vmatpush1.bf16.msra.mxu0 %v1873
        %3156 = vmatprep.subr.bf16.mxu0 %v1964
        %3157 = vmatpush2.bf16.msra.mxu0 %v1963
        %3158 = vmatprep.subr.bf16.mxu0 %v1958
        %3159 = vmatpush2.bf16.msra.mxu0 %v1957
        %3160 = vmatprep.subr.bf16.mxu0 %v1952
        %3161 = vmatpush2.bf16.msra.mxu0 %v1951
        %3162 = vmatprep.subr.bf16.mxu0 %v1946
        %3163 = vmatpush2.bf16.msra.mxu0 %v1945
        %3164 = vmatprep.subr.bf16.mxu0 %v1940
        %3165 = vmatpush2.bf16.msra.mxu0 %v1939
        %3166 = vmatprep.subr.bf16.mxu0 %v1934
        %3167 = vmatpush2.bf16.msra.mxu0 %v1933
        %3168 = vmatprep.subr.bf16.mxu0 %v1928
        %3169 = vmatpush2.bf16.msra.mxu0 %v1927
        %3170 = vmatprep.subr.bf16.mxu0 %v1922
        %3171 = vmatpush2.bf16.msra.mxu0 %v1921
        %3172 = vmatprep.mubr.bf16.mxu0 %v816
        %3173 = vmatmul.mubr.bf16.gmra.mxu0 %v815
        %v3174 = vpop.f32.mrf.mxu0
        %v3175 = vadd.f32 %v3062, %v3174
        %v3176 = vpop.f32.mrf.mxu0
        %v3177 = vadd.f32 %v3064, %v3176
        %v3178 = vpop.f32.mrf.mxu0
        %v3179 = vadd.f32 %v3066, %v3178
        %v3180 = vpop.f32.mrf.mxu0
        %v3181 = vadd.f32 %v3068, %v3180
        %3182 = vmatprep.mubr.bf16.mxu0 %v822
        %3183 = vmatmul.mubr.bf16.gmra.mxu0 %v821
        %v3184 = vpop.f32.mrf.mxu0
        %v3185 = vadd.f32 %v3072, %v3184
        %v3186 = vpop.f32.mrf.mxu0
        %v3187 = vadd.f32 %v3074, %v3186
        %v3188 = vpop.f32.mrf.mxu0
        %v3189 = vadd.f32 %v3076, %v3188
        %v3190 = vpop.f32.mrf.mxu0
        %v3191 = vadd.f32 %v3078, %v3190
        %3192 = vmatprep.mubr.bf16.mxu0 %v828
        %3193 = vmatmul.mubr.bf16.gmra.mxu0 %v827
        %v3194 = vpop.f32.mrf.mxu0
        %v3195 = vadd.f32 %v3082, %v3194
        %v3196 = vpop.f32.mrf.mxu0
        %v3197 = vadd.f32 %v3084, %v3196
        %v3198 = vpop.f32.mrf.mxu0
        %v3199 = vadd.f32 %v3086, %v3198
        %v3200 = vpop.f32.mrf.mxu0
        %v3201 = vadd.f32 %v3088, %v3200
        %3202 = vmatprep.mubr.bf16.mxu0 %v834
        %3203 = vmatmul.mubr.bf16.gmra.mxu0 %v833
        %v3204 = vpop.f32.mrf.mxu0
        %v3205 = vadd.f32 %v3092, %v3204
        %v3206 = vpop.f32.mrf.mxu0
        %v3207 = vadd.f32 %v3094, %v3206
        %v3208 = vpop.f32.mrf.mxu0
        %v3209 = vadd.f32 %v3096, %v3208
        %v3210 = vpop.f32.mrf.mxu0
        %v3211 = vadd.f32 %v3098, %v3210
        %3212 = vmatprep.mubr.bf16.mxu0 %v840
        %3213 = vmatmul.mubr.bf16.gmra.mxu0 %v839
        %v3214 = vpop.f32.mrf.mxu0
        %v3215 = vadd.f32 %v3102, %v3214
        %v3216 = vpop.f32.mrf.mxu0
        %v3217 = vadd.f32 %v3104, %v3216
        %v3218 = vpop.f32.mrf.mxu0
        %v3219 = vadd.f32 %v3106, %v3218
        %v3220 = vpop.f32.mrf.mxu0
        %v3221 = vadd.f32 %v3108, %v3220
        %3222 = vmatprep.mubr.bf16.mxu0 %v846
        %3223 = vmatmul.mubr.bf16.gmra.mxu0 %v845
        %v3224 = vpop.f32.mrf.mxu0
        %v3225 = vadd.f32 %v3112, %v3224
        %v3226 = vpop.f32.mrf.mxu0
        %v3227 = vadd.f32 %v3114, %v3226
        %v3228 = vpop.f32.mrf.mxu0
        %v3229 = vadd.f32 %v3116, %v3228
        %v3230 = vpop.f32.mrf.mxu0
        %v3231 = vadd.f32 %v3118, %v3230
        %3232 = vmatprep.mubr.bf16.mxu0 %v852
        %3233 = vmatmul.mubr.bf16.gmra.mxu0 %v851
        %v3234 = vpop.f32.mrf.mxu0
        %v3235 = vadd.f32 %v3122, %v3234
        %v3236 = vpop.f32.mrf.mxu0
        %v3237 = vadd.f32 %v3124, %v3236
        %v3238 = vpop.f32.mrf.mxu0
        %v3239 = vadd.f32 %v3126, %v3238
        %v3240 = vpop.f32.mrf.mxu0
        %v3241 = vadd.f32 %v3128, %v3240
        %3242 = vmatprep.mubr.bf16.mxu0 %v858
        %3243 = vmatmul.mubr.bf16.gmra.mxu0 %v857
        %v3244 = vpop.f32.mrf.mxu0
        %v3245 = vadd.f32 %v3132, %v3244
        %v3246 = vpop.f32.mrf.mxu0
        %v3247 = vadd.f32 %v3134, %v3246
        %v3248 = vpop.f32.mrf.mxu0
        %v3249 = vadd.f32 %v3136, %v3248
        %v3250 = vpop.f32.mrf.mxu0
        %v3251 = vadd.f32 %v3138, %v3250
        %3252 = vdwg.mxu0
        %3253 = vmatprep.subr.bf16.mxu0 %v2012
        %3254 = vmatpush1.bf16.msra.mxu0 %v2011
        %3255 = vmatprep.subr.bf16.mxu0 %v2006
        %3256 = vmatpush1.bf16.msra.mxu0 %v2005
        %3257 = vmatprep.subr.bf16.mxu0 %v2000
        %3258 = vmatpush1.bf16.msra.mxu0 %v1999
        %3259 = vmatprep.subr.bf16.mxu0 %v1994
        %3260 = vmatpush1.bf16.msra.mxu0 %v1993
        %3261 = vmatprep.subr.bf16.mxu0 %v1988
        %3262 = vmatpush1.bf16.msra.mxu0 %v1987
        %3263 = vmatprep.subr.bf16.mxu0 %v1982
        %3264 = vmatpush1.bf16.msra.mxu0 %v1981
        %3265 = vmatprep.subr.bf16.mxu0 %v1976
        %3266 = vmatpush1.bf16.msra.mxu0 %v1975
        %3267 = vmatprep.subr.bf16.mxu0 %v1970
        %3268 = vmatpush1.bf16.msra.mxu0 %v1969
        %3269 = vmatprep.subr.bf16.mxu0 %v2060
        %3270 = vmatpush2.bf16.msra.mxu0 %v2059
        %3271 = vmatprep.subr.bf16.mxu0 %v2054
        %3272 = vmatpush2.bf16.msra.mxu0 %v2053
        %3273 = vmatprep.subr.bf16.mxu0 %v2048
        %3274 = vmatpush2.bf16.msra.mxu0 %v2047
        %3275 = vmatprep.subr.bf16.mxu0 %v2042
        %3276 = vmatpush2.bf16.msra.mxu0 %v2041
        %3277 = vmatprep.subr.bf16.mxu0 %v2036
        %3278 = vmatpush2.bf16.msra.mxu0 %v2035
        %3279 = vmatprep.subr.bf16.mxu0 %v2030
        %3280 = vmatpush2.bf16.msra.mxu0 %v2029
        %3281 = vmatprep.subr.bf16.mxu0 %v2024
        %3282 = vmatpush2.bf16.msra.mxu0 %v2023
        %3283 = vmatprep.subr.bf16.mxu0 %v2018
        %3284 = vmatpush2.bf16.msra.mxu0 %v2017
        %3285 = vmatprep.mubr.bf16.mxu0 %v818
        %3286 = vmatmul.mubr.bf16.gmra.mxu0 %v817
        %v3287 = vpop.f32.mrf.mxu0
        %v3288 = vadd.f32 %v3175, %v3287
        %v3289 = vpop.f32.mrf.mxu0
        %v3290 = vadd.f32 %v3177, %v3289
        %v3291 = vpop.f32.mrf.mxu0
        %v3292 = vadd.f32 %v3179, %v3291
        %v3293 = vpop.f32.mrf.mxu0
        %v3294 = vadd.f32 %v3181, %v3293
        %3295 = vmatprep.mubr.bf16.mxu0 %v824
        %3296 = vmatmul.mubr.bf16.gmra.mxu0 %v823
        %v3297 = vpop.f32.mrf.mxu0
        %v3298 = vadd.f32 %v3185, %v3297
        %v3299 = vpop.f32.mrf.mxu0
        %v3300 = vadd.f32 %v3187, %v3299
        %v3301 = vpop.f32.mrf.mxu0
        %v3302 = vadd.f32 %v3189, %v3301
        %v3303 = vpop.f32.mrf.mxu0
        %v3304 = vadd.f32 %v3191, %v3303
        %3305 = vmatprep.mubr.bf16.mxu0 %v830
        %3306 = vmatmul.mubr.bf16.gmra.mxu0 %v829
        %v3307 = vpop.f32.mrf.mxu0
        %v3308 = vadd.f32 %v3195, %v3307
        %v3309 = vpop.f32.mrf.mxu0
        %v3310 = vadd.f32 %v3197, %v3309
        %v3311 = vpop.f32.mrf.mxu0
        %v3312 = vadd.f32 %v3199, %v3311
        %v3313 = vpop.f32.mrf.mxu0
        %v3314 = vadd.f32 %v3201, %v3313
        %3315 = vmatprep.mubr.bf16.mxu0 %v836
        %3316 = vmatmul.mubr.bf16.gmra.mxu0 %v835
        %v3317 = vpop.f32.mrf.mxu0
        %v3318 = vadd.f32 %v3205, %v3317
        %v3319 = vpop.f32.mrf.mxu0
        %v3320 = vadd.f32 %v3207, %v3319
        %v3321 = vpop.f32.mrf.mxu0
        %v3322 = vadd.f32 %v3209, %v3321
        %v3323 = vpop.f32.mrf.mxu0
        %v3324 = vadd.f32 %v3211, %v3323
        %3325 = vmatprep.mubr.bf16.mxu0 %v842
        %3326 = vmatmul.mubr.bf16.gmra.mxu0 %v841
        %v3327 = vpop.f32.mrf.mxu0
        %v3328 = vadd.f32 %v3215, %v3327
        %v3329 = vpop.f32.mrf.mxu0
        %v3330 = vadd.f32 %v3217, %v3329
        %v3331 = vpop.f32.mrf.mxu0
        %v3332 = vadd.f32 %v3219, %v3331
        %v3333 = vpop.f32.mrf.mxu0
        %v3334 = vadd.f32 %v3221, %v3333
        %3335 = vmatprep.mubr.bf16.mxu0 %v848
        %3336 = vmatmul.mubr.bf16.gmra.mxu0 %v847
        %v3337 = vpop.f32.mrf.mxu0
        %v3338 = vadd.f32 %v3225, %v3337
        %v3339 = vpop.f32.mrf.mxu0
        %v3340 = vadd.f32 %v3227, %v3339
        %v3341 = vpop.f32.mrf.mxu0
        %v3342 = vadd.f32 %v3229, %v3341
        %v3343 = vpop.f32.mrf.mxu0
        %v3344 = vadd.f32 %v3231, %v3343
        %3345 = vmatprep.mubr.bf16.mxu0 %v854
        %3346 = vmatmul.mubr.bf16.gmra.mxu0 %v853
        %v3347 = vpop.f32.mrf.mxu0
        %v3348 = vadd.f32 %v3235, %v3347
        %v3349 = vpop.f32.mrf.mxu0
        %v3350 = vadd.f32 %v3237, %v3349
        %v3351 = vpop.f32.mrf.mxu0
        %v3352 = vadd.f32 %v3239, %v3351
        %v3353 = vpop.f32.mrf.mxu0
        %v3354 = vadd.f32 %v3241, %v3353
        %3355 = vmatprep.mubr.bf16.mxu0 %v860
        %3356 = vmatmul.mubr.bf16.gmra.mxu0 %v859
        %v3357 = vpop.f32.mrf.mxu0
        %v3358 = vadd.f32 %v3245, %v3357
        %v3359 = vpop.f32.mrf.mxu0
        %v3360 = vadd.f32 %v3247, %v3359
        %v3361 = vpop.f32.mrf.mxu0
        %v3362 = vadd.f32 %v3249, %v3361
        %v3363 = vpop.f32.mrf.mxu0
        %v3364 = vadd.f32 %v3251, %v3363
        %3365 = vdwg.mxu0
        %v3366 = vtanh.pop %v2610
        %v3367 = vtanh.pop %v2612
        %v3368 = vtanh.pop %v2949
        %v3369 = vtanh.pop %v2951
        %v3370 = vtanh.pop %v3288
        %v3371 = vtanh.pop %v3290
        %v3372 = vtanh.pop %v2614
        %v3373 = vtanh.pop %v2616
        %v3374 = vtanh.pop %v2953
        %v3375 = vtanh.pop %v2955
        %v3376 = vtanh.pop %v3292
        %v3377 = vtanh.pop %v3294
        %v3378 = vtanh.pop %v2620
        %v3379 = vtanh.pop %v2622
        %v3380 = vtanh.pop %v2959
        %v3381 = vtanh.pop %v2961
        %v3382 = vtanh.pop %v3298
        %v3383 = vtanh.pop %v3300
        %v3384 = vtanh.pop %v2624
        %v3385 = vtanh.pop %v2626
        %v3386 = vtanh.pop %v2963
        %v3387 = vtanh.pop %v2965
        %v3388 = vtanh.pop %v3302
        %v3389 = vtanh.pop %v3304
        %v3390 = vtanh.pop %v2630
        %v3391 = vtanh.pop %v2632
        %v3392 = vtanh.pop %v2969
        %v3393 = vtanh.pop %v2971
        %v3394 = vtanh.pop %v3308
        %v3395 = vtanh.pop %v3310
        %v3396 = vtanh.pop %v2634
        %v3397 = vtanh.pop %v2636
        %v3398 = vtanh.pop %v2973
        %v3399 = vtanh.pop %v2975
        %v3400 = vtanh.pop %v3312
        %v3401 = vtanh.pop %v3314
        %v3402 = vtanh.pop %v2640
        %v3403 = vtanh.pop %v2642
        %v3404 = vtanh.pop %v2979
        %v3405 = vtanh.pop %v2981
        %v3406 = vtanh.pop %v3318
        %v3407 = vtanh.pop %v3320
        %v3408 = vtanh.pop %v2644
        %v3409 = vtanh.pop %v2646
        %v3410 = vtanh.pop %v2983
        %v3411 = vtanh.pop %v2985
        %v3412 = vtanh.pop %v3322
        %v3413 = vtanh.pop %v3324
        %v3414 = vtanh.pop %v2650
        %v3415 = vtanh.pop %v2652
        %v3416 = vtanh.pop %v2989
        %v3417 = vtanh.pop %v2991
        %v3418 = vtanh.pop %v3328
        %v3419 = vtanh.pop %v3330
        %v3420 = vtanh.pop %v2654
        %v3421 = vtanh.pop %v2656
        %v3422 = vtanh.pop %v2993
        %v3423 = vtanh.pop %v2995
        %v3424 = vtanh.pop %v3332
        %v3425 = vtanh.pop %v3334
        %v3426 = vtanh.pop %v2660
        %v3427 = vtanh.pop %v2662
        %v3428 = vtanh.pop %v2999
        %v3429 = vtanh.pop %v3001
        %v3430 = vtanh.pop %v3338
        %v3431 = vtanh.pop %v3340
        %v3432 = vtanh.pop %v2664
        %v3433 = vtanh.pop %v2666
        %v3434 = vtanh.pop %v3003
        %v3435 = vtanh.pop %v3005
        %v3436 = vtanh.pop %v3342
        %v3437 = vtanh.pop %v3344
        %v3438 = vtanh.pop %v2670
        %v3439 = vtanh.pop %v2672
        %v3440 = vtanh.pop %v3009
        %v3441 = vtanh.pop %v3011
        %v3442 = vtanh.pop %v3348
        %v3443 = vtanh.pop %v3350
        %v3444 = vtanh.pop %v2674
        %v3445 = vtanh.pop %v2676
        %v3446 = vtanh.pop %v3013
        %v3447 = vtanh.pop %v3015
        %v3448 = vtanh.pop %v3352
        %v3449 = vtanh.pop %v3354
        %v3450 = vtanh.pop %v2680
        %v3451 = vtanh.pop %v2682
        %v3452 = vtanh.pop %v3019
        %v3453 = vtanh.pop %v3021
        %v3454 = vtanh.pop %v3358
        %v3455 = vtanh.pop %v3360
        %v3456 = vtanh.pop %v2684
        %v3457 = vtanh.pop %v2686
        %v3458 = vtanh.pop %v3023
        %v3459 = vtanh.pop %v3025
        %v3460 = vtanh.pop %v3362
        %v3461 = vtanh.pop %v3364
        %v3462 = vpack.c.bf16 %v3372, %v3366
        %v3463 = vpack.c.bf16 %v3373, %v3367
        %v3464 = vpack.c.bf16 %v3374, %v3368
        %v3465 = vpack.c.bf16 %v3375, %v3369
        %v3466 = vpack.c.bf16 %v3376, %v3370
        %v3467 = vpack.c.bf16 %v3377, %v3371
        %v3468 = vpack.c.bf16 %v3384, %v3378
        %v3469 = vpack.c.bf16 %v3385, %v3379
        %v3470 = vpack.c.bf16 %v3386, %v3380
        %v3471 = vpack.c.bf16 %v3387, %v3381
        %v3472 = vpack.c.bf16 %v3388, %v3382
        %v3473 = vpack.c.bf16 %v3389, %v3383
        %v3474 = vpack.c.bf16 %v3396, %v3390
        %v3475 = vpack.c.bf16 %v3397, %v3391
        %v3476 = vpack.c.bf16 %v3398, %v3392
        %v3477 = vpack.c.bf16 %v3399, %v3393
        %v3478 = vpack.c.bf16 %v3400, %v3394
        %v3479 = vpack.c.bf16 %v3401, %v3395
        %v3480 = vpack.c.bf16 %v3408, %v3402
        %v3481 = vpack.c.bf16 %v3409, %v3403
        %v3482 = vpack.c.bf16 %v3410, %v3404
        %v3483 = vpack.c.bf16 %v3411, %v3405
        %v3484 = vpack.c.bf16 %v3412, %v3406
        %v3485 = vpack.c.bf16 %v3413, %v3407
        %v3486 = vpack.c.bf16 %v3420, %v3414
        %v3487 = vpack.c.bf16 %v3421, %v3415
        %v3488 = vpack.c.bf16 %v3422, %v3416
        %v3489 = vpack.c.bf16 %v3423, %v3417
        %v3490 = vpack.c.bf16 %v3424, %v3418
        %v3491 = vpack.c.bf16 %v3425, %v3419
        %v3492 = vpack.c.bf16 %v3432, %v3426
        %v3493 = vpack.c.bf16 %v3433, %v3427
        %v3494 = vpack.c.bf16 %v3434, %v3428
        %v3495 = vpack.c.bf16 %v3435, %v3429
        %v3496 = vpack.c.bf16 %v3436, %v3430
        %v3497 = vpack.c.bf16 %v3437, %v3431
        %v3498 = vpack.c.bf16 %v3444, %v3438
        %v3499 = vpack.c.bf16 %v3445, %v3439
        %v3500 = vpack.c.bf16 %v3446, %v3440
        %v3501 = vpack.c.bf16 %v3447, %v3441
        %v3502 = vpack.c.bf16 %v3448, %v3442
        %v3503 = vpack.c.bf16 %v3449, %v3443
        %v3504 = vpack.c.bf16 %v3456, %v3450
        %v3505 = vpack.c.bf16 %v3457, %v3451
        %v3506 = vpack.c.bf16 %v3458, %v3452
        %v3507 = vpack.c.bf16 %v3459, %v3453
        %v3508 = vpack.c.bf16 %v3460, %v3454
        %v3509 = vpack.c.bf16 %v3461, %v3455
        %v3510 = vld [vmem:[#allocation8] sm:$0xf]
        %v3511 = vld [vmem:[#allocation8 + $0x4] sm:$0xf]
        %v3512 = vld [vmem:[#allocation8 + $0x8] sm:$0xf]
        %v3513 = vld [vmem:[#allocation8 + $0xc] sm:$0xf]
        %v3514 = vld [vmem:[#allocation8 + $0x10] sm:$0xf]
        %v3515 = vld [vmem:[#allocation8 + $0x14] sm:$0xf]
        %v3516 = vld [vmem:[#allocation8 + $0x18] sm:$0xf]
        %v3517 = vld [vmem:[#allocation8 + $0x1c] sm:$0xf]
        %v3518 = vld [vmem:[#allocation8 + $0x20] sm:$0xf]
        %v3519 = vld [vmem:[#allocation8 + $0x24] sm:$0xf]
        %v3520 = vld [vmem:[#allocation8 + $0x28] sm:$0xf]
        %v3521 = vld [vmem:[#allocation8 + $0x2c] sm:$0xf]
        %v3522 = vld [vmem:[#allocation8 + $0x30] sm:$0xf]
        %v3523 = vld [vmem:[#allocation8 + $0x34] sm:$0xf]
        %v3524 = vld [vmem:[#allocation8 + $0x38] sm:$0xf]
        %v3525 = vld [vmem:[#allocation8 + $0x3c] sm:$0xf]
        %v3526 = vld [vmem:[#allocation8 + $0x40] sm:$0xf]
        %v3527 = vld [vmem:[#allocation8 + $0x44] sm:$0xf]
        %v3528 = vld [vmem:[#allocation8 + $0x48] sm:$0xf]
        %v3529 = vld [vmem:[#allocation8 + $0x4c] sm:$0xf]
        %v3530 = vld [vmem:[#allocation8 + $0x50] sm:$0xf]
        %v3531 = vld [vmem:[#allocation8 + $0x54] sm:$0xf]
        %v3532 = vld [vmem:[#allocation8 + $0x58] sm:$0xf]
        %v3533 = vld [vmem:[#allocation8 + $0x5c] sm:$0xf]
        %v3534 = vld [vmem:[#allocation8 + $0x60] sm:$0xf]
        %v3535 = vld [vmem:[#allocation8 + $0x64] sm:$0xf]
        %v3536 = vld [vmem:[#allocation8 + $0x68] sm:$0xf]
        %v3537 = vld [vmem:[#allocation8 + $0x6c] sm:$0xf]
        %v3538 = vld [vmem:[#allocation8 + $0x70] sm:$0xf]
        %v3539 = vld [vmem:[#allocation8 + $0x74] sm:$0xf]
        %v3540 = vld [vmem:[#allocation8 + $0x78] sm:$0xf]
        %v3541 = vld [vmem:[#allocation8 + $0x7c] sm:$0xf]
        %v3542 = vld [vmem:[#allocation8 + $0x80] sm:$0xf]
        %v3543 = vld [vmem:[#allocation8 + $0x84] sm:$0xf]
        %v3544 = vld [vmem:[#allocation8 + $0x88] sm:$0xf]
        %v3545 = vld [vmem:[#allocation8 + $0x8c] sm:$0xf]
        %v3546 = vld [vmem:[#allocation8 + $0x90] sm:$0xf]
        %v3547 = vld [vmem:[#allocation8 + $0x94] sm:$0xf]
        %v3548 = vld [vmem:[#allocation8 + $0x98] sm:$0xf]
        %v3549 = vld [vmem:[#allocation8 + $0x9c] sm:$0xf]
        %v3550 = vld [vmem:[#allocation8 + $0xa0] sm:$0xf]
        %v3551 = vld [vmem:[#allocation8 + $0xa4] sm:$0xf]
        %v3552 = vld [vmem:[#allocation8 + $0xa8] sm:$0xf]
        %v3553 = vld [vmem:[#allocation8 + $0xac] sm:$0xf]
        %v3554 = vld [vmem:[#allocation8 + $0xb0] sm:$0xf]
        %v3555 = vld [vmem:[#allocation8 + $0xb4] sm:$0xf]
        %v3556 = vld [vmem:[#allocation8 + $0xb8] sm:$0xf]
        %v3557 = vld [vmem:[#allocation8 + $0xbc] sm:$0xf]
        %v3558 = vld [vmem:[#allocation8 + $0xc0] sm:$0xf]
        %v3559 = vld [vmem:[#allocation8 + $0xc4] sm:$0xf]
        %v3560 = vld [vmem:[#allocation8 + $0xc8] sm:$0xf]
        %v3561 = vld [vmem:[#allocation8 + $0xcc] sm:$0xf]
        %v3562 = vld [vmem:[#allocation8 + $0xd0] sm:$0xf]
        %v3563 = vld [vmem:[#allocation8 + $0xd4] sm:$0xf]
        %v3564 = vld [vmem:[#allocation8 + $0xd8] sm:$0xf]
        %v3565 = vld [vmem:[#allocation8 + $0xdc] sm:$0xf]
        %v3566 = vld [vmem:[#allocation8 + $0xe0] sm:$0xf]
        %v3567 = vld [vmem:[#allocation8 + $0xe4] sm:$0xf]
        %v3568 = vld [vmem:[#allocation8 + $0xe8] sm:$0xf]
        %v3569 = vld [vmem:[#allocation8 + $0xec] sm:$0xf]
        %v3570 = vld [vmem:[#allocation8 + $0xf0] sm:$0xf]
        %v3571 = vld [vmem:[#allocation8 + $0xf4] sm:$0xf]
        %v3572 = vld [vmem:[#allocation8 + $0xf8] sm:$0xf]
        %v3573 = vld [vmem:[#allocation8 + $0xfc] sm:$0xf]
        %v3574 = vld [vmem:[#allocation8 + $0x100] sm:$0xf]
        %v3575 = vld [vmem:[#allocation8 + $0x104] sm:$0xf]
        %v3576 = vld [vmem:[#allocation8 + $0x108] sm:$0xf]
        %v3577 = vld [vmem:[#allocation8 + $0x10c] sm:$0xf]
        %v3578 = vld [vmem:[#allocation8 + $0x110] sm:$0xf]
        %v3579 = vld [vmem:[#allocation8 + $0x114] sm:$0xf]
        %v3580 = vld [vmem:[#allocation8 + $0x118] sm:$0xf]
        %v3581 = vld [vmem:[#allocation8 + $0x11c] sm:$0xf]
        %v3582 = vld [vmem:[#allocation8 + $0x120] sm:$0xf]
        %v3583 = vld [vmem:[#allocation8 + $0x124] sm:$0xf]
        %v3584 = vld [vmem:[#allocation8 + $0x128] sm:$0xf]
        %v3585 = vld [vmem:[#allocation8 + $0x12c] sm:$0xf]
        %v3586 = vld [vmem:[#allocation8 + $0x130] sm:$0xf]
        %v3587 = vld [vmem:[#allocation8 + $0x134] sm:$0xf]
        %v3588 = vld [vmem:[#allocation8 + $0x138] sm:$0xf]
        %v3589 = vld [vmem:[#allocation8 + $0x13c] sm:$0xf]
        %v3590 = vld [vmem:[#allocation8 + $0x140] sm:$0xf]
        %v3591 = vld [vmem:[#allocation8 + $0x144] sm:$0xf]
        %v3592 = vld [vmem:[#allocation8 + $0x148] sm:$0xf]
        %v3593 = vld [vmem:[#allocation8 + $0x14c] sm:$0xf]
        %v3594 = vld [vmem:[#allocation8 + $0x150] sm:$0xf]
        %v3595 = vld [vmem:[#allocation8 + $0x154] sm:$0xf]
        %v3596 = vld [vmem:[#allocation8 + $0x158] sm:$0xf]
        %v3597 = vld [vmem:[#allocation8 + $0x15c] sm:$0xf]
        %v3598 = vld [vmem:[#allocation8 + $0x160] sm:$0xf]
        %v3599 = vld [vmem:[#allocation8 + $0x164] sm:$0xf]
        %v3600 = vld [vmem:[#allocation8 + $0x168] sm:$0xf]
        %v3601 = vld [vmem:[#allocation8 + $0x16c] sm:$0xf]
        %v3602 = vld [vmem:[#allocation8 + $0x170] sm:$0xf]
        %v3603 = vld [vmem:[#allocation8 + $0x174] sm:$0xf]
        %v3604 = vld [vmem:[#allocation8 + $0x178] sm:$0xf]
        %v3605 = vld [vmem:[#allocation8 + $0x17c] sm:$0xf]
        %v3606 = vld [vmem:[#allocation10] sm:$0x1]
        %v3608 = vlaneseq
        %v3609 = vshrl.u32 %v3608, 7
        %v3610 = vsub.s32 0, %v3609
        %v3611 = vrot.slane %v3606, %v3610
        %v3709 = vunpack.c.l.b16 %v3510
        %v3710 = vunpack.c.l.b16 %v3511
        %v3711 = vunpack.c.l.b16 %v3512
        %v3712 = vunpack.c.l.b16 %v3513
        %v3713 = vunpack.c.l.b16 %v3514
        %v3714 = vunpack.c.l.b16 %v3515
        %v3715 = vunpack.c.l.b16 %v3516
        %v3716 = vunpack.c.l.b16 %v3517
        %v3717 = vunpack.c.l.b16 %v3518
        %v3718 = vunpack.c.l.b16 %v3519
        %v3719 = vunpack.c.l.b16 %v3520
        %v3720 = vunpack.c.l.b16 %v3521
        %v3721 = vunpack.c.l.b16 %v3522
        %v3722 = vunpack.c.l.b16 %v3523
        %v3723 = vunpack.c.l.b16 %v3524
        %v3724 = vunpack.c.l.b16 %v3525
        %v3725 = vunpack.c.l.b16 %v3526
        %v3726 = vunpack.c.l.b16 %v3527
        %v3727 = vunpack.c.l.b16 %v3528
        %v3728 = vunpack.c.l.b16 %v3529
        %v3729 = vunpack.c.l.b16 %v3530
        %v3730 = vunpack.c.l.b16 %v3531
        %v3731 = vunpack.c.l.b16 %v3532
        %v3732 = vunpack.c.l.b16 %v3533
        %v3733 = vunpack.c.l.b16 %v3534
        %v3734 = vunpack.c.l.b16 %v3535
        %v3735 = vunpack.c.l.b16 %v3536
        %v3736 = vunpack.c.l.b16 %v3537
        %v3737 = vunpack.c.l.b16 %v3538
        %v3738 = vunpack.c.l.b16 %v3539
        %v3739 = vunpack.c.l.b16 %v3540
        %v3740 = vunpack.c.l.b16 %v3541
        %v3741 = vunpack.c.l.b16 %v3542
        %v3742 = vunpack.c.l.b16 %v3543
        %v3743 = vunpack.c.l.b16 %v3544
        %v3744 = vunpack.c.l.b16 %v3545
        %v3745 = vunpack.c.l.b16 %v3546
        %v3746 = vunpack.c.l.b16 %v3547
        %v3747 = vunpack.c.l.b16 %v3548
        %v3748 = vunpack.c.l.b16 %v3549
        %v3749 = vunpack.c.l.b16 %v3550
        %v3750 = vunpack.c.l.b16 %v3551
        %v3751 = vunpack.c.l.b16 %v3552
        %v3752 = vunpack.c.l.b16 %v3553
        %v3753 = vunpack.c.l.b16 %v3554
        %v3754 = vunpack.c.l.b16 %v3555
        %v3755 = vunpack.c.l.b16 %v3556
        %v3756 = vunpack.c.l.b16 %v3557
        %v3757 = vunpack.c.l.b16 %v3558
        %v3758 = vunpack.c.l.b16 %v3559
        %v3759 = vunpack.c.l.b16 %v3560
        %v3760 = vunpack.c.l.b16 %v3561
        %v3761 = vunpack.c.l.b16 %v3562
        %v3762 = vunpack.c.l.b16 %v3563
        %v3763 = vunpack.c.l.b16 %v3564
        %v3764 = vunpack.c.l.b16 %v3565
        %v3765 = vunpack.c.l.b16 %v3566
        %v3766 = vunpack.c.l.b16 %v3567
        %v3767 = vunpack.c.l.b16 %v3568
        %v3768 = vunpack.c.l.b16 %v3569
        %v3769 = vunpack.c.l.b16 %v3570
        %v3770 = vunpack.c.l.b16 %v3571
        %v3771 = vunpack.c.l.b16 %v3572
        %v3772 = vunpack.c.l.b16 %v3573
        %v3773 = vunpack.c.l.b16 %v3574
        %v3774 = vunpack.c.l.b16 %v3575
        %v3775 = vunpack.c.l.b16 %v3576
        %v3776 = vunpack.c.l.b16 %v3577
        %v3777 = vunpack.c.l.b16 %v3578
        %v3778 = vunpack.c.l.b16 %v3579
        %v3779 = vunpack.c.l.b16 %v3580
        %v3780 = vunpack.c.l.b16 %v3581
        %v3781 = vunpack.c.l.b16 %v3582
        %v3782 = vunpack.c.l.b16 %v3583
        %v3783 = vunpack.c.l.b16 %v3584
        %v3784 = vunpack.c.l.b16 %v3585
        %v3785 = vunpack.c.l.b16 %v3586
        %v3786 = vunpack.c.l.b16 %v3587
        %v3787 = vunpack.c.l.b16 %v3588
        %v3788 = vunpack.c.l.b16 %v3589
        %v3789 = vunpack.c.l.b16 %v3590
        %v3790 = vunpack.c.l.b16 %v3591
        %v3791 = vunpack.c.l.b16 %v3592
        %v3792 = vunpack.c.l.b16 %v3593
        %v3793 = vunpack.c.l.b16 %v3594
        %v3794 = vunpack.c.l.b16 %v3595
        %v3795 = vunpack.c.l.b16 %v3596
        %v3796 = vunpack.c.l.b16 %v3597
        %v3797 = vunpack.c.l.b16 %v3598
        %v3798 = vunpack.c.l.b16 %v3599
        %v3799 = vunpack.c.l.b16 %v3600
        %v3800 = vunpack.c.l.b16 %v3601
        %v3801 = vunpack.c.l.b16 %v3602
        %v3802 = vunpack.c.l.b16 %v3603
        %v3803 = vunpack.c.l.b16 %v3604
        %v3804 = vunpack.c.l.b16 %v3605
        %v3805 = vpack.c.b16 %v3710, %v3709
        %v3806 = vpack.c.b16 %v3712, %v3711
        %v3807 = vpack.c.b16 %v3714, %v3713
        %v3808 = vpack.c.b16 %v3716, %v3715
        %v3809 = vpack.c.b16 %v3718, %v3717
        %v3810 = vpack.c.b16 %v3720, %v3719
        %v3811 = vpack.c.b16 %v3722, %v3721
        %v3812 = vpack.c.b16 %v3724, %v3723
        %v3813 = vpack.c.b16 %v3726, %v3725
        %v3814 = vpack.c.b16 %v3728, %v3727
        %v3815 = vpack.c.b16 %v3730, %v3729
        %v3816 = vpack.c.b16 %v3732, %v3731
        %v3817 = vpack.c.b16 %v3734, %v3733
        %v3818 = vpack.c.b16 %v3736, %v3735
        %v3819 = vpack.c.b16 %v3738, %v3737
        %v3820 = vpack.c.b16 %v3740, %v3739
        %v3821 = vpack.c.b16 %v3742, %v3741
        %v3822 = vpack.c.b16 %v3744, %v3743
        %v3823 = vpack.c.b16 %v3746, %v3745
        %v3824 = vpack.c.b16 %v3748, %v3747
        %v3825 = vpack.c.b16 %v3750, %v3749
        %v3826 = vpack.c.b16 %v3752, %v3751
        %v3827 = vpack.c.b16 %v3754, %v3753
        %v3828 = vpack.c.b16 %v3756, %v3755
        %v3829 = vpack.c.b16 %v3758, %v3757
        %v3830 = vpack.c.b16 %v3760, %v3759
        %v3831 = vpack.c.b16 %v3762, %v3761
        %v3832 = vpack.c.b16 %v3764, %v3763
        %v3833 = vpack.c.b16 %v3766, %v3765
        %v3834 = vpack.c.b16 %v3768, %v3767
        %v3835 = vpack.c.b16 %v3770, %v3769
        %v3836 = vpack.c.b16 %v3772, %v3771
        %v3837 = vpack.c.b16 %v3774, %v3773
        %v3838 = vpack.c.b16 %v3776, %v3775
        %v3839 = vpack.c.b16 %v3778, %v3777
        %v3840 = vpack.c.b16 %v3780, %v3779
        %v3841 = vpack.c.b16 %v3782, %v3781
        %v3842 = vpack.c.b16 %v3784, %v3783
        %v3843 = vpack.c.b16 %v3786, %v3785
        %v3844 = vpack.c.b16 %v3788, %v3787
        %v3845 = vpack.c.b16 %v3790, %v3789
        %v3846 = vpack.c.b16 %v3792, %v3791
        %v3847 = vpack.c.b16 %v3794, %v3793
        %v3848 = vpack.c.b16 %v3796, %v3795
        %v3849 = vpack.c.b16 %v3798, %v3797
        %v3850 = vpack.c.b16 %v3800, %v3799
        %v3851 = vpack.c.b16 %v3802, %v3801
        %v3852 = vpack.c.b16 %v3804, %v3803
        %3901 = vmatprep.subr.bf16.mxu0 0
        %3902 = vmatpush1.bf16.msra.mxu0 %v3812
        %3903 = vmatprep.subr.bf16.mxu0 0
        %3904 = vmatpush1.bf16.msra.mxu0 %v3811
        %3905 = vmatprep.subr.bf16.mxu0 0
        %3906 = vmatpush1.bf16.msra.mxu0 %v3810
        %3907 = vmatprep.subr.bf16.mxu0 0
        %3908 = vmatpush1.bf16.msra.mxu0 %v3809
        %3909 = vmatprep.subr.bf16.mxu0 0
        %3910 = vmatpush1.bf16.msra.mxu0 %v3808
        %3911 = vmatprep.subr.bf16.mxu0 0
        %3912 = vmatpush1.bf16.msra.mxu0 %v3807
        %3913 = vmatprep.subr.bf16.mxu0 0
        %3914 = vmatpush1.bf16.msra.mxu0 %v3806
        %3915 = vmatprep.subr.bf16.mxu0 0
        %3916 = vmatpush1.bf16.msra.mxu0 %v3805
        %3917 = vmatprep.subr.bf16.mxu0 0
        %3918 = vmatpush2.bf16.msra.mxu0 %v3820
        %3919 = vmatprep.subr.bf16.mxu0 0
        %3920 = vmatpush2.bf16.msra.mxu0 %v3819
        %3921 = vmatprep.subr.bf16.mxu0 0
        %3922 = vmatpush2.bf16.msra.mxu0 %v3818
        %3923 = vmatprep.subr.bf16.mxu0 0
        %3924 = vmatpush2.bf16.msra.mxu0 %v3817
        %3925 = vmatprep.subr.bf16.mxu0 0
        %3926 = vmatpush2.bf16.msra.mxu0 %v3816
        %3927 = vmatprep.subr.bf16.mxu0 0
        %3928 = vmatpush2.bf16.msra.mxu0 %v3815
        %3929 = vmatprep.subr.bf16.mxu0 0
        %3930 = vmatpush2.bf16.msra.mxu0 %v3814
        %3931 = vmatprep.subr.bf16.mxu0 0
        %3932 = vmatpush2.bf16.msra.mxu0 %v3813
        %3933 = vmatprep.mubr.bf16.mxu0 %v3463
        %3934 = vmatmul.mubr.bf16.gmra.mxu0 %v3462
        %v3935 = vpop.f32.mrf.mxu0
        %v3936 = vadd.f32 %v3611, %v3935
        %v3937 = vpop.f32.mrf.mxu0
        %v3938 = vpop.f32.mrf.mxu0
        %v3939 = vadd.f32 %v3611, %v3938
        %v3940 = vpop.f32.mrf.mxu0
        %3941 = vmatprep.mubr.bf16.mxu0 %v3469
        %3942 = vmatmul.mubr.bf16.gmra.mxu0 %v3468
        %v3943 = vpop.f32.mrf.mxu0
        %v3944 = vadd.f32 %v3611, %v3943
        %v3945 = vpop.f32.mrf.mxu0
        %v3946 = vpop.f32.mrf.mxu0
        %v3947 = vadd.f32 %v3611, %v3946
        %v3948 = vpop.f32.mrf.mxu0
        %3949 = vmatprep.mubr.bf16.mxu0 %v3475
        %3950 = vmatmul.mubr.bf16.gmra.mxu0 %v3474
        %v3951 = vpop.f32.mrf.mxu0
        %v3952 = vadd.f32 %v3611, %v3951
        %v3953 = vpop.f32.mrf.mxu0
        %v3954 = vpop.f32.mrf.mxu0
        %v3955 = vadd.f32 %v3611, %v3954
        %v3956 = vpop.f32.mrf.mxu0
        %3957 = vmatprep.mubr.bf16.mxu0 %v3481
        %3958 = vmatmul.mubr.bf16.gmra.mxu0 %v3480
        %v3959 = vpop.f32.mrf.mxu0
        %v3960 = vadd.f32 %v3611, %v3959
        %v3961 = vpop.f32.mrf.mxu0
        %v3962 = vpop.f32.mrf.mxu0
        %v3963 = vadd.f32 %v3611, %v3962
        %v3964 = vpop.f32.mrf.mxu0
        %3965 = vmatprep.mubr.bf16.mxu0 %v3487
        %3966 = vmatmul.mubr.bf16.gmra.mxu0 %v3486
        %v3967 = vpop.f32.mrf.mxu0
        %v3968 = vadd.f32 %v3611, %v3967
        %v3969 = vpop.f32.mrf.mxu0
        %v3970 = vpop.f32.mrf.mxu0
        %v3971 = vadd.f32 %v3611, %v3970
        %v3972 = vpop.f32.mrf.mxu0
        %3973 = vmatprep.mubr.bf16.mxu0 %v3493
        %3974 = vmatmul.mubr.bf16.gmra.mxu0 %v3492
        %v3975 = vpop.f32.mrf.mxu0
        %v3976 = vadd.f32 %v3611, %v3975
        %v3977 = vpop.f32.mrf.mxu0
        %v3978 = vpop.f32.mrf.mxu0
        %v3979 = vadd.f32 %v3611, %v3978
        %v3980 = vpop.f32.mrf.mxu0
        %3981 = vmatprep.mubr.bf16.mxu0 %v3499
        %3982 = vmatmul.mubr.bf16.gmra.mxu0 %v3498
        %v3983 = vpop.f32.mrf.mxu0
        %v3984 = vadd.f32 %v3611, %v3983
        %v3985 = vpop.f32.mrf.mxu0
        %v3986 = vpop.f32.mrf.mxu0
        %v3987 = vadd.f32 %v3611, %v3986
        %v3988 = vpop.f32.mrf.mxu0
        %3989 = vmatprep.mubr.bf16.mxu0 %v3505
        %3990 = vmatmul.mubr.bf16.gmra.mxu0 %v3504
        %v3991 = vpop.f32.mrf.mxu0
        %v3992 = vadd.f32 %v3611, %v3991
        %v3993 = vpop.f32.mrf.mxu0
        %v3994 = vpop.f32.mrf.mxu0
        %v3995 = vadd.f32 %v3611, %v3994
        %v3996 = vpop.f32.mrf.mxu0
        %3997 = vdwg.mxu0
        %3998 = vmatprep.subr.bf16.mxu0 0
        %3999 = vmatpush1.bf16.msra.mxu0 %v3828
        %4000 = vmatprep.subr.bf16.mxu0 0
        %4001 = vmatpush1.bf16.msra.mxu0 %v3827
        %4002 = vmatprep.subr.bf16.mxu0 0
        %4003 = vmatpush1.bf16.msra.mxu0 %v3826
        %4004 = vmatprep.subr.bf16.mxu0 0
        %4005 = vmatpush1.bf16.msra.mxu0 %v3825
        %4006 = vmatprep.subr.bf16.mxu0 0
        %4007 = vmatpush1.bf16.msra.mxu0 %v3824
        %4008 = vmatprep.subr.bf16.mxu0 0
        %4009 = vmatpush1.bf16.msra.mxu0 %v3823
        %4010 = vmatprep.subr.bf16.mxu0 0
        %4011 = vmatpush1.bf16.msra.mxu0 %v3822
        %4012 = vmatprep.subr.bf16.mxu0 0
        %4013 = vmatpush1.bf16.msra.mxu0 %v3821
        %4014 = vmatprep.subr.bf16.mxu0 0
        %4015 = vmatpush2.bf16.msra.mxu0 %v3836
        %4016 = vmatprep.subr.bf16.mxu0 0
        %4017 = vmatpush2.bf16.msra.mxu0 %v3835
        %4018 = vmatprep.subr.bf16.mxu0 0
        %4019 = vmatpush2.bf16.msra.mxu0 %v3834
        %4020 = vmatprep.subr.bf16.mxu0 0
        %4021 = vmatpush2.bf16.msra.mxu0 %v3833
        %4022 = vmatprep.subr.bf16.mxu0 0
        %4023 = vmatpush2.bf16.msra.mxu0 %v3832
        %4024 = vmatprep.subr.bf16.mxu0 0
        %4025 = vmatpush2.bf16.msra.mxu0 %v3831
        %4026 = vmatprep.subr.bf16.mxu0 0
        %4027 = vmatpush2.bf16.msra.mxu0 %v3830
        %4028 = vmatprep.subr.bf16.mxu0 0
        %4029 = vmatpush2.bf16.msra.mxu0 %v3829
        %4030 = vmatprep.mubr.bf16.mxu0 %v3465
        %4031 = vmatmul.mubr.bf16.gmra.mxu0 %v3464
        %v4032 = vpop.f32.mrf.mxu0
        %v4033 = vadd.f32 %v3936, %v4032
        %v4034 = vpop.f32.mrf.mxu0
        %v4035 = vpop.f32.mrf.mxu0
        %v4036 = vadd.f32 %v3939, %v4035
        %v4037 = vpop.f32.mrf.mxu0
        %4038 = vmatprep.mubr.bf16.mxu0 %v3471
        %4039 = vmatmul.mubr.bf16.gmra.mxu0 %v3470
        %v4040 = vpop.f32.mrf.mxu0
        %v4041 = vadd.f32 %v3944, %v4040
        %v4042 = vpop.f32.mrf.mxu0
        %v4043 = vpop.f32.mrf.mxu0
        %v4044 = vadd.f32 %v3947, %v4043
        %v4045 = vpop.f32.mrf.mxu0
        %4046 = vmatprep.mubr.bf16.mxu0 %v3477
        %4047 = vmatmul.mubr.bf16.gmra.mxu0 %v3476
        %v4048 = vpop.f32.mrf.mxu0
        %v4049 = vadd.f32 %v3952, %v4048
        %v4050 = vpop.f32.mrf.mxu0
        %v4051 = vpop.f32.mrf.mxu0
        %v4052 = vadd.f32 %v3955, %v4051
        %v4053 = vpop.f32.mrf.mxu0
        %4054 = vmatprep.mubr.bf16.mxu0 %v3483
        %4055 = vmatmul.mubr.bf16.gmra.mxu0 %v3482
        %v4056 = vpop.f32.mrf.mxu0
        %v4057 = vadd.f32 %v3960, %v4056
        %v4058 = vpop.f32.mrf.mxu0
        %v4059 = vpop.f32.mrf.mxu0
        %v4060 = vadd.f32 %v3963, %v4059
        %v4061 = vpop.f32.mrf.mxu0
        %4062 = vmatprep.mubr.bf16.mxu0 %v3489
        %4063 = vmatmul.mubr.bf16.gmra.mxu0 %v3488
        %v4064 = vpop.f32.mrf.mxu0
        %v4065 = vadd.f32 %v3968, %v4064
        %v4066 = vpop.f32.mrf.mxu0
        %v4067 = vpop.f32.mrf.mxu0
        %v4068 = vadd.f32 %v3971, %v4067
        %v4069 = vpop.f32.mrf.mxu0
        %4070 = vmatprep.mubr.bf16.mxu0 %v3495
        %4071 = vmatmul.mubr.bf16.gmra.mxu0 %v3494
        %v4072 = vpop.f32.mrf.mxu0
        %v4073 = vadd.f32 %v3976, %v4072
        %v4074 = vpop.f32.mrf.mxu0
        %v4075 = vpop.f32.mrf.mxu0
        %v4076 = vadd.f32 %v3979, %v4075
        %v4077 = vpop.f32.mrf.mxu0
        %4078 = vmatprep.mubr.bf16.mxu0 %v3501
        %4079 = vmatmul.mubr.bf16.gmra.mxu0 %v3500
        %v4080 = vpop.f32.mrf.mxu0
        %v4081 = vadd.f32 %v3984, %v4080
        %v4082 = vpop.f32.mrf.mxu0
        %v4083 = vpop.f32.mrf.mxu0
        %v4084 = vadd.f32 %v3987, %v4083
        %v4085 = vpop.f32.mrf.mxu0
        %4086 = vmatprep.mubr.bf16.mxu0 %v3507
        %4087 = vmatmul.mubr.bf16.gmra.mxu0 %v3506
        %v4088 = vpop.f32.mrf.mxu0
        %v4089 = vadd.f32 %v3992, %v4088
        %v4090 = vpop.f32.mrf.mxu0
        %v4091 = vpop.f32.mrf.mxu0
        %v4092 = vadd.f32 %v3995, %v4091
        %v4093 = vpop.f32.mrf.mxu0
        %4094 = vdwg.mxu0
        %4095 = vmatprep.subr.bf16.mxu0 0
        %4096 = vmatpush1.bf16.msra.mxu0 %v3844
        %4097 = vmatprep.subr.bf16.mxu0 0
        %4098 = vmatpush1.bf16.msra.mxu0 %v3843
        %4099 = vmatprep.subr.bf16.mxu0 0
        %4100 = vmatpush1.bf16.msra.mxu0 %v3842
        %4101 = vmatprep.subr.bf16.mxu0 0
        %4102 = vmatpush1.bf16.msra.mxu0 %v3841
        %4103 = vmatprep.subr.bf16.mxu0 0
        %4104 = vmatpush1.bf16.msra.mxu0 %v3840
        %4105 = vmatprep.subr.bf16.mxu0 0
        %4106 = vmatpush1.bf16.msra.mxu0 %v3839
        %4107 = vmatprep.subr.bf16.mxu0 0
        %4108 = vmatpush1.bf16.msra.mxu0 %v3838
        %4109 = vmatprep.subr.bf16.mxu0 0
        %4110 = vmatpush1.bf16.msra.mxu0 %v3837
        %4111 = vmatprep.subr.bf16.mxu0 0
        %4112 = vmatpush2.bf16.msra.mxu0 %v3852
        %4113 = vmatprep.subr.bf16.mxu0 0
        %4114 = vmatpush2.bf16.msra.mxu0 %v3851
        %4115 = vmatprep.subr.bf16.mxu0 0
        %4116 = vmatpush2.bf16.msra.mxu0 %v3850
        %4117 = vmatprep.subr.bf16.mxu0 0
        %4118 = vmatpush2.bf16.msra.mxu0 %v3849
        %4119 = vmatprep.subr.bf16.mxu0 0
        %4120 = vmatpush2.bf16.msra.mxu0 %v3848
        %4121 = vmatprep.subr.bf16.mxu0 0
        %4122 = vmatpush2.bf16.msra.mxu0 %v3847
        %4123 = vmatprep.subr.bf16.mxu0 0
        %4124 = vmatpush2.bf16.msra.mxu0 %v3846
        %4125 = vmatprep.subr.bf16.mxu0 0
        %4126 = vmatpush2.bf16.msra.mxu0 %v3845
        %4127 = vmatprep.mubr.bf16.mxu0 %v3467
        %4128 = vmatmul.mubr.bf16.gmra.mxu0 %v3466
        %v4129 = vpop.f32.mrf.mxu0
        %v4130 = vadd.f32 %v4033, %v4129
        %v4131 = vpop.f32.mrf.mxu0
        %v4132 = vpop.f32.mrf.mxu0
        %v4133 = vadd.f32 %v4036, %v4132
        %v4134 = vpop.f32.mrf.mxu0
        %4135 = vmatprep.mubr.bf16.mxu0 %v3473
        %4136 = vmatmul.mubr.bf16.gmra.mxu0 %v3472
        %v4137 = vpop.f32.mrf.mxu0
        %v4138 = vadd.f32 %v4041, %v4137
        %v4139 = vpop.f32.mrf.mxu0
        %v4140 = vpop.f32.mrf.mxu0
        %v4141 = vadd.f32 %v4044, %v4140
        %v4142 = vpop.f32.mrf.mxu0
        %4143 = vmatprep.mubr.bf16.mxu0 %v3479
        %4144 = vmatmul.mubr.bf16.gmra.mxu0 %v3478
        %v4145 = vpop.f32.mrf.mxu0
        %v4146 = vadd.f32 %v4049, %v4145
        %v4147 = vpop.f32.mrf.mxu0
        %v4148 = vpop.f32.mrf.mxu0
        %v4149 = vadd.f32 %v4052, %v4148
        %v4150 = vpop.f32.mrf.mxu0
        %4151 = vmatprep.mubr.bf16.mxu0 %v3485
        %4152 = vmatmul.mubr.bf16.gmra.mxu0 %v3484
        %v4153 = vpop.f32.mrf.mxu0
        %v4154 = vadd.f32 %v4057, %v4153
        %v4155 = vpop.f32.mrf.mxu0
        %v4156 = vpop.f32.mrf.mxu0
        %v4157 = vadd.f32 %v4060, %v4156
        %v4158 = vpop.f32.mrf.mxu0
        %4159 = vmatprep.mubr.bf16.mxu0 %v3491
        %4160 = vmatmul.mubr.bf16.gmra.mxu0 %v3490
        %v4161 = vpop.f32.mrf.mxu0
        %v4162 = vadd.f32 %v4065, %v4161
        %v4163 = vpop.f32.mrf.mxu0
        %v4164 = vpop.f32.mrf.mxu0
        %v4165 = vadd.f32 %v4068, %v4164
        %v4166 = vpop.f32.mrf.mxu0
        %4167 = vmatprep.mubr.bf16.mxu0 %v3497
        %4168 = vmatmul.mubr.bf16.gmra.mxu0 %v3496
        %v4169 = vpop.f32.mrf.mxu0
        %v4170 = vadd.f32 %v4073, %v4169
        %v4171 = vpop.f32.mrf.mxu0
        %v4172 = vpop.f32.mrf.mxu0
        %v4173 = vadd.f32 %v4076, %v4172
        %v4174 = vpop.f32.mrf.mxu0
        %4175 = vmatprep.mubr.bf16.mxu0 %v3503
        %4176 = vmatmul.mubr.bf16.gmra.mxu0 %v3502
        %v4177 = vpop.f32.mrf.mxu0
        %v4178 = vadd.f32 %v4081, %v4177
        %v4179 = vpop.f32.mrf.mxu0
        %v4180 = vpop.f32.mrf.mxu0
        %v4181 = vadd.f32 %v4084, %v4180
        %v4182 = vpop.f32.mrf.mxu0
        %4183 = vmatprep.mubr.bf16.mxu0 %v3509
        %4184 = vmatmul.mubr.bf16.gmra.mxu0 %v3508
        %v4185 = vpop.f32.mrf.mxu0
        %v4186 = vadd.f32 %v4089, %v4185
        %v4187 = vpop.f32.mrf.mxu0
        %v4188 = vpop.f32.mrf.mxu0
        %v4189 = vadd.f32 %v4092, %v4188
        %v4190 = vpop.f32.mrf.mxu0
        %4191 = vdwg.mxu0
        %4192 = vst [vmem:[%s297] sm:$0xff] %v4130
        %4193 = vst [vmem:[%s297 + $0x8] sm:$0xff] %v4133
        %4194 = vst [vmem:[%s297 + $0x10] sm:$0xff] %v4138
        %4195 = vst [vmem:[%s297 + $0x18] sm:$0xff] %v4141
        %4196 = vst [vmem:[%s297 + $0x20] sm:$0xff] %v4146
        %4197 = vst [vmem:[%s297 + $0x28] sm:$0xff] %v4149
        %4198 = vst [vmem:[%s297 + $0x30] sm:$0xff] %v4154
        %4199 = vst [vmem:[%s297 + $0x38] sm:$0xff] %v4157
        %4200 = vst [vmem:[%s297 + $0x40] sm:$0xff] %v4162
        %4201 = vst [vmem:[%s297 + $0x48] sm:$0xff] %v4165
        %4202 = vst [vmem:[%s297 + $0x50] sm:$0xff] %v4170
        %4203 = vst [vmem:[%s297 + $0x58] sm:$0xff] %v4173
        %4204 = vst [vmem:[%s297 + $0x60] sm:$0xff] %v4178
        %4205 = vst [vmem:[%s297 + $0x68] sm:$0xff] %v4181
        %4206 = vst [vmem:[%s297 + $0x70] sm:$0xff] %v4186
        %4207 = vst [vmem:[%s297 + $0x78] sm:$0xff] %v4189
        %s4208 = sand.u32 %s142, 1
        %s4209 = scalar_lea.sflag [#allocation4], %s4208
        %s4210 = sand.u32 %s142, 1
        %s4211 = smul.addr %s4210, 128
        %s4212 = scalar_lea.vmem [#allocation11], %s4211
        // Predicated region
        $region61: #{tpu_custom_call.1} parent=39 // pred_check
          %p4213 = pneg %p152
        $region62: #{tpu_custom_call.1} parent=39 // pred_check_branch
          %4215 = sbr.rel (%p4213) target = $region64
        $region63: #{tpu_custom_call.1} parent=39 // pred_region
          %s4216 = smul.u32 16, %s24
          %s4218 = ssub.s32 2048, 2048
          %4219 = vsyncadd %s4209, %s4218
          %s4220 = smul.addr %s4216, 128
          %s4221 = scalar_lea.hbm %s5, %s4220
          %s4222 = sshll.u32 %s4212, 4
          %s4223 = int_to_ptr.vmem [resolvable:$true] %s4222
          %4228 = dma.vmem_to_hbm [thread:$0]  %s4223, 2048, %s4221, %s4209, 128, 128, 8
        $region64: #{tpu_custom_call.1} parent=39 // pred_fallthru
          _
      $region40: #{tpu_custom_call.1} parent=5 // pred_fallthru
        _
      %p4229 = scmp.le.s32.totalorder 2, %s19
      // Predicated region
      $region65: #{tpu_custom_call.1} parent=5 // pred_check
        %p4230 = pneg %p4229
      $region66: #{tpu_custom_call.1} parent=5 // pred_check_branch
        %4232 = sbr.rel (%p4230) target = $region68
      $region67: #{tpu_custom_call.1} parent=5 // pred_region
        %s4233 = ssub.s32 %s19, 2
        // Predicated region
        $region69: #{tpu_custom_call.1} parent=67 // pred_check
          %p4234 = pneg %p158
        $region70: #{tpu_custom_call.1} parent=67 // pred_check_branch
          %4236 = sbr.rel (%p4234) target = $region72
        $region71: #{tpu_custom_call.1} parent=67 // pred_region
          %s4237 = sand.u32 %s143, 1
          %s4238 = scalar_lea.sflag [#allocation4], %s4237
          %s4239 = sand.u32 %s143, 1
          %s4240 = smul.addr %s4239, 128
          %s4241 = scalar_lea.vmem [#allocation11], %s4240
          %4242 = dma.done %s4238, 2048
        $region72: #{tpu_custom_call.1} parent=67 // pred_fallthru
          _
      $region68: #{tpu_custom_call.1} parent=5 // pred_fallthru
        _
    $region6: #{tpu_custom_call.1} parent=1 // loop_footer
      %s23 = sadd.s32 1, %s19
    $region7: #{tpu_custom_call.1} parent=1 // loop_footer_branch
      %18 = sbr.rel target = $region3
    $region8: #{tpu_custom_call.1} parent=1 // loop_exit
      _
    %4243 = vsyncpa [#allocation3], 1
    %s4244 = scalar_lea.sflag [#allocation3], 1
    %4245 = vsyncpa %s4244, 1
    %4246 = vsyncpa [#allocation6], 1
    %4247 = vsyncpa [#allocation9], 1
    %4248 = vsyncpa [#allocation4], 1
    %s4249 = scalar_lea.sflag [#allocation4], 1
    %4250 = vsyncpa %s4249, 1

</llo_original>
